<compile_context>
chip_gen: v7x
topology: tpu7x:2x2x1
jax: 0.10.0
libtpu: 0.0.40
codegen_flags: <defaults>
</compile_context>

<pallas_src>
import jax
import jax.numpy as jnp
from jax.experimental import pallas as pl
from jax.experimental.pallas import tpu as pltpu

# ---- small synthetic CLIP-text config (same structure, tiny sizes) ----
VOCAB = 64      # vocab size; EOS token = VOCAB - 1 (pooled via argmax, HF-style)
MAX_POS = 16    # max position embeddings
D = 32          # hidden size
H = 4           # attention heads
DH = D // H     # head dim
I_FF = 64       # MLP intermediate size
L = 2           # number of encoder layers
P = 16          # text projection dim
EPS = 1e-5
NEG = -1e9


def _ln(x, g, b):
    mu = jnp.mean(x, axis=-1, keepdims=True)
    var = jnp.mean((x - mu) ** 2, axis=-1, keepdims=True)
    return (x - mu) * jax.lax.rsqrt(var + EPS) * g + b


# ---------------- fused Pallas kernel ----------------

def fused_clip_text_kernel(mask_ref, pool_ref, x_ref,
                           ln1g_ref, ln1b_ref,
                           wqkv_ref, bqkv_ref,
                           wo_ref, bo_ref,
                           ln2g_ref, ln2b_ref,
                           w1_ref, b1_ref, w2_ref, b2_ref,
                           lnfg_ref, lnfb_ref, proj_ref,
                           o_ref):
    """Full CLIP text tower for one batch chunk: L pre-LN encoder layers
    (activations resident in VMEM) + EOS pooling + final LN + projection."""
    BC, S, Dm = x_ref.shape
    N = BC * S

    # additive attention bias (causal + key padding), (BC, S, S), hoisted once.
    mask = mask_ref[...].reshape(BC, S)                                   # (BC,S)
    row = jax.lax.broadcasted_iota(jnp.int32, (S, S), 0)
    col = jax.lax.broadcasted_iota(jnp.int32, (S, S), 1)
    causal = jnp.where(col <= row, 0.0, NEG).astype(jnp.float32)          # (S,S)
    bias = causal[None, :, :] + ((1.0 - mask) * NEG)[:, None, :]          # (BC,S,S)

    x0 = x_ref[...].reshape(N, Dm)                                        # (N,D) f32

    def layer(l, x):
        # --- self attention (pre-LayerNorm), fused QKV projection ---
        h = _ln(x, ln1g_ref[l], ln1b_ref[l])
        hb = h.astype(jnp.bfloat16)
        # 1/sqrt(DH) pre-folded into the Q slice of wqkv/bqkv.
        qkv = jnp.dot(hb, wqkv_ref[l],
                      preferred_element_type=jnp.float32) + bqkv_ref[l]   # (N,3D)
        q = qkv[:, :Dm]
        k = qkv[:, Dm:2 * Dm]
        v = qkv[:, 2 * Dm:]

        # merge (batch, head) into one leading batch axis so every contraction
        # is a single-batch-dim 3-D einsum (supported by Mosaic dot_general).
        def heads(t):                                   # (N,D) -> (BC*H,S,DH)
            return jnp.swapaxes(t.reshape(BC, S, H, DH), 1, 2).reshape(
                BC * H, S, DH)

        q3, k3, v3 = heads(q), heads(k), heads(v)

        s = jnp.einsum('bqd,bkd->bqk', q3, k3,
                       preferred_element_type=jnp.float32)                # (BH,S,S)
        # broadcast-add the (BC,S,S) bias via a free leading-dim reshape;
        # nothing of shape (BC*H,S,S) is materialized ahead of time.
        s = s.reshape(BC, H, S, S) + bias[:, None, :, :]
        s = s - jnp.max(s, axis=-1, keepdims=True)
        p = jnp.exp(s)
        p = p * pl.reciprocal(jnp.sum(p, axis=-1, keepdims=True), approx=True)

        ctx = jnp.einsum('bqk,bkd->bqd', p.reshape(BC * H, S, S), v3,
                         preferred_element_type=jnp.float32)              # (BH,S,DH)
        ctx = jnp.swapaxes(ctx.reshape(BC, H, S, DH), 1, 2).reshape(N, Dm)

        attn = jnp.dot(ctx.astype(jnp.bfloat16), wo_ref[l],
                       preferred_element_type=jnp.float32) + bo_ref[l]
        x = x + attn

        # --- MLP (pre-LayerNorm, quick_gelu) ---
        h2 = _ln(x, ln2g_ref[l], ln2b_ref[l])
        f = jnp.dot(h2.astype(jnp.bfloat16), w1_ref[l],
                    preferred_element_type=jnp.float32) + b1_ref[l]
        f = f * jax.nn.sigmoid(1.702 * f)                                 # quick_gelu
        f = jnp.dot(f.astype(jnp.bfloat16), w2_ref[l],
                    preferred_element_type=jnp.float32) + b2_ref[l]
        return x + f

    x = jax.lax.fori_loop(0, L, layer, x0, unroll=True)

    # pooled EOS token via a batched one-hot matvec on the MXU, then final LN
    # + text_projection.  (LayerNorm is per-token, so pooling first is exact.)
    pool = pool_ref[...]                                                  # (BC,1,S)
    x3 = x.reshape(BC, S, Dm)
    pooled = jnp.einsum('bqs,bsd->bqd', pool, x3,
                        preferred_element_type=jnp.float32).reshape(BC, Dm)
    hfin = _ln(pooled, lnfg_ref[...], lnfb_ref[...])
    o_ref[...] = jnp.dot(hfin.astype(jnp.bfloat16), proj_ref[...],
                         preferred_element_type=jnp.float32)              # (BC,P)


# ---------------- wrapper ----------------

def clip_text_encoder_forward(params, input_ids, attention_mask, batch_block=None):
    """== ClipTextEncoder.forward (eval mode). Single fused pallas_call."""
    B, S = input_ids.shape
    assert S <= MAX_POS

    # embeddings (gather = glue, plain JAX)
    x = params["token_emb"][input_ids] + params["pos_emb"][:S][None, :, :]

    # (B,1,S) so the last two block dims always equal the full array dims.
    mask = attention_mask.astype(jnp.float32).reshape(B, 1, S)
    eos_idx = jnp.argmax(input_ids, axis=-1)          # HF CLIP: EOS = max token id
    pool = jax.nn.one_hot(eos_idx, S, dtype=jnp.float32).reshape(B, 1, S)

    # Batch chunking:
    #   v5e / v6e (1 TensorCore): keep a single grid step (batch_block = B);
    #     extra chunks only add ~0.35 us/step of pure overhead.
    #   v7x (2 TensorCores): pass batch_block = B // 2 so the "parallel" grid
    #     axis shards across both cores (requires batch_block % 8 == 0 or == B
    #     so blocks stay sublane-legal).
    if (batch_block is None or batch_block <= 0 or B % batch_block != 0
            or (batch_block != B and batch_block % 8 != 0)):
        batch_block = B                    # collapse whole batch into sublanes
    nchunks = B // batch_block

    stacked = params["stacked"]            # 12 stacked (L, ...) layer arrays
    consts = [params["ln_f_g"], params["ln_f_b"], params["text_proj"]]

    def chunk_spec(arr, bc):
        _, d1, d2 = arr.shape
        return pl.BlockSpec((bc, d1, d2), lambda c: (c, 0, 0))

    # constant weights: untiled, whole-array resident in VMEM (no per-grid-step
    # double-buffering / DMA-descriptor work).
    vmem_spec = pl.BlockSpec(memory_space=pltpu.MemorySpace.VMEM)

    in_specs = [chunk_spec(mask, batch_block),
                chunk_spec(pool, batch_block),
                chunk_spec(x, batch_block)]
    in_specs += [vmem_spec] * (len(stacked) + len(consts))

    out = pl.pallas_call(
        fused_clip_text_kernel,
        out_shape=jax.ShapeDtypeStruct((B, P), jnp.float32),   # lane-dense 2-D
        grid=(nchunks,),
        in_specs=in_specs,
        out_specs=pl.BlockSpec((batch_block, P), lambda c: (c, 0)),
        compiler_params=pltpu.CompilerParams(
            dimension_semantics=("parallel",),
            vmem_limit_bytes=32 * 1024 * 1024),   # explicit (v5e default is 16 MiB)
    )(mask, pool, x, *stacked, *consts)

    # nn.Dropout(0.1) is identity in eval mode.
    # TODO(synk): training-mode dropout (random mask / (1-p) scaling) omitted.
    return out


# ---------------- parameter init / prep (deterministic, synthetic) ----------------

def init_params(key):
    def nrm(k, shape, scale=0.02):
        return (scale * jax.random.normal(k, shape)).astype(jnp.float32)

    keys = iter(jax.random.split(key, 8 + L * 8))
    token_emb = nrm(next(keys), (VOCAB, D))
    pos_emb = nrm(next(keys), (MAX_POS, D))
    text_proj = nrm(next(keys), (D, P))

    layers = []
    for _ in range(L):
        layers.append(dict(
            ln1_g=jnp.ones((1, D), jnp.float32), ln1_b=jnp.zeros((1, D), jnp.float32),
            wq=nrm(next(keys), (D, D)), bq=jnp.zeros((1, D), jnp.float32),
            wk=nrm(next(keys), (D, D)), bk=jnp.zeros((1, D), jnp.float32),
            wv=nrm(next(keys), (D, D)), bv=jnp.zeros((1, D), jnp.float32),
            wo=nrm(next(keys), (D, D)), bo=jnp.zeros((1, D), jnp.float32),
            ln2_g=jnp.ones((1, D), jnp.float32), ln2_b=jnp.zeros((1, D), jnp.float32),
            w1=nrm(next(keys), (D, I_FF)), b1=jnp.zeros((1, I_FF), jnp.float32),
            w2=nrm(next(keys), (I_FF, D)), b2=jnp.zeros((1, D), jnp.float32),
        ))

    return dict(token_emb=token_emb, pos_emb=pos_emb,
                ln_f_g=jnp.ones((1, D), jnp.float32),
                ln_f_b=jnp.zeros((1, D), jnp.float32),
                text_proj=text_proj, layers=layers)


def prepare_params(raw):
    """Stack per-layer weights into (L, ...) arrays, fuse Q/K/V into one
    (L, D, 3D) weight (+ (L, 1, 3D) bias) with 1/sqrt(DH) folded into the Q
    slice, and cast MXU weight operands to bf16 (biases / LN params stay f32)."""
    scale = DH ** -0.5
    ls = raw["layers"]

    def stack(name):
        return jnp.stack([l[name] for l in ls], axis=0)

    def stack_bf16(name):
        return jnp.stack([l[name] for l in ls], axis=0).astype(jnp.bfloat16)

    wqkv = jnp.stack(
        [jnp.concatenate([l["wq"] * scale, l["wk"], l["wv"]], axis=-1) for l in ls],
        axis=0).astype(jnp.bfloat16)                               # (L, D, 3D)
    bqkv = jnp.stack(
        [jnp.concatenate([l["bq"] * scale, l["bk"], l["bv"]], axis=-1) for l in ls],
        axis=0)                                                    # (L, 1, 3D) f32

    stacked = [
        stack("ln1_g"), stack("ln1_b"),
        wqkv, bqkv,
        stack_bf16("wo"), stack("bo"),
        stack("ln2_g"), stack("ln2_b"),
        stack_bf16("w1"), stack("b1"),
        stack_bf16("w2"), stack("b2"),
    ]
    return dict(token_emb=raw["token_emb"], pos_emb=raw["pos_emb"],
                ln_f_g=raw["ln_f_g"], ln_f_b=raw["ln_f_b"],
                text_proj=raw["text_proj"].astype(jnp.bfloat16),
                stacked=stacked)


if __name__ == "__main__":
    key = jax.random.PRNGKey(0)
    params = prepare_params(init_params(key))

    B, S = 2, 8
    ids_key = jax.random.fold_in(key, 123)
    input_ids = jax.random.randint(ids_key, (B, S), 1, VOCAB - 1).astype(jnp.int32)
    # sequence lengths 8 and 5; EOS (= VOCAB-1, the max id) at last valid slot
    lengths = jnp.array([8, 5], dtype=jnp.int32)
    pos = jnp.arange(S)[None, :]
    attention_mask = (pos < lengths[:, None]).astype(jnp.int32)
    input_ids = jnp.where(pos == (lengths[:, None] - 1), VOCAB - 1, input_ids)
    input_ids = jnp.where(pos >= lengths[:, None], 0, input_ids).astype(jnp.int32)

    out = clip_text_encoder_forward(params, input_ids, attention_mask)
    out = jax.block_until_ready(out)
    assert out.shape == (B, P) and out.dtype == jnp.float32
    assert bool(jnp.all(jnp.isfinite(out)))
    print("KERNEL_OK")
</pallas_src>

<mosaic_0001>
module attributes {stable_mosaic.version = 11 : i64} {
  func.func @fused_clip_text_kernel(%arg0: i32, %arg1: memref<2x1x8xf32, #tpu.memory_space<vmem>>, %arg2: memref<2x1x8xf32, #tpu.memory_space<vmem>>, %arg3: memref<2x8x32xf32, #tpu.memory_space<vmem>>, %arg4: memref<2x1x32xf32, #tpu.memory_space<vmem>>, %arg5: memref<2x1x32xf32, #tpu.memory_space<vmem>>, %arg6: memref<2x32x96xbf16, #tpu.memory_space<vmem>>, %arg7: memref<2x1x96xf32, #tpu.memory_space<vmem>>, %arg8: memref<2x32x32xbf16, #tpu.memory_space<vmem>>, %arg9: memref<2x1x32xf32, #tpu.memory_space<vmem>>, %arg10: memref<2x1x32xf32, #tpu.memory_space<vmem>>, %arg11: memref<2x1x32xf32, #tpu.memory_space<vmem>>, %arg12: memref<2x32x64xbf16, #tpu.memory_space<vmem>>, %arg13: memref<2x1x64xf32, #tpu.memory_space<vmem>>, %arg14: memref<2x64x32xbf16, #tpu.memory_space<vmem>>, %arg15: memref<2x1x32xf32, #tpu.memory_space<vmem>>, %arg16: memref<1x32xf32, #tpu.memory_space<vmem>>, %arg17: memref<1x32xf32, #tpu.memory_space<vmem>>, %arg18: memref<32x16xbf16, #tpu.memory_space<vmem>>, %arg19: memref<2x16xf32, #tpu.memory_space<vmem>>) attributes {dimension_semantics = [#tpu.dimension_semantics<parallel>], iteration_bounds = array<i64: 1>, scalar_prefetch = 0 : i64, scratch_operands = 0 : i64, tpu.core_type = #tpu.core_type<tc>, window_params = [{transform_indices = @transform_0, window_bounds = array<i64: 2, 1, 8>}, {transform_indices = @transform_1, window_bounds = array<i64: 2, 1, 8>}, {transform_indices = @transform_2, window_bounds = array<i64: 2, 8, 32>}, {pipeline_mode = #tpu.pipeline_mode<synchronous>, transform_indices = @transform_3, window_bounds = array<i64: 2, 1, 32>}, {pipeline_mode = #tpu.pipeline_mode<synchronous>, transform_indices = @transform_4, window_bounds = array<i64: 2, 1, 32>}, {pipeline_mode = #tpu.pipeline_mode<synchronous>, transform_indices = @transform_5, window_bounds = array<i64: 2, 32, 96>}, {pipeline_mode = #tpu.pipeline_mode<synchronous>, transform_indices = @transform_6, window_bounds = array<i64: 2, 1, 96>}, {pipeline_mode = #tpu.pipeline_mode<synchronous>, transform_indices = @transform_7, window_bounds = array<i64: 2, 32, 32>}, {pipeline_mode = #tpu.pipeline_mode<synchronous>, transform_indices = @transform_8, window_bounds = array<i64: 2, 1, 32>}, {pipeline_mode = #tpu.pipeline_mode<synchronous>, transform_indices = @transform_9, window_bounds = array<i64: 2, 1, 32>}, {pipeline_mode = #tpu.pipeline_mode<synchronous>, transform_indices = @transform_10, window_bounds = array<i64: 2, 1, 32>}, {pipeline_mode = #tpu.pipeline_mode<synchronous>, transform_indices = @transform_11, window_bounds = array<i64: 2, 32, 64>}, {pipeline_mode = #tpu.pipeline_mode<synchronous>, transform_indices = @transform_12, window_bounds = array<i64: 2, 1, 64>}, {pipeline_mode = #tpu.pipeline_mode<synchronous>, transform_indices = @transform_13, window_bounds = array<i64: 2, 64, 32>}, {pipeline_mode = #tpu.pipeline_mode<synchronous>, transform_indices = @transform_14, window_bounds = array<i64: 2, 1, 32>}, {pipeline_mode = #tpu.pipeline_mode<synchronous>, transform_indices = @transform_15, window_bounds = array<i64: 1, 32>}, {pipeline_mode = #tpu.pipeline_mode<synchronous>, transform_indices = @transform_16, window_bounds = array<i64: 1, 32>}, {pipeline_mode = #tpu.pipeline_mode<synchronous>, transform_indices = @transform_17, window_bounds = array<i64: 32, 16>}, {transform_indices = @transform_18, window_bounds = array<i64: 2, 16>}]} {
    %c0 = arith.constant 0 : index
    %c0_0 = arith.constant 0 : index
    %c0_1 = arith.constant 0 : index
    %0 = vector.load %arg1[%c0, %c0_0, %c0_1] : memref<2x1x8xf32, #tpu.memory_space<vmem>>, vector<2x1x8xf32>
    %1 = vector.shape_cast %0 : vector<2x1x8xf32> to vector<2x8xf32>
    %2 = tpu.iota {dimensions = array<i32: 0>} : vector<8x8xi32>
    %3 = tpu.iota {dimensions = array<i32: 1>} : vector<8x8xi32>
    %4 = arith.cmpi sle, %3, %2 : vector<8x8xi32>
    %cst = arith.constant 0.000000e+00 : f32
    %cst_2 = arith.constant -1.000000e+09 : f32
    %5 = vector.broadcast %cst : f32 to vector<8x8xf32>
    %6 = vector.broadcast %cst_2 : f32 to vector<8x8xf32>
    %7 = arith.select %4, %5, %6 : vector<8x8xi1>, vector<8x8xf32>
    %8 = vector.shape_cast %7 : vector<8x8xf32> to vector<1x8x8xf32>
    %cst_3 = arith.constant 1.000000e+00 : f32
    %9 = vector.broadcast %cst_3 : f32 to vector<2x8xf32>
    %10 = arith.subf %9, %1 : vector<2x8xf32>
    %cst_4 = arith.constant -1.000000e+09 : f32
    %11 = vector.broadcast %cst_4 : f32 to vector<2x8xf32>
    %12 = arith.mulf %10, %11 : vector<2x8xf32>
    %13 = vector.shape_cast %12 : vector<2x8xf32> to vector<2x1x8xf32>
    %14 = vector.broadcast %8 : vector<1x8x8xf32> to vector<2x8x8xf32>
    %15 = vector.broadcast %13 : vector<2x1x8xf32> to vector<2x8x8xf32>
    %16 = arith.addf %14, %15 : vector<2x8x8xf32>
    %c0_5 = arith.constant 0 : index
    %c0_6 = arith.constant 0 : index
    %c0_7 = arith.constant 0 : index
    %17 = vector.load %arg3[%c0_5, %c0_6, %c0_7] : memref<2x8x32xf32, #tpu.memory_space<vmem>>, vector<2x8x32xf32>
    %18 = vector.shape_cast %17 : vector<2x8x32xf32> to vector<16x32xf32>
    %c0_i32 = arith.constant 0 : i32
    %19 = arith.index_cast %c0_i32 : i32 to index
    %c0_8 = arith.constant 0 : index
    %c0_9 = arith.constant 0 : index
    %20 = vector.load %arg4[%19, %c0_8, %c0_9] : memref<2x1x32xf32, #tpu.memory_space<vmem>>, vector<1x1x32xf32>
    %21 = vector.shape_cast %20 : vector<1x1x32xf32> to vector<1x32xf32>
    %22 = arith.index_cast %c0_i32 : i32 to index
    %c0_10 = arith.constant 0 : index
    %c0_11 = arith.constant 0 : index
    %23 = vector.load %arg5[%22, %c0_10, %c0_11] : memref<2x1x32xf32, #tpu.memory_space<vmem>>, vector<1x1x32xf32>
    %24 = vector.shape_cast %23 : vector<1x1x32xf32> to vector<1x32xf32>
    %cst_12 = arith.constant dense<0.000000e+00> : vector<16xf32>
    %25 = vector.multi_reduction <add>, %18, %cst_12 [1] : vector<16x32xf32> to vector<16xf32>
    %26 = vector.shape_cast %25 : vector<16xf32> to vector<16x1xf32>
    %cst_13 = arith.constant 3.200000e+01 : f32
    %27 = vector.broadcast %cst_13 : f32 to vector<16x1xf32>
    %28 = arith.divf %26, %27 : vector<16x1xf32>
    %29 = vector.broadcast %28 : vector<16x1xf32> to vector<16x32xf32>
    %30 = arith.subf %18, %29 : vector<16x32xf32>
    %31 = arith.mulf %30, %30 : vector<16x32xf32>
    %cst_14 = arith.constant dense<0.000000e+00> : vector<16xf32>
    %32 = vector.multi_reduction <add>, %31, %cst_14 [1] : vector<16x32xf32> to vector<16xf32>
    %33 = vector.shape_cast %32 : vector<16xf32> to vector<16x1xf32>
    %cst_15 = arith.constant 3.200000e+01 : f32
    %34 = vector.broadcast %cst_15 : f32 to vector<16x1xf32>
    %35 = arith.divf %33, %34 : vector<16x1xf32>
    %36 = vector.broadcast %28 : vector<16x1xf32> to vector<16x32xf32>
    %37 = arith.subf %18, %36 : vector<16x32xf32>
    %cst_16 = arith.constant 9.99999974E-6 : f32
    %38 = vector.broadcast %cst_16 : f32 to vector<16x1xf32>
    %39 = arith.addf %35, %38 : vector<16x1xf32>
    %40 = math.rsqrt %39 : vector<16x1xf32>
    %41 = vector.broadcast %40 : vector<16x1xf32> to vector<16x32xf32>
    %42 = arith.mulf %37, %41 : vector<16x32xf32>
    %43 = vector.broadcast %21 : vector<1x32xf32> to vector<16x32xf32>
    %44 = arith.mulf %42, %43 : vector<16x32xf32>
    %45 = vector.broadcast %24 : vector<1x32xf32> to vector<16x32xf32>
    %46 = arith.addf %44, %45 : vector<16x32xf32>
    %47 = arith.truncf %46 : vector<16x32xf32> to vector<16x32xbf16>
    %48 = arith.index_cast %c0_i32 : i32 to index
    %c0_17 = arith.constant 0 : index
    %c0_18 = arith.constant 0 : index
    %49 = vector.load %arg6[%48, %c0_17, %c0_18] : memref<2x32x96xbf16, #tpu.memory_space<vmem>>, vector<1x32x96xbf16>
    %50 = vector.shape_cast %49 : vector<1x32x96xbf16> to vector<32x96xbf16>
    %cst_19 = arith.constant dense<0.000000e+00> : vector<16x96xf32>
    %51 = tpu.matmul %47, %50, %cst_19 {dimension_numbers = #tpu.dot_dimension_numbers<[1], [0], [0], [1], [0, 0, 1, 1], [], []>} : vector<16x32xbf16>, vector<32x96xbf16>, vector<16x96xf32> -> vector<16x96xf32>
    %52 = arith.index_cast %c0_i32 : i32 to index
    %c0_20 = arith.constant 0 : index
    %c0_21 = arith.constant 0 : index
    %53 = vector.load %arg7[%52, %c0_20, %c0_21] : memref<2x1x96xf32, #tpu.memory_space<vmem>>, vector<1x1x96xf32>
    %54 = vector.shape_cast %53 : vector<1x1x96xf32> to vector<1x96xf32>
    %55 = vector.broadcast %54 : vector<1x96xf32> to vector<16x96xf32>
    %56 = arith.addf %51, %55 : vector<16x96xf32>
    %57 = vector.extract_strided_slice %56 {offsets = [0, 0], sizes = [16, 32], strides = [1, 1]} : vector<16x96xf32> to vector<16x32xf32>
    %58 = vector.extract_strided_slice %56 {offsets = [0, 32], sizes = [16, 32], strides = [1, 1]} : vector<16x96xf32> to vector<16x32xf32>
    %59 = vector.extract_strided_slice %56 {offsets = [0, 64], sizes = [16, 32], strides = [1, 1]} : vector<16x96xf32> to vector<16x32xf32>
    %60 = vector.shape_cast %57 : vector<16x32xf32> to vector<2x8x4x8xf32>
    %61 = tpu.transpose %60, [0, 2, 1, 3] : vector<2x8x4x8xf32> -> vector<2x4x8x8xf32>
    %62 = vector.shape_cast %61 : vector<2x4x8x8xf32> to vector<8x8x8xf32>
    %63 = vector.shape_cast %58 : vector<16x32xf32> to vector<2x8x4x8xf32>
    %64 = tpu.transpose %63, [0, 2, 1, 3] : vector<2x8x4x8xf32> -> vector<2x4x8x8xf32>
    %65 = vector.shape_cast %64 : vector<2x4x8x8xf32> to vector<8x8x8xf32>
    %66 = vector.shape_cast %59 : vector<16x32xf32> to vector<2x8x4x8xf32>
    %67 = tpu.transpose %66, [0, 2, 1, 3] : vector<2x8x4x8xf32> -> vector<2x4x8x8xf32>
    %68 = vector.shape_cast %67 : vector<2x4x8x8xf32> to vector<8x8x8xf32>
    "tpu.trace_start"() <{level = 10 : i32, message = "bqd,bkd->bqk"}> : () -> ()
    %cst_22 = arith.constant dense<0.000000e+00> : vector<8x8x8xf32>
    %69 = tpu.matmul %62, %65, %cst_22 {dimension_numbers = #tpu.dot_dimension_numbers<[2], [2], [1], [1], [0, 0, 0, 1, 1, 1], [0], [0]>} : vector<8x8x8xf32>, vector<8x8x8xf32>, vector<8x8x8xf32> -> vector<8x8x8xf32>
    "tpu.trace_stop"() : () -> ()
    %70 = vector.shape_cast %69 : vector<8x8x8xf32> to vector<2x4x8x8xf32>
    %71 = vector.shape_cast %16 : vector<2x8x8xf32> to vector<2x1x8x8xf32>
    %72 = vector.broadcast %71 : vector<2x1x8x8xf32> to vector<2x4x8x8xf32>
    %73 = arith.addf %70, %72 : vector<2x4x8x8xf32>
    %cst_23 = arith.constant dense<0xFF800000> : vector<2x4x8xf32>
    %74 = vector.multi_reduction <maximumf>, %73, %cst_23 [3] : vector<2x4x8x8xf32> to vector<2x4x8xf32>
    %75 = vector.shape_cast %74 : vector<2x4x8xf32> to vector<2x4x8x1xf32>
    %76 = vector.broadcast %75 : vector<2x4x8x1xf32> to vector<2x4x8x8xf32>
    %77 = arith.subf %73, %76 : vector<2x4x8x8xf32>
    %78 = math.exp %77 : vector<2x4x8x8xf32>
    %cst_24 = arith.constant dense<0.000000e+00> : vector<2x4x8xf32>
    %79 = vector.multi_reduction <add>, %78, %cst_24 [3] : vector<2x4x8x8xf32> to vector<2x4x8xf32>
    %80 = vector.shape_cast %79 : vector<2x4x8xf32> to vector<2x4x8x1xf32>
    %81 = tpu.reciprocal %80 {approx = true} : vector<2x4x8x1xf32> -> vector<2x4x8x1xf32>
    %82 = vector.broadcast %81 : vector<2x4x8x1xf32> to vector<2x4x8x8xf32>
    %83 = arith.mulf %78, %82 : vector<2x4x8x8xf32>
    %84 = vector.shape_cast %83 : vector<2x4x8x8xf32> to vector<8x8x8xf32>
    "tpu.trace_start"() <{level = 10 : i32, message = "bqk,bkd->bqd"}> : () -> ()
    %cst_25 = arith.constant dense<0.000000e+00> : vector<8x8x8xf32>
    %85 = tpu.matmul %84, %68, %cst_25 {dimension_numbers = #tpu.dot_dimension_numbers<[2], [1], [1], [2], [0, 0, 0, 1, 1, 2], [0], [0]>} : vector<8x8x8xf32>, vector<8x8x8xf32>, vector<8x8x8xf32> -> vector<8x8x8xf32>
    "tpu.trace_stop"() : () -> ()
    %86 = vector.shape_cast %85 : vector<8x8x8xf32> to vector<2x4x8x8xf32>
    %87 = tpu.transpose %86, [0, 2, 1, 3] : vector<2x4x8x8xf32> -> vector<2x8x4x8xf32>
    %88 = vector.shape_cast %87 : vector<2x8x4x8xf32> to vector<16x32xf32>
    %89 = arith.truncf %88 : vector<16x32xf32> to vector<16x32xbf16>
    %90 = arith.index_cast %c0_i32 : i32 to index
    %c0_26 = arith.constant 0 : index
    %c0_27 = arith.constant 0 : index
    %91 = vector.load %arg8[%90, %c0_26, %c0_27] : memref<2x32x32xbf16, #tpu.memory_space<vmem>>, vector<1x32x32xbf16>
    %92 = vector.shape_cast %91 : vector<1x32x32xbf16> to vector<32x32xbf16>
    %cst_28 = arith.constant dense<0.000000e+00> : vector<16x32xf32>
    %93 = tpu.matmul %89, %92, %cst_28 {dimension_numbers = #tpu.dot_dimension_numbers<[1], [0], [0], [1], [0, 0, 1, 1], [], []>} : vector<16x32xbf16>, vector<32x32xbf16>, vector<16x32xf32> -> vector<16x32xf32>
    %94 = arith.index_cast %c0_i32 : i32 to index
    %c0_29 = arith.constant 0 : index
    %c0_30 = arith.constant 0 : index
    %95 = vector.load %arg9[%94, %c0_29, %c0_30] : memref<2x1x32xf32, #tpu.memory_space<vmem>>, vector<1x1x32xf32>
    %96 = vector.shape_cast %95 : vector<1x1x32xf32> to vector<1x32xf32>
    %97 = vector.broadcast %96 : vector<1x32xf32> to vector<16x32xf32>
    %98 = arith.addf %93, %97 : vector<16x32xf32>
    %99 = arith.addf %18, %98 : vector<16x32xf32>
    %100 = arith.index_cast %c0_i32 : i32 to index
    %c0_31 = arith.constant 0 : index
    %c0_32 = arith.constant 0 : index
    %101 = vector.load %arg10[%100, %c0_31, %c0_32] : memref<2x1x32xf32, #tpu.memory_space<vmem>>, vector<1x1x32xf32>
    %102 = vector.shape_cast %101 : vector<1x1x32xf32> to vector<1x32xf32>
    %103 = arith.index_cast %c0_i32 : i32 to index
    %c0_33 = arith.constant 0 : index
    %c0_34 = arith.constant 0 : index
    %104 = vector.load %arg11[%103, %c0_33, %c0_34] : memref<2x1x32xf32, #tpu.memory_space<vmem>>, vector<1x1x32xf32>
    %105 = vector.shape_cast %104 : vector<1x1x32xf32> to vector<1x32xf32>
    %cst_35 = arith.constant dense<0.000000e+00> : vector<16xf32>
    %106 = vector.multi_reduction <add>, %99, %cst_35 [1] : vector<16x32xf32> to vector<16xf32>
    %107 = vector.shape_cast %106 : vector<16xf32> to vector<16x1xf32>
    %cst_36 = arith.constant 3.200000e+01 : f32
    %108 = vector.broadcast %cst_36 : f32 to vector<16x1xf32>
    %109 = arith.divf %107, %108 : vector<16x1xf32>
    %110 = vector.broadcast %109 : vector<16x1xf32> to vector<16x32xf32>
    %111 = arith.subf %99, %110 : vector<16x32xf32>
    %112 = arith.mulf %111, %111 : vector<16x32xf32>
    %cst_37 = arith.constant dense<0.000000e+00> : vector<16xf32>
    %113 = vector.multi_reduction <add>, %112, %cst_37 [1] : vector<16x32xf32> to vector<16xf32>
    %114 = vector.shape_cast %113 : vector<16xf32> to vector<16x1xf32>
    %cst_38 = arith.constant 3.200000e+01 : f32
    %115 = vector.broadcast %cst_38 : f32 to vector<16x1xf32>
    %116 = arith.divf %114, %115 : vector<16x1xf32>
    %117 = vector.broadcast %109 : vector<16x1xf32> to vector<16x32xf32>
    %118 = arith.subf %99, %117 : vector<16x32xf32>
    %cst_39 = arith.constant 9.99999974E-6 : f32
    %119 = vector.broadcast %cst_39 : f32 to vector<16x1xf32>
    %120 = arith.addf %116, %119 : vector<16x1xf32>
    %121 = math.rsqrt %120 : vector<16x1xf32>
    %122 = vector.broadcast %121 : vector<16x1xf32> to vector<16x32xf32>
    %123 = arith.mulf %118, %122 : vector<16x32xf32>
    %124 = vector.broadcast %102 : vector<1x32xf32> to vector<16x32xf32>
    %125 = arith.mulf %123, %124 : vector<16x32xf32>
    %126 = vector.broadcast %105 : vector<1x32xf32> to vector<16x32xf32>
    %127 = arith.addf %125, %126 : vector<16x32xf32>
    %128 = arith.truncf %127 : vector<16x32xf32> to vector<16x32xbf16>
    %129 = arith.index_cast %c0_i32 : i32 to index
    %c0_40 = arith.constant 0 : index
    %c0_41 = arith.constant 0 : index
    %130 = vector.load %arg12[%129, %c0_40, %c0_41] : memref<2x32x64xbf16, #tpu.memory_space<vmem>>, vector<1x32x64xbf16>
    %131 = vector.shape_cast %130 : vector<1x32x64xbf16> to vector<32x64xbf16>
    %cst_42 = arith.constant dense<0.000000e+00> : vector<16x64xf32>
    %132 = tpu.matmul %128, %131, %cst_42 {dimension_numbers = #tpu.dot_dimension_numbers<[1], [0], [0], [1], [0, 0, 1, 1], [], []>} : vector<16x32xbf16>, vector<32x64xbf16>, vector<16x64xf32> -> vector<16x64xf32>
    %133 = arith.index_cast %c0_i32 : i32 to index
    %c0_43 = arith.constant 0 : index
    %c0_44 = arith.constant 0 : index
    %134 = vector.load %arg13[%133, %c0_43, %c0_44] : memref<2x1x64xf32, #tpu.memory_space<vmem>>, vector<1x1x64xf32>
    %135 = vector.shape_cast %134 : vector<1x1x64xf32> to vector<1x64xf32>
    %136 = vector.broadcast %135 : vector<1x64xf32> to vector<16x64xf32>
    %137 = arith.addf %132, %136 : vector<16x64xf32>
    %cst_45 = arith.constant 1.702000e+00 : f32
    %138 = vector.broadcast %cst_45 : f32 to vector<16x64xf32>
    %139 = arith.mulf %138, %137 : vector<16x64xf32>
    %140 = arith.negf %139 : vector<16x64xf32>
    %141 = math.exp %140 : vector<16x64xf32>
    %cst_46 = arith.constant 1.000000e+00 : f32
    %142 = vector.broadcast %cst_46 : f32 to vector<16x64xf32>
    %143 = arith.addf %142, %141 : vector<16x64xf32>
    %144 = arith.divf %142, %143 : vector<16x64xf32>
    %145 = arith.mulf %137, %144 : vector<16x64xf32>
    %146 = arith.truncf %145 : vector<16x64xf32> to vector<16x64xbf16>
    %147 = arith.index_cast %c0_i32 : i32 to index
    %c0_47 = arith.constant 0 : index
    %c0_48 = arith.constant 0 : index
    %148 = vector.load %arg14[%147, %c0_47, %c0_48] : memref<2x64x32xbf16, #tpu.memory_space<vmem>>, vector<1x64x32xbf16>
    %149 = vector.shape_cast %148 : vector<1x64x32xbf16> to vector<64x32xbf16>
    %cst_49 = arith.constant dense<0.000000e+00> : vector<16x32xf32>
    %150 = tpu.matmul %146, %149, %cst_49 {dimension_numbers = #tpu.dot_dimension_numbers<[1], [0], [0], [1], [0, 0, 1, 1], [], []>} : vector<16x64xbf16>, vector<64x32xbf16>, vector<16x32xf32> -> vector<16x32xf32>
    %151 = arith.index_cast %c0_i32 : i32 to index
    %c0_50 = arith.constant 0 : index
    %c0_51 = arith.constant 0 : index
    %152 = vector.load %arg15[%151, %c0_50, %c0_51] : memref<2x1x32xf32, #tpu.memory_space<vmem>>, vector<1x1x32xf32>
    %153 = vector.shape_cast %152 : vector<1x1x32xf32> to vector<1x32xf32>
    %154 = vector.broadcast %153 : vector<1x32xf32> to vector<16x32xf32>
    %155 = arith.addf %150, %154 : vector<16x32xf32>
    %156 = arith.addf %99, %155 : vector<16x32xf32>
    %c1_i32 = arith.constant 1 : i32
    %157 = arith.index_cast %c1_i32 : i32 to index
    %c0_52 = arith.constant 0 : index
    %c0_53 = arith.constant 0 : index
    %158 = vector.load %arg4[%157, %c0_52, %c0_53] : memref<2x1x32xf32, #tpu.memory_space<vmem>>, vector<1x1x32xf32>
    %159 = vector.shape_cast %158 : vector<1x1x32xf32> to vector<1x32xf32>
    %160 = arith.index_cast %c1_i32 : i32 to index
    %c0_54 = arith.constant 0 : index
    %c0_55 = arith.constant 0 : index
    %161 = vector.load %arg5[%160, %c0_54, %c0_55] : memref<2x1x32xf32, #tpu.memory_space<vmem>>, vector<1x1x32xf32>
    %162 = vector.shape_cast %161 : vector<1x1x32xf32> to vector<1x32xf32>
    %cst_56 = arith.constant dense<0.000000e+00> : vector<16xf32>
    %163 = vector.multi_reduction <add>, %156, %cst_56 [1] : vector<16x32xf32> to vector<16xf32>
    %164 = vector.shape_cast %163 : vector<16xf32> to vector<16x1xf32>
    %cst_57 = arith.constant 3.200000e+01 : f32
    %165 = vector.broadcast %cst_57 : f32 to vector<16x1xf32>
    %166 = arith.divf %164, %165 : vector<16x1xf32>
    %167 = vector.broadcast %166 : vector<16x1xf32> to vector<16x32xf32>
    %168 = arith.subf %156, %167 : vector<16x32xf32>
    %169 = arith.mulf %168, %168 : vector<16x32xf32>
    %cst_58 = arith.constant dense<0.000000e+00> : vector<16xf32>
    %170 = vector.multi_reduction <add>, %169, %cst_58 [1] : vector<16x32xf32> to vector<16xf32>
    %171 = vector.shape_cast %170 : vector<16xf32> to vector<16x1xf32>
    %cst_59 = arith.constant 3.200000e+01 : f32
    %172 = vector.broadcast %cst_59 : f32 to vector<16x1xf32>
    %173 = arith.divf %171, %172 : vector<16x1xf32>
    %174 = vector.broadcast %166 : vector<16x1xf32> to vector<16x32xf32>
    %175 = arith.subf %156, %174 : vector<16x32xf32>
    %cst_60 = arith.constant 9.99999974E-6 : f32
    %176 = vector.broadcast %cst_60 : f32 to vector<16x1xf32>
    %177 = arith.addf %173, %176 : vector<16x1xf32>
    %178 = math.rsqrt %177 : vector<16x1xf32>
    %179 = vector.broadcast %178 : vector<16x1xf32> to vector<16x32xf32>
    %180 = arith.mulf %175, %179 : vector<16x32xf32>
    %181 = vector.broadcast %159 : vector<1x32xf32> to vector<16x32xf32>
    %182 = arith.mulf %180, %181 : vector<16x32xf32>
    %183 = vector.broadcast %162 : vector<1x32xf32> to vector<16x32xf32>
    %184 = arith.addf %182, %183 : vector<16x32xf32>
    %185 = arith.truncf %184 : vector<16x32xf32> to vector<16x32xbf16>
    %186 = arith.index_cast %c1_i32 : i32 to index
    %c0_61 = arith.constant 0 : index
    %c0_62 = arith.constant 0 : index
    %187 = vector.load %arg6[%186, %c0_61, %c0_62] : memref<2x32x96xbf16, #tpu.memory_space<vmem>>, vector<1x32x96xbf16>
    %188 = vector.shape_cast %187 : vector<1x32x96xbf16> to vector<32x96xbf16>
    %cst_63 = arith.constant dense<0.000000e+00> : vector<16x96xf32>
    %189 = tpu.matmul %185, %188, %cst_63 {dimension_numbers = #tpu.dot_dimension_numbers<[1], [0], [0], [1], [0, 0, 1, 1], [], []>} : vector<16x32xbf16>, vector<32x96xbf16>, vector<16x96xf32> -> vector<16x96xf32>
    %190 = arith.index_cast %c1_i32 : i32 to index
    %c0_64 = arith.constant 0 : index
    %c0_65 = arith.constant 0 : index
    %191 = vector.load %arg7[%190, %c0_64, %c0_65] : memref<2x1x96xf32, #tpu.memory_space<vmem>>, vector<1x1x96xf32>
    %192 = vector.shape_cast %191 : vector<1x1x96xf32> to vector<1x96xf32>
    %193 = vector.broadcast %192 : vector<1x96xf32> to vector<16x96xf32>
    %194 = arith.addf %189, %193 : vector<16x96xf32>
    %195 = vector.extract_strided_slice %194 {offsets = [0, 0], sizes = [16, 32], strides = [1, 1]} : vector<16x96xf32> to vector<16x32xf32>
    %196 = vector.extract_strided_slice %194 {offsets = [0, 32], sizes = [16, 32], strides = [1, 1]} : vector<16x96xf32> to vector<16x32xf32>
    %197 = vector.extract_strided_slice %194 {offsets = [0, 64], sizes = [16, 32], strides = [1, 1]} : vector<16x96xf32> to vector<16x32xf32>
    %198 = vector.shape_cast %195 : vector<16x32xf32> to vector<2x8x4x8xf32>
    %199 = tpu.transpose %198, [0, 2, 1, 3] : vector<2x8x4x8xf32> -> vector<2x4x8x8xf32>
    %200 = vector.shape_cast %199 : vector<2x4x8x8xf32> to vector<8x8x8xf32>
    %201 = vector.shape_cast %196 : vector<16x32xf32> to vector<2x8x4x8xf32>
    %202 = tpu.transpose %201, [0, 2, 1, 3] : vector<2x8x4x8xf32> -> vector<2x4x8x8xf32>
    %203 = vector.shape_cast %202 : vector<2x4x8x8xf32> to vector<8x8x8xf32>
    %204 = vector.shape_cast %197 : vector<16x32xf32> to vector<2x8x4x8xf32>
    %205 = tpu.transpose %204, [0, 2, 1, 3] : vector<2x8x4x8xf32> -> vector<2x4x8x8xf32>
    %206 = vector.shape_cast %205 : vector<2x4x8x8xf32> to vector<8x8x8xf32>
    "tpu.trace_start"() <{level = 10 : i32, message = "bqd,bkd->bqk"}> : () -> ()
    %cst_66 = arith.constant dense<0.000000e+00> : vector<8x8x8xf32>
    %207 = tpu.matmul %200, %203, %cst_66 {dimension_numbers = #tpu.dot_dimension_numbers<[2], [2], [1], [1], [0, 0, 0, 1, 1, 1], [0], [0]>} : vector<8x8x8xf32>, vector<8x8x8xf32>, vector<8x8x8xf32> -> vector<8x8x8xf32>
    "tpu.trace_stop"() : () -> ()
    %208 = vector.shape_cast %207 : vector<8x8x8xf32> to vector<2x4x8x8xf32>
    %209 = vector.shape_cast %16 : vector<2x8x8xf32> to vector<2x1x8x8xf32>
    %210 = vector.broadcast %209 : vector<2x1x8x8xf32> to vector<2x4x8x8xf32>
    %211 = arith.addf %208, %210 : vector<2x4x8x8xf32>
    %cst_67 = arith.constant dense<0xFF800000> : vector<2x4x8xf32>
    %212 = vector.multi_reduction <maximumf>, %211, %cst_67 [3] : vector<2x4x8x8xf32> to vector<2x4x8xf32>
    %213 = vector.shape_cast %212 : vector<2x4x8xf32> to vector<2x4x8x1xf32>
    %214 = vector.broadcast %213 : vector<2x4x8x1xf32> to vector<2x4x8x8xf32>
    %215 = arith.subf %211, %214 : vector<2x4x8x8xf32>
    %216 = math.exp %215 : vector<2x4x8x8xf32>
    %cst_68 = arith.constant dense<0.000000e+00> : vector<2x4x8xf32>
    %217 = vector.multi_reduction <add>, %216, %cst_68 [3] : vector<2x4x8x8xf32> to vector<2x4x8xf32>
    %218 = vector.shape_cast %217 : vector<2x4x8xf32> to vector<2x4x8x1xf32>
    %219 = tpu.reciprocal %218 {approx = true} : vector<2x4x8x1xf32> -> vector<2x4x8x1xf32>
    %220 = vector.broadcast %219 : vector<2x4x8x1xf32> to vector<2x4x8x8xf32>
    %221 = arith.mulf %216, %220 : vector<2x4x8x8xf32>
    %222 = vector.shape_cast %221 : vector<2x4x8x8xf32> to vector<8x8x8xf32>
    "tpu.trace_start"() <{level = 10 : i32, message = "bqk,bkd->bqd"}> : () -> ()
    %cst_69 = arith.constant dense<0.000000e+00> : vector<8x8x8xf32>
    %223 = tpu.matmul %222, %206, %cst_69 {dimension_numbers = #tpu.dot_dimension_numbers<[2], [1], [1], [2], [0, 0, 0, 1, 1, 2], [0], [0]>} : vector<8x8x8xf32>, vector<8x8x8xf32>, vector<8x8x8xf32> -> vector<8x8x8xf32>
    "tpu.trace_stop"() : () -> ()
    %224 = vector.shape_cast %223 : vector<8x8x8xf32> to vector<2x4x8x8xf32>
    %225 = tpu.transpose %224, [0, 2, 1, 3] : vector<2x4x8x8xf32> -> vector<2x8x4x8xf32>
    %226 = vector.shape_cast %225 : vector<2x8x4x8xf32> to vector<16x32xf32>
    %227 = arith.truncf %226 : vector<16x32xf32> to vector<16x32xbf16>
    %228 = arith.index_cast %c1_i32 : i32 to index
    %c0_70 = arith.constant 0 : index
    %c0_71 = arith.constant 0 : index
    %229 = vector.load %arg8[%228, %c0_70, %c0_71] : memref<2x32x32xbf16, #tpu.memory_space<vmem>>, vector<1x32x32xbf16>
    %230 = vector.shape_cast %229 : vector<1x32x32xbf16> to vector<32x32xbf16>
    %cst_72 = arith.constant dense<0.000000e+00> : vector<16x32xf32>
    %231 = tpu.matmul %227, %230, %cst_72 {dimension_numbers = #tpu.dot_dimension_numbers<[1], [0], [0], [1], [0, 0, 1, 1], [], []>} : vector<16x32xbf16>, vector<32x32xbf16>, vector<16x32xf32> -> vector<16x32xf32>
    %232 = arith.index_cast %c1_i32 : i32 to index
    %c0_73 = arith.constant 0 : index
    %c0_74 = arith.constant 0 : index
    %233 = vector.load %arg9[%232, %c0_73, %c0_74] : memref<2x1x32xf32, #tpu.memory_space<vmem>>, vector<1x1x32xf32>
    %234 = vector.shape_cast %233 : vector<1x1x32xf32> to vector<1x32xf32>
    %235 = vector.broadcast %234 : vector<1x32xf32> to vector<16x32xf32>
    %236 = arith.addf %231, %235 : vector<16x32xf32>
    %237 = arith.addf %156, %236 : vector<16x32xf32>
    %238 = arith.index_cast %c1_i32 : i32 to index
    %c0_75 = arith.constant 0 : index
    %c0_76 = arith.constant 0 : index
    %239 = vector.load %arg10[%238, %c0_75, %c0_76] : memref<2x1x32xf32, #tpu.memory_space<vmem>>, vector<1x1x32xf32>
    %240 = vector.shape_cast %239 : vector<1x1x32xf32> to vector<1x32xf32>
    %241 = arith.index_cast %c1_i32 : i32 to index
    %c0_77 = arith.constant 0 : index
    %c0_78 = arith.constant 0 : index
    %242 = vector.load %arg11[%241, %c0_77, %c0_78] : memref<2x1x32xf32, #tpu.memory_space<vmem>>, vector<1x1x32xf32>
    %243 = vector.shape_cast %242 : vector<1x1x32xf32> to vector<1x32xf32>
    %cst_79 = arith.constant dense<0.000000e+00> : vector<16xf32>
    %244 = vector.multi_reduction <add>, %237, %cst_79 [1] : vector<16x32xf32> to vector<16xf32>
    %245 = vector.shape_cast %244 : vector<16xf32> to vector<16x1xf32>
    %cst_80 = arith.constant 3.200000e+01 : f32
    %246 = vector.broadcast %cst_80 : f32 to vector<16x1xf32>
    %247 = arith.divf %245, %246 : vector<16x1xf32>
    %248 = vector.broadcast %247 : vector<16x1xf32> to vector<16x32xf32>
    %249 = arith.subf %237, %248 : vector<16x32xf32>
    %250 = arith.mulf %249, %249 : vector<16x32xf32>
    %cst_81 = arith.constant dense<0.000000e+00> : vector<16xf32>
    %251 = vector.multi_reduction <add>, %250, %cst_81 [1] : vector<16x32xf32> to vector<16xf32>
    %252 = vector.shape_cast %251 : vector<16xf32> to vector<16x1xf32>
    %cst_82 = arith.constant 3.200000e+01 : f32
    %253 = vector.broadcast %cst_82 : f32 to vector<16x1xf32>
    %254 = arith.divf %252, %253 : vector<16x1xf32>
    %255 = vector.broadcast %247 : vector<16x1xf32> to vector<16x32xf32>
    %256 = arith.subf %237, %255 : vector<16x32xf32>
    %cst_83 = arith.constant 9.99999974E-6 : f32
    %257 = vector.broadcast %cst_83 : f32 to vector<16x1xf32>
    %258 = arith.addf %254, %257 : vector<16x1xf32>
    %259 = math.rsqrt %258 : vector<16x1xf32>
    %260 = vector.broadcast %259 : vector<16x1xf32> to vector<16x32xf32>
    %261 = arith.mulf %256, %260 : vector<16x32xf32>
    %262 = vector.broadcast %240 : vector<1x32xf32> to vector<16x32xf32>
    %263 = arith.mulf %261, %262 : vector<16x32xf32>
    %264 = vector.broadcast %243 : vector<1x32xf32> to vector<16x32xf32>
    %265 = arith.addf %263, %264 : vector<16x32xf32>
    %266 = arith.truncf %265 : vector<16x32xf32> to vector<16x32xbf16>
    %267 = arith.index_cast %c1_i32 : i32 to index
    %c0_84 = arith.constant 0 : index
    %c0_85 = arith.constant 0 : index
    %268 = vector.load %arg12[%267, %c0_84, %c0_85] : memref<2x32x64xbf16, #tpu.memory_space<vmem>>, vector<1x32x64xbf16>
    %269 = vector.shape_cast %268 : vector<1x32x64xbf16> to vector<32x64xbf16>
    %cst_86 = arith.constant dense<0.000000e+00> : vector<16x64xf32>
    %270 = tpu.matmul %266, %269, %cst_86 {dimension_numbers = #tpu.dot_dimension_numbers<[1], [0], [0], [1], [0, 0, 1, 1], [], []>} : vector<16x32xbf16>, vector<32x64xbf16>, vector<16x64xf32> -> vector<16x64xf32>
    %271 = arith.index_cast %c1_i32 : i32 to index
    %c0_87 = arith.constant 0 : index
    %c0_88 = arith.constant 0 : index
    %272 = vector.load %arg13[%271, %c0_87, %c0_88] : memref<2x1x64xf32, #tpu.memory_space<vmem>>, vector<1x1x64xf32>
    %273 = vector.shape_cast %272 : vector<1x1x64xf32> to vector<1x64xf32>
    %274 = vector.broadcast %273 : vector<1x64xf32> to vector<16x64xf32>
    %275 = arith.addf %270, %274 : vector<16x64xf32>
    %cst_89 = arith.constant 1.702000e+00 : f32
    %276 = vector.broadcast %cst_89 : f32 to vector<16x64xf32>
    %277 = arith.mulf %276, %275 : vector<16x64xf32>
    %278 = arith.negf %277 : vector<16x64xf32>
    %279 = math.exp %278 : vector<16x64xf32>
    %cst_90 = arith.constant 1.000000e+00 : f32
    %280 = vector.broadcast %cst_90 : f32 to vector<16x64xf32>
    %281 = arith.addf %280, %279 : vector<16x64xf32>
    %282 = arith.divf %280, %281 : vector<16x64xf32>
    %283 = arith.mulf %275, %282 : vector<16x64xf32>
    %284 = arith.truncf %283 : vector<16x64xf32> to vector<16x64xbf16>
    %285 = arith.index_cast %c1_i32 : i32 to index
    %c0_91 = arith.constant 0 : index
    %c0_92 = arith.constant 0 : index
    %286 = vector.load %arg14[%285, %c0_91, %c0_92] : memref<2x64x32xbf16, #tpu.memory_space<vmem>>, vector<1x64x32xbf16>
    %287 = vector.shape_cast %286 : vector<1x64x32xbf16> to vector<64x32xbf16>
    %cst_93 = arith.constant dense<0.000000e+00> : vector<16x32xf32>
    %288 = tpu.matmul %284, %287, %cst_93 {dimension_numbers = #tpu.dot_dimension_numbers<[1], [0], [0], [1], [0, 0, 1, 1], [], []>} : vector<16x64xbf16>, vector<64x32xbf16>, vector<16x32xf32> -> vector<16x32xf32>
    %289 = arith.index_cast %c1_i32 : i32 to index
    %c0_94 = arith.constant 0 : index
    %c0_95 = arith.constant 0 : index
    %290 = vector.load %arg15[%289, %c0_94, %c0_95] : memref<2x1x32xf32, #tpu.memory_space<vmem>>, vector<1x1x32xf32>
    %291 = vector.shape_cast %290 : vector<1x1x32xf32> to vector<1x32xf32>
    %292 = vector.broadcast %291 : vector<1x32xf32> to vector<16x32xf32>
    %293 = arith.addf %288, %292 : vector<16x32xf32>
    %294 = arith.addf %237, %293 : vector<16x32xf32>
    %c2_i32 = arith.constant 2 : i32
    %c0_96 = arith.constant 0 : index
    %c0_97 = arith.constant 0 : index
    %c0_98 = arith.constant 0 : index
    %295 = vector.load %arg2[%c0_96, %c0_97, %c0_98] : memref<2x1x8xf32, #tpu.memory_space<vmem>>, vector<2x1x8xf32>
    %296 = vector.shape_cast %294 : vector<16x32xf32> to vector<2x8x32xf32>
    "tpu.trace_start"() <{level = 10 : i32, message = "bqs,bsd->bqd"}> : () -> ()
    %cst_99 = arith.constant dense<0.000000e+00> : vector<2x1x32xf32>
    %297 = tpu.matmul %295, %296, %cst_99 {dimension_numbers = #tpu.dot_dimension_numbers<[2], [1], [1], [2], [0, 0, 0, 1, 1, 2], [0], [0]>} : vector<2x1x8xf32>, vector<2x8x32xf32>, vector<2x1x32xf32> -> vector<2x1x32xf32>
    "tpu.trace_stop"() : () -> ()
    %298 = vector.shape_cast %297 : vector<2x1x32xf32> to vector<2x32xf32>
    %c0_100 = arith.constant 0 : index
    %c0_101 = arith.constant 0 : index
    %299 = vector.load %arg16[%c0_100, %c0_101] : memref<1x32xf32, #tpu.memory_space<vmem>>, vector<1x32xf32>
    %c0_102 = arith.constant 0 : index
    %c0_103 = arith.constant 0 : index
    %300 = vector.load %arg17[%c0_102, %c0_103] : memref<1x32xf32, #tpu.memory_space<vmem>>, vector<1x32xf32>
    %cst_104 = arith.constant dense<0.000000e+00> : vector<2xf32>
    %301 = vector.multi_reduction <add>, %298, %cst_104 [1] : vector<2x32xf32> to vector<2xf32>
    %302 = vector.shape_cast %301 : vector<2xf32> to vector<2x1xf32>
    %cst_105 = arith.constant 3.200000e+01 : f32
    %303 = vector.broadcast %cst_105 : f32 to vector<2x1xf32>
    %304 = arith.divf %302, %303 : vector<2x1xf32>
    %305 = vector.broadcast %304 : vector<2x1xf32> to vector<2x32xf32>
    %306 = arith.subf %298, %305 : vector<2x32xf32>
    %307 = arith.mulf %306, %306 : vector<2x32xf32>
    %cst_106 = arith.constant dense<0.000000e+00> : vector<2xf32>
    %308 = vector.multi_reduction <add>, %307, %cst_106 [1] : vector<2x32xf32> to vector<2xf32>
    %309 = vector.shape_cast %308 : vector<2xf32> to vector<2x1xf32>
    %cst_107 = arith.constant 3.200000e+01 : f32
    %310 = vector.broadcast %cst_107 : f32 to vector<2x1xf32>
    %311 = arith.divf %309, %310 : vector<2x1xf32>
    %312 = vector.broadcast %304 : vector<2x1xf32> to vector<2x32xf32>
    %313 = arith.subf %298, %312 : vector<2x32xf32>
    %cst_108 = arith.constant 9.99999974E-6 : f32
    %314 = vector.broadcast %cst_108 : f32 to vector<2x1xf32>
    %315 = arith.addf %311, %314 : vector<2x1xf32>
    %316 = math.rsqrt %315 : vector<2x1xf32>
    %317 = vector.broadcast %316 : vector<2x1xf32> to vector<2x32xf32>
    %318 = arith.mulf %313, %317 : vector<2x32xf32>
    %319 = vector.broadcast %299 : vector<1x32xf32> to vector<2x32xf32>
    %320 = arith.mulf %318, %319 : vector<2x32xf32>
    %321 = vector.broadcast %300 : vector<1x32xf32> to vector<2x32xf32>
    %322 = arith.addf %320, %321 : vector<2x32xf32>
    %323 = arith.truncf %322 : vector<2x32xf32> to vector<2x32xbf16>
    %c0_109 = arith.constant 0 : index
    %c0_110 = arith.constant 0 : index
    %324 = vector.load %arg18[%c0_109, %c0_110] : memref<32x16xbf16, #tpu.memory_space<vmem>>, vector<32x16xbf16>
    %cst_111 = arith.constant dense<0.000000e+00> : vector<2x16xf32>
    %325 = tpu.matmul %323, %324, %cst_111 {dimension_numbers = #tpu.dot_dimension_numbers<[1], [0], [0], [1], [0, 0, 1, 1], [], []>} : vector<2x32xbf16>, vector<32x16xbf16>, vector<2x16xf32> -> vector<2x16xf32>
    %c0_112 = arith.constant 0 : index
    %c0_113 = arith.constant 0 : index
    %326 = vector.load %arg19[%c0_112, %c0_113] : memref<2x16xf32, #tpu.memory_space<vmem>>, vector<2x16xf32>
    tpu.vector_store %arg19[%c0_112, %c0_113], %325 {strides = array<i32>} : memref<2x16xf32, #tpu.memory_space<vmem>>, vector<2x16xf32>,
    return
  }
  func.func @transform_0(%arg0: i32) -> (i32, i32, i32) {
    %c0_i32 = arith.constant 0 : i32
    %c0_i32_0 = arith.constant 0 : i32
    %c0_i32_1 = arith.constant 0 : i32
    return %arg0, %c0_i32, %c0_i32_0 : i32, i32, i32
  }
  func.func @transform_1(%arg0: i32) -> (i32, i32, i32) {
    %c0_i32 = arith.constant 0 : i32
    %c0_i32_0 = arith.constant 0 : i32
    %c0_i32_1 = arith.constant 0 : i32
    return %arg0, %c0_i32, %c0_i32_0 : i32, i32, i32
  }
  func.func @transform_2(%arg0: i32) -> (i32, i32, i32) {
    %c0_i32 = arith.constant 0 : i32
    %c0_i32_0 = arith.constant 0 : i32
    %c0_i32_1 = arith.constant 0 : i32
    return %arg0, %c0_i32, %c0_i32_0 : i32, i32, i32
  }
  func.func @transform_3(%arg0: i32) -> (i32, i32, i32) {
    %c0_i32 = arith.constant 0 : i32
    %c0_i32_0 = arith.constant 0 : i32
    %c0_i32_1 = arith.constant 0 : i32
    %c0_i32_2 = arith.constant 0 : i32
    return %c0_i32, %c0_i32_0, %c0_i32_1 : i32, i32, i32
  }
  func.func @transform_4(%arg0: i32) -> (i32, i32, i32) {
    %c0_i32 = arith.constant 0 : i32
    %c0_i32_0 = arith.constant 0 : i32
    %c0_i32_1 = arith.constant 0 : i32
    %c0_i32_2 = arith.constant 0 : i32
    return %c0_i32, %c0_i32_0, %c0_i32_1 : i32, i32, i32
  }
  func.func @transform_5(%arg0: i32) -> (i32, i32, i32) {
    %c0_i32 = arith.constant 0 : i32
    %c0_i32_0 = arith.constant 0 : i32
    %c0_i32_1 = arith.constant 0 : i32
    %c0_i32_2 = arith.constant 0 : i32
    return %c0_i32, %c0_i32_0, %c0_i32_1 : i32, i32, i32
  }
  func.func @transform_6(%arg0: i32) -> (i32, i32, i32) {
    %c0_i32 = arith.constant 0 : i32
    %c0_i32_0 = arith.constant 0 : i32
    %c0_i32_1 = arith.constant 0 : i32
    %c0_i32_2 = arith.constant 0 : i32
    return %c0_i32, %c0_i32_0, %c0_i32_1 : i32, i32, i32
  }
  func.func @transform_7(%arg0: i32) -> (i32, i32, i32) {
    %c0_i32 = arith.constant 0 : i32
    %c0_i32_0 = arith.constant 0 : i32
    %c0_i32_1 = arith.constant 0 : i32
    %c0_i32_2 = arith.constant 0 : i32
    return %c0_i32, %c0_i32_0, %c0_i32_1 : i32, i32, i32
  }
  func.func @transform_8(%arg0: i32) -> (i32, i32, i32) {
    %c0_i32 = arith.constant 0 : i32
    %c0_i32_0 = arith.constant 0 : i32
    %c0_i32_1 = arith.constant 0 : i32
    %c0_i32_2 = arith.constant 0 : i32
    return %c0_i32, %c0_i32_0, %c0_i32_1 : i32, i32, i32
  }
  func.func @transform_9(%arg0: i32) -> (i32, i32, i32) {
    %c0_i32 = arith.constant 0 : i32
    %c0_i32_0 = arith.constant 0 : i32
    %c0_i32_1 = arith.constant 0 : i32
    %c0_i32_2 = arith.constant 0 : i32
    return %c0_i32, %c0_i32_0, %c0_i32_1 : i32, i32, i32
  }
  func.func @transform_10(%arg0: i32) -> (i32, i32, i32) {
    %c0_i32 = arith.constant 0 : i32
    %c0_i32_0 = arith.constant 0 : i32
    %c0_i32_1 = arith.constant 0 : i32
    %c0_i32_2 = arith.constant 0 : i32
    return %c0_i32, %c0_i32_0, %c0_i32_1 : i32, i32, i32
  }
  func.func @transform_11(%arg0: i32) -> (i32, i32, i32) {
    %c0_i32 = arith.constant 0 : i32
    %c0_i32_0 = arith.constant 0 : i32
    %c0_i32_1 = arith.constant 0 : i32
    %c0_i32_2 = arith.constant 0 : i32
    return %c0_i32, %c0_i32_0, %c0_i32_1 : i32, i32, i32
  }
  func.func @transform_12(%arg0: i32) -> (i32, i32, i32) {
    %c0_i32 = arith.constant 0 : i32
    %c0_i32_0 = arith.constant 0 : i32
    %c0_i32_1 = arith.constant 0 : i32
    %c0_i32_2 = arith.constant 0 : i32
    return %c0_i32, %c0_i32_0, %c0_i32_1 : i32, i32, i32
  }
  func.func @transform_13(%arg0: i32) -> (i32, i32, i32) {
    %c0_i32 = arith.constant 0 : i32
    %c0_i32_0 = arith.constant 0 : i32
    %c0_i32_1 = arith.constant 0 : i32
    %c0_i32_2 = arith.constant 0 : i32
    return %c0_i32, %c0_i32_0, %c0_i32_1 : i32, i32, i32
  }
  func.func @transform_14(%arg0: i32) -> (i32, i32, i32) {
    %c0_i32 = arith.constant 0 : i32
    %c0_i32_0 = arith.constant 0 : i32
    %c0_i32_1 = arith.constant 0 : i32
    %c0_i32_2 = arith.constant 0 : i32
    return %c0_i32, %c0_i32_0, %c0_i32_1 : i32, i32, i32
  }
  func.func @transform_15(%arg0: i32) -> (i32, i32) {
    %c0_i32 = arith.constant 0 : i32
    %c0_i32_0 = arith.constant 0 : i32
    %c0_i32_1 = arith.constant 0 : i32
    return %c0_i32, %c0_i32_0 : i32, i32
  }
  func.func @transform_16(%arg0: i32) -> (i32, i32) {
    %c0_i32 = arith.constant 0 : i32
    %c0_i32_0 = arith.constant 0 : i32
    %c0_i32_1 = arith.constant 0 : i32
    return %c0_i32, %c0_i32_0 : i32, i32
  }
  func.func @transform_17(%arg0: i32) -> (i32, i32) {
    %c0_i32 = arith.constant 0 : i32
    %c0_i32_0 = arith.constant 0 : i32
    %c0_i32_1 = arith.constant 0 : i32
    return %c0_i32, %c0_i32_0 : i32, i32
  }
  func.func @transform_18(%arg0: i32) -> (i32, i32) {
    %c0_i32 = arith.constant 0 : i32
    %c0_i32_0 = arith.constant 0 : i32
    return %arg0, %c0_i32 : i32, i32
  }
}

</mosaic_0001>

<llo_original>
// kernel: tpu_custom_call.1
$region0: #{tpu_custom_call.1}
  #allocation0 [shape = 'u32[]', space=smem, size = 0x4, offset = 0x4, fixed_abs, tag = 'smem constant byte address 0x4 - core index']
  #allocation1 [shape = 'u32[144,128]{1,0:T(1,128)}', space=vmem, size = 0x12000, scoped, tag = 'internal scratch']
  %s0 = inlined_call_operand.vmem [shape: f32[2,1,8], index: 0, kind: input, shape index: {}]
  %s1 = inlined_call_operand.vmem [shape: f32[2,1,8], index: 1, kind: input, shape index: {}]
  %s2 = inlined_call_operand.vmem [shape: f32[2,8,32], index: 2, kind: input, shape index: {}]
  %s3 = inlined_call_operand.vmem [shape: f32[2,1,32], index: 3, kind: input, shape index: {}]
  %s4 = inlined_call_operand.vmem [shape: f32[2,1,32], index: 4, kind: input, shape index: {}]
  %s5 = inlined_call_operand.vmem [shape: bf16[2,32,96], index: 5, kind: input, shape index: {}]
  %s6 = inlined_call_operand.hbm [shape: f32[2,1,96], index: 6, kind: input, shape index: {}]
  %s7 = inlined_call_operand.vmem [shape: bf16[2,32,32], index: 7, kind: input, shape index: {}]
  %s8 = inlined_call_operand.hbm [shape: f32[2,1,32], index: 8, kind: input, shape index: {}]
  %s9 = inlined_call_operand.hbm [shape: f32[2,1,32], index: 9, kind: input, shape index: {}]
  %s10 = inlined_call_operand.hbm [shape: f32[2,1,32], index: 10, kind: input, shape index: {}]
  %s11 = inlined_call_operand.vmem [shape: bf16[2,32,64], index: 11, kind: input, shape index: {}]
  %s12 = inlined_call_operand.vmem [shape: f32[2,1,64], index: 12, kind: input, shape index: {}]
  %s13 = inlined_call_operand.vmem [shape: bf16[2,64,32], index: 13, kind: input, shape index: {}]
  %s14 = inlined_call_operand.vmem [shape: f32[2,1,32], index: 14, kind: input, shape index: {}]
  %s15 = inlined_call_operand.vmem [shape: f32[1,32], index: 15, kind: input, shape index: {}]
  %s16 = inlined_call_operand.vmem [shape: f32[1,32], index: 16, kind: input, shape index: {}]
  %s17 = inlined_call_operand.vmem [shape: bf16[32,16], index: 17, kind: input, shape index: {}]
  %s18 = inlined_call_operand.hbm [shape: f32[2,16], index: 18, kind: output, shape index: {}]
  %s19 = sld [smem:[#allocation0]]
  $region98: #{tpu_custom_call.1} parent=0
    _
  %s21 = ssub.s32 1, %s19
  %s22 = scalar_select 0, %s21, %s19
  $region1: #{tpu_custom_call.1} parent=0
    #allocation2 [shape = 'u8[1024]{0}', space=vmem, size = 0x400, scoped, tag = 'input window, operand 6, single buffered']
    #allocation3 [shape = 's32[1]{0}', space=sflag, size = 0x4, scoped, tag = 'scoped memory for tpu_custom_call.1']
    #allocation4 [shape = 's32[1]{0}', space=sflag, size = 0x4, scoped, tag = 'scoped memory for tpu_custom_call.1']
    #allocation5 [shape = 'u8[1024]{0}', space=vmem, size = 0x400, scoped, tag = 'input window, operand 8, single buffered']
    #allocation6 [shape = 's32[1]{0}', space=sflag, size = 0x4, scoped, tag = 'scoped memory for tpu_custom_call.1']
    #allocation7 [shape = 'u8[1024]{0}', space=vmem, size = 0x400, scoped, tag = 'input window, operand 9, single buffered']
    #allocation8 [shape = 'u8[1024]{0}', space=vmem, size = 0x400, scoped, tag = 'input window, operand 10, single buffered']
    #allocation9 [shape = 's32[1]{0}', space=sflag, size = 0x4, scoped, tag = 'scoped memory for tpu_custom_call.1']
    #allocation10 [shape = 'u8[1024]{0}', space=vmem, size = 0x400, scoped, tag = 'output window, operand 0, single buffered']
    %23 = vsyncpa [#allocation3], 0
    %24 = vsyncpa [#allocation6], 0
    %25 = vsyncpa [#allocation9], 0
    %26 = vsyncpa [#allocation4], 0
    // Predicated region
    $region2: #{tpu_custom_call.1} parent=1 // pred_check
      _
    $region3: #{tpu_custom_call.1} parent=1 // pred_check_branch
      %28 = sbr.rel (0) target = $region5
    $region4: #{tpu_custom_call.1} parent=1 // pred_region
      _
    $region5: #{tpu_custom_call.1} parent=1 // pred_fallthru
      _
    // Predicated region
    $region6: #{tpu_custom_call.1} parent=1 // pred_check
      _
    $region7: #{tpu_custom_call.1} parent=1 // pred_check_branch
      %30 = sbr.rel (0) target = $region9
    $region8: #{tpu_custom_call.1} parent=1 // pred_region
      _
    $region9: #{tpu_custom_call.1} parent=1 // pred_fallthru
      _
    // Predicated region
    $region10: #{tpu_custom_call.1} parent=1 // pred_check
      _
    $region11: #{tpu_custom_call.1} parent=1 // pred_check_branch
      %32 = sbr.rel (0) target = $region13
    $region12: #{tpu_custom_call.1} parent=1 // pred_region
      _
    $region13: #{tpu_custom_call.1} parent=1 // pred_fallthru
      _
    // Predicated region
    $region14: #{tpu_custom_call.1} parent=1 // pred_check
      _
    $region15: #{tpu_custom_call.1} parent=1 // pred_check_branch
      %34 = sbr.rel (0) target = $region17
    $region16: #{tpu_custom_call.1} parent=1 // pred_region
      _
    $region17: #{tpu_custom_call.1} parent=1 // pred_fallthru
      _
    // Predicated region
    $region18: #{tpu_custom_call.1} parent=1 // pred_check
      _
    $region19: #{tpu_custom_call.1} parent=1 // pred_check_branch
      %36 = sbr.rel (0) target = $region21
    $region20: #{tpu_custom_call.1} parent=1 // pred_region
      _
    $region21: #{tpu_custom_call.1} parent=1 // pred_fallthru
      _
    // Predicated region
    $region22: #{tpu_custom_call.1} parent=1 // pred_check
      _
    $region23: #{tpu_custom_call.1} parent=1 // pred_check_branch
      %38 = sbr.rel (0) target = $region25
    $region24: #{tpu_custom_call.1} parent=1 // pred_region
      _
    $region25: #{tpu_custom_call.1} parent=1 // pred_fallthru
      _
    // Predicated region
    $region26: #{tpu_custom_call.1} parent=1 // pred_check
      _
    $region27: #{tpu_custom_call.1} parent=1 // pred_check_branch
      %40 = sbr.rel (0) target = $region29
    $region28: #{tpu_custom_call.1} parent=1 // pred_region
      %s42 = ssub.s32 32, 32
      %43 = vsyncadd [#allocation3], %s42
      %s44 = sshll.u32 [#allocation2], 4
      %s45 = int_to_ptr.vmem [resolvable:$true] %s44
      %50 = dma.hbm_to_vmem [thread:$0]  %s6, 32, %s45, [#allocation3], 16, 16, 1
    $region29: #{tpu_custom_call.1} parent=1 // pred_fallthru
      _
    // Predicated region
    $region30: #{tpu_custom_call.1} parent=1 // pred_check
      _
    $region31: #{tpu_custom_call.1} parent=1 // pred_check_branch
      %52 = sbr.rel (0) target = $region33
    $region32: #{tpu_custom_call.1} parent=1 // pred_region
      _
    $region33: #{tpu_custom_call.1} parent=1 // pred_fallthru
      _
    // Predicated region
    $region34: #{tpu_custom_call.1} parent=1 // pred_check
      _
    $region35: #{tpu_custom_call.1} parent=1 // pred_check_branch
      %54 = sbr.rel (0) target = $region37
    $region36: #{tpu_custom_call.1} parent=1 // pred_region
      %s56 = ssub.s32 32, 32
      %57 = vsyncadd [#allocation6], %s56
      %s58 = sshll.u32 [#allocation5], 4
      %s59 = int_to_ptr.vmem [resolvable:$true] %s58
      %64 = dma.hbm_to_vmem [thread:$0]  %s8, 32, %s59, [#allocation6], 16, 16, 1
    $region37: #{tpu_custom_call.1} parent=1 // pred_fallthru
      _
    // Predicated region
    $region38: #{tpu_custom_call.1} parent=1 // pred_check
      _
    $region39: #{tpu_custom_call.1} parent=1 // pred_check_branch
      %66 = sbr.rel (0) target = $region41
    $region40: #{tpu_custom_call.1} parent=1 // pred_region
      %s68 = ssub.s32 32, 32
      %69 = vsyncadd [#allocation6], %s68
      %s70 = sshll.u32 [#allocation7], 4
      %s71 = int_to_ptr.vmem [resolvable:$true] %s70
      %76 = dma.hbm_to_vmem [thread:$0]  %s9, 32, %s71, [#allocation6], 16, 16, 1
    $region41: #{tpu_custom_call.1} parent=1 // pred_fallthru
      _
    // Predicated region
    $region42: #{tpu_custom_call.1} parent=1 // pred_check
      _
    $region43: #{tpu_custom_call.1} parent=1 // pred_check_branch
      %78 = sbr.rel (0) target = $region45
    $region44: #{tpu_custom_call.1} parent=1 // pred_region
      %s80 = ssub.s32 32, 32
      %81 = vsyncadd [#allocation9], %s80
      %s82 = sshll.u32 [#allocation8], 4
      %s83 = int_to_ptr.vmem [resolvable:$true] %s82
      %88 = dma.hbm_to_vmem [thread:$0]  %s10, 32, %s83, [#allocation9], 16, 16, 1
    $region45: #{tpu_custom_call.1} parent=1 // pred_fallthru
      _
    // Predicated region
    $region46: #{tpu_custom_call.1} parent=1 // pred_check
      _
    $region47: #{tpu_custom_call.1} parent=1 // pred_check_branch
      %90 = sbr.rel (0) target = $region49
    $region48: #{tpu_custom_call.1} parent=1 // pred_region
      _
    $region49: #{tpu_custom_call.1} parent=1 // pred_fallthru
      _
    // Predicated region
    $region50: #{tpu_custom_call.1} parent=1 // pred_check
      _
    $region51: #{tpu_custom_call.1} parent=1 // pred_check_branch
      %92 = sbr.rel (0) target = $region53
    $region52: #{tpu_custom_call.1} parent=1 // pred_region
      _
    $region53: #{tpu_custom_call.1} parent=1 // pred_fallthru
      _
    // Predicated region
    $region54: #{tpu_custom_call.1} parent=1 // pred_check
      _
    $region55: #{tpu_custom_call.1} parent=1 // pred_check_branch
      %94 = sbr.rel (0) target = $region57
    $region56: #{tpu_custom_call.1} parent=1 // pred_region
      _
    $region57: #{tpu_custom_call.1} parent=1 // pred_fallthru
      _
    // Predicated region
    $region58: #{tpu_custom_call.1} parent=1 // pred_check
      _
    $region59: #{tpu_custom_call.1} parent=1 // pred_check_branch
      %96 = sbr.rel (0) target = $region61
    $region60: #{tpu_custom_call.1} parent=1 // pred_region
      _
    $region61: #{tpu_custom_call.1} parent=1 // pred_fallthru
      _
    // Predicated region
    $region62: #{tpu_custom_call.1} parent=1 // pred_check
      _
    $region63: #{tpu_custom_call.1} parent=1 // pred_check_branch
      %98 = sbr.rel (0) target = $region65
    $region64: #{tpu_custom_call.1} parent=1 // pred_region
      _
    $region65: #{tpu_custom_call.1} parent=1 // pred_fallthru
      _
    // Predicated region
    $region66: #{tpu_custom_call.1} parent=1 // pred_check
      _
    $region67: #{tpu_custom_call.1} parent=1 // pred_check_branch
      %100 = sbr.rel (0) target = $region69
    $region68: #{tpu_custom_call.1} parent=1 // pred_region
      _
    $region69: #{tpu_custom_call.1} parent=1 // pred_fallthru
      _
    // Predicated region
    $region70: #{tpu_custom_call.1} parent=1 // pred_check
      _
    $region71: #{tpu_custom_call.1} parent=1 // pred_check_branch
      %102 = sbr.rel (0) target = $region73
    $region72: #{tpu_custom_call.1} parent=1 // pred_region
      _
    $region73: #{tpu_custom_call.1} parent=1 // pred_fallthru
      _
    // Predicated region
    $region74: #{tpu_custom_call.1} parent=1 // pred_check
      _
    $region75: #{tpu_custom_call.1} parent=1 // pred_check_branch
      %104 = sbr.rel (0) target = $region77
    $region76: #{tpu_custom_call.1} parent=1 // pred_region
      %105 = dma.done [#allocation3], 32
    $region77: #{tpu_custom_call.1} parent=1 // pred_fallthru
      _
    // Predicated region
    $region78: #{tpu_custom_call.1} parent=1 // pred_check
      _
    $region79: #{tpu_custom_call.1} parent=1 // pred_check_branch
      %107 = sbr.rel (0) target = $region81
    $region80: #{tpu_custom_call.1} parent=1 // pred_region
      %108 = dma.done [#allocation6], 32
    $region81: #{tpu_custom_call.1} parent=1 // pred_fallthru
      _
    // Predicated region
    $region82: #{tpu_custom_call.1} parent=1 // pred_check
      _
    $region83: #{tpu_custom_call.1} parent=1 // pred_check_branch
      %110 = sbr.rel (0) target = $region85
    $region84: #{tpu_custom_call.1} parent=1 // pred_region
      %111 = dma.done [#allocation6], 32
    $region85: #{tpu_custom_call.1} parent=1 // pred_fallthru
      _
    // Predicated region
    $region86: #{tpu_custom_call.1} parent=1 // pred_check
      _
    $region87: #{tpu_custom_call.1} parent=1 // pred_check_branch
      %113 = sbr.rel (0) target = $region89
    $region88: #{tpu_custom_call.1} parent=1 // pred_region
      %114 = dma.done [#allocation9], 32
    $region89: #{tpu_custom_call.1} parent=1 // pred_fallthru
      _
    %v116 = vld [vmem:[%s0] sm:$0x1]
    %v117 = vld [vmem:[%s0 + $0x1] sm:$0x1]
    %v118 = vlaneseq
    %v119 = vshrl.u32 %v118, 7
    %v120 = vlaneseq
    %v121 = vand.u32 %v120, 127
    %vm122 = vcmp.le.s32.totalorder %v121, %v119
    %v123 = vsel %vm122, 0.0, -1e+09
    %v124 = vsub.f32 1.0, %v116
    %v125 = vsub.f32 1.0, %v117
    %v126 = vmul.f32 %v124, -1e+09
    %v127 = vmul.f32 %v125, -1e+09
    %v130 = vlaneseq
    %v131 = vshrl.u32 %v130, 7
    %v132 = vsub.s32 0, %v131
    %v133 = vrot.slane %v126, %v132
    %v134 = vlaneseq
    %v135 = vshrl.u32 %v134, 7
    %v136 = vsub.s32 0, %v135
    %v137 = vrot.slane %v127, %v136
    %v140 = vadd.f32 %v123, %v133
    %v141 = vadd.f32 %v123, %v137
    %v142 = vld [vmem:[%s2] sm:$0xff]
    %v143 = vld [vmem:[%s2 + $0x8] sm:$0xff]
    %v144 = vld [vmem:[%s3] sm:$0x1]
    %v145 = vld [vmem:[%s4] sm:$0x1]
    %vm146 = vcmask 261120
    %v147 = vsel %vm146, %v142, 0.0
    %148 = vadd.xlane.f32.xlu0 %v147
    %v149 = vpop.xlane.xlu0 %148
    %v150 = vsel %vm146, %v143, 0.0
    %151 = vadd.xlane.f32.xlu0 %v150
    %v152 = vpop.xlane.xlu0 %151
    %v153 = vrcp.pop 32.0
    %v154 = vmul.f32 %v149, %v153
    %v155 = vmul.f32 %v152, %v153
    %v156 = vsub.f32 %v142, %v154
    %v157 = vsub.f32 %v143, %v155
    %v158 = vmul.f32 %v156, %v156
    %v159 = vmul.f32 %v157, %v157
    %v160 = vsel %vm146, %v158, 0.0
    %161 = vadd.xlane.f32.xlu0 %v160
    %v162 = vpop.xlane.xlu0 %161
    %v163 = vsel %vm146, %v159, 0.0
    %164 = vadd.xlane.f32.xlu0 %v163
    %v165 = vpop.xlane.xlu0 %164
    %v166 = vmul.f32 %v162, %v153
    %v167 = vmul.f32 %v165, %v153
    %v168 = vadd.f32 %v166, 1e-05
    %v169 = vadd.f32 %v167, 1e-05
    %v170 = vrsqrt.pop %v168
    %v171 = vrsqrt.pop %v169
    %v172 = vmul.f32 %v156, %v170
    %v173 = vmul.f32 %v157, %v171
    %v175 = vlaneseq
    %v176 = vshrl.u32 %v175, 7
    %v177 = vsub.s32 0, %v176
    %v178 = vrot.slane %v144, %v177
    %v180 = vmul.f32 %v172, %v178
    %v181 = vmul.f32 %v173, %v178
    %v183 = vlaneseq
    %v184 = vshrl.u32 %v183, 7
    %v185 = vsub.s32 0, %v184
    %v186 = vrot.slane %v145, %v185
    %v188 = vadd.f32 %v180, %v186
    %v189 = vadd.f32 %v181, %v186
    %v190 = vpack.c.bf16 %v189, %v188
    %v191 = vld [vmem:[%s5] sm:$0xf]
    %v192 = vld [vmem:[%s5 + $0x4] sm:$0xf]
    %v193 = vld [vmem:[%s5 + $0x8] sm:$0xf]
    %v194 = vld [vmem:[%s5 + $0xc] sm:$0xf]
    %v195 = vld [vmem:[#allocation2] sm:$0x1]
    %v197 = vlaneseq
    %v198 = vshrl.u32 %v197, 7
    %v199 = vsub.s32 0, %v198
    %v200 = vrot.slane %v195, %v199
    %v206 = vunpack.c.l.b16 %v191
    %v207 = vunpack.c.l.b16 %v192
    %v208 = vunpack.c.l.b16 %v193
    %v209 = vunpack.c.l.b16 %v194
    %v210 = vpack.c.b16 %v207, %v206
    %v211 = vpack.c.b16 %v209, %v208
    %v215 = vsel %vm146, %v190, 0
    %217 = vmatprep.subr.bf16.mxu0 0
    %218 = vmatpush1.bf16.msra.mxu0 %v210
    %219 = vmatprep.subr.bf16.mxu0 0
    %220 = vmatpush1.bf16.msra.mxu0 %v211
    %221 = vmatprep.subr.bf16.mxu0 0
    %222 = vmatpush1.bf16.msra.mxu0 0
    %223 = vmatprep.subr.bf16.mxu0 0
    %224 = vmatpush1.bf16.msra.mxu0 0
    %225 = vmatprep.subr.bf16.mxu0 0
    %226 = vmatpush1.bf16.msra.mxu0 0
    %227 = vmatprep.subr.bf16.mxu0 0
    %228 = vmatpush1.bf16.msra.mxu0 0
    %229 = vmatprep.subr.bf16.mxu0 0
    %230 = vmatpush1.bf16.msra.mxu0 0
    %231 = vmatprep.subr.bf16.mxu0 0
    %232 = vmatpush1.bf16.msra.mxu0 0
    %233 = vmatprep.subr.bf16.mxu0 0
    %234 = vmatpush1.bf16.msra.mxu0 0
    %235 = vmatprep.subr.bf16.mxu0 0
    %236 = vmatpush1.bf16.msra.mxu0 0
    %237 = vmatprep.subr.bf16.mxu0 0
    %238 = vmatpush1.bf16.msra.mxu0 0
    %239 = vmatprep.subr.bf16.mxu0 0
    %240 = vmatpush1.bf16.msra.mxu0 0
    %241 = vmatprep.subr.bf16.mxu0 0
    %242 = vmatpush1.bf16.msra.mxu0 0
    %243 = vmatprep.subr.bf16.mxu0 0
    %244 = vmatpush1.bf16.msra.mxu0 0
    %245 = vmatprep.subr.bf16.mxu0 0
    %246 = vmatpush1.bf16.msra.mxu0 0
    %247 = vmatprep.subr.bf16.mxu0 0
    %248 = vmatpush1.bf16.msra.mxu0 0
    %249 = vmatprep.mubr.bf16.mxu0 0
    %250 = vmatmul.mubr.bf16.gmra.mrb[0].mxu0 %v215
    %v251 = vpop.f32.mrb[0].mxu0
    %v252 = vadd.f32 %v200, %v251
    %v253 = vpop.f32.mrb[0].mxu0
    %v254 = vpop.f32.mrb[0].mxu0
    %v255 = vadd.f32 %v200, %v254
    %v256 = vpop.f32.mrb[0].mxu0
    %257 = vdwg.mxu0
    %260 = vrot.lane.b32.xlu0 %v252, 120
    %v261 = vpop.permute.xlu0 %260
    %262 = vrot.lane.b32.xlu0 %v255, 120
    %v263 = vpop.permute.xlu0 %262
    %266 = vrot.lane.b32.xlu0 %v252, 112
    %v267 = vpop.permute.xlu0 %266
    %268 = vrot.lane.b32.xlu0 %v255, 112
    %v269 = vpop.permute.xlu0 %268
    %272 = vrot.lane.b32.xlu0 %v252, 104
    %v273 = vpop.permute.xlu0 %272
    %274 = vrot.lane.b32.xlu0 %v255, 104
    %v275 = vpop.permute.xlu0 %274
    %v278 = vcombine.low %v252, %v267
    %v279 = vcombine.high %v252, %v267
    %v281 = vunpack.c.l.s4 1983009808
    %v282 = vunpack.c.0.s8 %v281
    %v283 = vlaneseq
    %v284 = vshrl.u32 %v283, 7
    %v285 = vsub.s32 %v282, %v284
    %v286 = vrot.slane %v278, %v285
    %v288 = vunpack.c.l.s4 1983009808
    %v289 = vunpack.c.0.s8 %v288
    %v290 = vlaneseq
    %v291 = vshrl.u32 %v290, 7
    %v292 = vsub.s32 %v289, %v291
    %v293 = vrot.slane %v279, %v292
    %v294 = vcombine.low %v261, %v273
    %v295 = vcombine.high %v261, %v273
    %v297 = vunpack.c.l.s4 1983009808
    %v298 = vunpack.c.0.s8 %v297
    %v299 = vlaneseq
    %v300 = vshrl.u32 %v299, 7
    %v301 = vsub.s32 %v298, %v300
    %v302 = vrot.slane %v294, %v301
    %v304 = vunpack.c.l.s4 1983009808
    %v305 = vunpack.c.0.s8 %v304
    %v306 = vlaneseq
    %v307 = vshrl.u32 %v306, 7
    %v308 = vsub.s32 %v305, %v307
    %v309 = vrot.slane %v295, %v308
    %v310 = vcombine.low %v286, %v302
    %v311 = vcombine.high %v286, %v302
    %v313 = vunpack.c.l.s4 1934713408
    %v314 = vunpack.c.0.s8 %v313
    %v315 = vlaneseq
    %v316 = vshrl.u32 %v315, 7
    %v317 = vsub.s32 %v314, %v316
    %v318 = vrot.slane %v310, %v317
    %v320 = vunpack.c.l.s4 1934713408
    %v321 = vunpack.c.0.s8 %v320
    %v322 = vlaneseq
    %v323 = vshrl.u32 %v322, 7
    %v324 = vsub.s32 %v321, %v323
    %v325 = vrot.slane %v311, %v324
    %v326 = vcombine.low %v293, %v309
    %v327 = vcombine.high %v293, %v309
    %v329 = vunpack.c.l.s4 1934713408
    %v330 = vunpack.c.0.s8 %v329
    %v331 = vlaneseq
    %v332 = vshrl.u32 %v331, 7
    %v333 = vsub.s32 %v330, %v332
    %v334 = vrot.slane %v326, %v333
    %v336 = vunpack.c.l.s4 1934713408
    %v337 = vunpack.c.0.s8 %v336
    %v338 = vlaneseq
    %v339 = vshrl.u32 %v338, 7
    %v340 = vsub.s32 %v337, %v339
    %v341 = vrot.slane %v327, %v340
    %v342 = vcombine.high %v318, 0.0
    %v343 = vcombine.high %v325, 0.0
    %v344 = vcombine.high %v334, 0.0
    %v345 = vcombine.high %v341, 0.0
    %v346 = vcombine.low %v255, %v269
    %v347 = vcombine.high %v255, %v269
    %v349 = vunpack.c.l.s4 1983009808
    %v350 = vunpack.c.0.s8 %v349
    %v351 = vlaneseq
    %v352 = vshrl.u32 %v351, 7
    %v353 = vsub.s32 %v350, %v352
    %v354 = vrot.slane %v346, %v353
    %v356 = vunpack.c.l.s4 1983009808
    %v357 = vunpack.c.0.s8 %v356
    %v358 = vlaneseq
    %v359 = vshrl.u32 %v358, 7
    %v360 = vsub.s32 %v357, %v359
    %v361 = vrot.slane %v347, %v360
    %v362 = vcombine.low %v263, %v275
    %v363 = vcombine.high %v263, %v275
    %v365 = vunpack.c.l.s4 1983009808
    %v366 = vunpack.c.0.s8 %v365
    %v367 = vlaneseq
    %v368 = vshrl.u32 %v367, 7
    %v369 = vsub.s32 %v366, %v368
    %v370 = vrot.slane %v362, %v369
    %v372 = vunpack.c.l.s4 1983009808
    %v373 = vunpack.c.0.s8 %v372
    %v374 = vlaneseq
    %v375 = vshrl.u32 %v374, 7
    %v376 = vsub.s32 %v373, %v375
    %v377 = vrot.slane %v363, %v376
    %v378 = vcombine.low %v354, %v370
    %v379 = vcombine.high %v354, %v370
    %v381 = vunpack.c.l.s4 1934713408
    %v382 = vunpack.c.0.s8 %v381
    %v383 = vlaneseq
    %v384 = vshrl.u32 %v383, 7
    %v385 = vsub.s32 %v382, %v384
    %v386 = vrot.slane %v378, %v385
    %v388 = vunpack.c.l.s4 1934713408
    %v389 = vunpack.c.0.s8 %v388
    %v390 = vlaneseq
    %v391 = vshrl.u32 %v390, 7
    %v392 = vsub.s32 %v389, %v391
    %v393 = vrot.slane %v379, %v392
    %v394 = vcombine.low %v361, %v377
    %v395 = vcombine.high %v361, %v377
    %v397 = vunpack.c.l.s4 1934713408
    %v398 = vunpack.c.0.s8 %v397
    %v399 = vlaneseq
    %v400 = vshrl.u32 %v399, 7
    %v401 = vsub.s32 %v398, %v400
    %v402 = vrot.slane %v394, %v401
    %v404 = vunpack.c.l.s4 1934713408
    %v405 = vunpack.c.0.s8 %v404
    %v406 = vlaneseq
    %v407 = vshrl.u32 %v406, 7
    %v408 = vsub.s32 %v405, %v407
    %v409 = vrot.slane %v395, %v408
    %v410 = vcombine.high %v386, 0.0
    %v411 = vcombine.high %v393, 0.0
    %v412 = vcombine.high %v402, 0.0
    %v413 = vcombine.high %v409, 0.0
    %v414 = vcombine.low %v318, %v325
    %v416 = vunpack.c.l.s4 1983009808
    %v417 = vunpack.c.0.s8 %v416
    %v418 = vlaneseq
    %v419 = vshrl.u32 %v418, 7
    %v420 = vsub.s32 %v417, %v419
    %v421 = vrot.slane %v414, %v420
    %v422 = vcombine.low %v342, %v343
    %v424 = vunpack.c.l.s4 1983009808
    %v425 = vunpack.c.0.s8 %v424
    %v426 = vlaneseq
    %v427 = vshrl.u32 %v426, 7
    %v428 = vsub.s32 %v425, %v427
    %v429 = vrot.slane %v422, %v428
    %v430 = vcombine.low %v334, %v341
    %v432 = vunpack.c.l.s4 1983009808
    %v433 = vunpack.c.0.s8 %v432
    %v434 = vlaneseq
    %v435 = vshrl.u32 %v434, 7
    %v436 = vsub.s32 %v433, %v435
    %v437 = vrot.slane %v430, %v436
    %v438 = vcombine.low %v344, %v345
    %v440 = vunpack.c.l.s4 1983009808
    %v441 = vunpack.c.0.s8 %v440
    %v442 = vlaneseq
    %v443 = vshrl.u32 %v442, 7
    %v444 = vsub.s32 %v441, %v443
    %v445 = vrot.slane %v438, %v444
    %v446 = vcombine.low %v421, %v429
    %v447 = vcombine.high %v421, %v429
    %v449 = vunpack.c.l.s4 1934713408
    %v450 = vunpack.c.0.s8 %v449
    %v451 = vlaneseq
    %v452 = vshrl.u32 %v451, 7
    %v453 = vsub.s32 %v450, %v452
    %v454 = vrot.slane %v446, %v453
    %v456 = vunpack.c.l.s4 1934713408
    %v457 = vunpack.c.0.s8 %v456
    %v458 = vlaneseq
    %v459 = vshrl.u32 %v458, 7
    %v460 = vsub.s32 %v457, %v459
    %v461 = vrot.slane %v447, %v460
    %v462 = vcombine.low %v437, %v445
    %v463 = vcombine.high %v437, %v445
    %v465 = vunpack.c.l.s4 1934713408
    %v466 = vunpack.c.0.s8 %v465
    %v467 = vlaneseq
    %v468 = vshrl.u32 %v467, 7
    %v469 = vsub.s32 %v466, %v468
    %v470 = vrot.slane %v462, %v469
    %v472 = vunpack.c.l.s4 1934713408
    %v473 = vunpack.c.0.s8 %v472
    %v474 = vlaneseq
    %v475 = vshrl.u32 %v474, 7
    %v476 = vsub.s32 %v473, %v475
    %v477 = vrot.slane %v463, %v476
    %v478 = vcombine.low %v454, %v470
    %v479 = vcombine.high %v454, %v470
    %v480 = vcombine.low %v461, %v477
    %v481 = vcombine.high %v461, %v477
    %v482 = vcombine.low %v386, %v393
    %v484 = vunpack.c.l.s4 1983009808
    %v485 = vunpack.c.0.s8 %v484
    %v486 = vlaneseq
    %v487 = vshrl.u32 %v486, 7
    %v488 = vsub.s32 %v485, %v487
    %v489 = vrot.slane %v482, %v488
    %v490 = vcombine.low %v410, %v411
    %v492 = vunpack.c.l.s4 1983009808
    %v493 = vunpack.c.0.s8 %v492
    %v494 = vlaneseq
    %v495 = vshrl.u32 %v494, 7
    %v496 = vsub.s32 %v493, %v495
    %v497 = vrot.slane %v490, %v496
    %v498 = vcombine.low %v402, %v409
    %v500 = vunpack.c.l.s4 1983009808
    %v501 = vunpack.c.0.s8 %v500
    %v502 = vlaneseq
    %v503 = vshrl.u32 %v502, 7
    %v504 = vsub.s32 %v501, %v503
    %v505 = vrot.slane %v498, %v504
    %v506 = vcombine.low %v412, %v413
    %v508 = vunpack.c.l.s4 1983009808
    %v509 = vunpack.c.0.s8 %v508
    %v510 = vlaneseq
    %v511 = vshrl.u32 %v510, 7
    %v512 = vsub.s32 %v509, %v511
    %v513 = vrot.slane %v506, %v512
    %v514 = vcombine.low %v489, %v497
    %v515 = vcombine.high %v489, %v497
    %v517 = vunpack.c.l.s4 1934713408
    %v518 = vunpack.c.0.s8 %v517
    %v519 = vlaneseq
    %v520 = vshrl.u32 %v519, 7
    %v521 = vsub.s32 %v518, %v520
    %v522 = vrot.slane %v514, %v521
    %v524 = vunpack.c.l.s4 1934713408
    %v525 = vunpack.c.0.s8 %v524
    %v526 = vlaneseq
    %v527 = vshrl.u32 %v526, 7
    %v528 = vsub.s32 %v525, %v527
    %v529 = vrot.slane %v515, %v528
    %v530 = vcombine.low %v505, %v513
    %v531 = vcombine.high %v505, %v513
    %v533 = vunpack.c.l.s4 1934713408
    %v534 = vunpack.c.0.s8 %v533
    %v535 = vlaneseq
    %v536 = vshrl.u32 %v535, 7
    %v537 = vsub.s32 %v534, %v536
    %v538 = vrot.slane %v530, %v537
    %v540 = vunpack.c.l.s4 1934713408
    %v541 = vunpack.c.0.s8 %v540
    %v542 = vlaneseq
    %v543 = vshrl.u32 %v542, 7
    %v544 = vsub.s32 %v541, %v543
    %v545 = vrot.slane %v531, %v544
    %v546 = vcombine.low %v522, %v538
    %v547 = vcombine.high %v522, %v538
    %v548 = vcombine.low %v529, %v545
    %v549 = vcombine.high %v529, %v545
    %550 = vrot.lane.b32.xlu0 %v252, 96
    %v551 = vpop.permute.xlu0 %550
    %552 = vrot.lane.b32.xlu0 %v255, 96
    %v553 = vpop.permute.xlu0 %552
    %554 = vrot.lane.b32.xlu0 %v261, 96
    %v555 = vpop.permute.xlu0 %554
    %556 = vrot.lane.b32.xlu0 %v263, 96
    %v557 = vpop.permute.xlu0 %556
    %558 = vrot.lane.b32.xlu0 %v267, 96
    %v559 = vpop.permute.xlu0 %558
    %560 = vrot.lane.b32.xlu0 %v269, 96
    %v561 = vpop.permute.xlu0 %560
    %562 = vrot.lane.b32.xlu0 %v273, 96
    %v563 = vpop.permute.xlu0 %562
    %564 = vrot.lane.b32.xlu0 %v275, 96
    %v565 = vpop.permute.xlu0 %564
    %v574 = vcombine.low %v551, %v559
    %v575 = vcombine.high %v551, %v559
    %v577 = vunpack.c.l.s4 1983009808
    %v578 = vunpack.c.0.s8 %v577
    %v579 = vlaneseq
    %v580 = vshrl.u32 %v579, 7
    %v581 = vsub.s32 %v578, %v580
    %v582 = vrot.slane %v574, %v581
    %v584 = vunpack.c.l.s4 1983009808
    %v585 = vunpack.c.0.s8 %v584
    %v586 = vlaneseq
    %v587 = vshrl.u32 %v586, 7
    %v588 = vsub.s32 %v585, %v587
    %v589 = vrot.slane %v575, %v588
    %v590 = vcombine.low %v555, %v563
    %v591 = vcombine.high %v555, %v563
    %v593 = vunpack.c.l.s4 1983009808
    %v594 = vunpack.c.0.s8 %v593
    %v595 = vlaneseq
    %v596 = vshrl.u32 %v595, 7
    %v597 = vsub.s32 %v594, %v596
    %v598 = vrot.slane %v590, %v597
    %v600 = vunpack.c.l.s4 1983009808
    %v601 = vunpack.c.0.s8 %v600
    %v602 = vlaneseq
    %v603 = vshrl.u32 %v602, 7
    %v604 = vsub.s32 %v601, %v603
    %v605 = vrot.slane %v591, %v604
    %v606 = vcombine.low %v582, %v598
    %v607 = vcombine.high %v582, %v598
    %v609 = vunpack.c.l.s4 1934713408
    %v610 = vunpack.c.0.s8 %v609
    %v611 = vlaneseq
    %v612 = vshrl.u32 %v611, 7
    %v613 = vsub.s32 %v610, %v612
    %v614 = vrot.slane %v606, %v613
    %v616 = vunpack.c.l.s4 1934713408
    %v617 = vunpack.c.0.s8 %v616
    %v618 = vlaneseq
    %v619 = vshrl.u32 %v618, 7
    %v620 = vsub.s32 %v617, %v619
    %v621 = vrot.slane %v607, %v620
    %v622 = vcombine.low %v589, %v605
    %v623 = vcombine.high %v589, %v605
    %v625 = vunpack.c.l.s4 1934713408
    %v626 = vunpack.c.0.s8 %v625
    %v627 = vlaneseq
    %v628 = vshrl.u32 %v627, 7
    %v629 = vsub.s32 %v626, %v628
    %v630 = vrot.slane %v622, %v629
    %v632 = vunpack.c.l.s4 1934713408
    %v633 = vunpack.c.0.s8 %v632
    %v634 = vlaneseq
    %v635 = vshrl.u32 %v634, 7
    %v636 = vsub.s32 %v633, %v635
    %v637 = vrot.slane %v623, %v636
    %v638 = vcombine.high %v614, 0.0
    %v639 = vcombine.high %v621, 0.0
    %v640 = vcombine.high %v630, 0.0
    %v641 = vcombine.high %v637, 0.0
    %v642 = vcombine.low %v553, %v561
    %v643 = vcombine.high %v553, %v561
    %v645 = vunpack.c.l.s4 1983009808
    %v646 = vunpack.c.0.s8 %v645
    %v647 = vlaneseq
    %v648 = vshrl.u32 %v647, 7
    %v649 = vsub.s32 %v646, %v648
    %v650 = vrot.slane %v642, %v649
    %v652 = vunpack.c.l.s4 1983009808
    %v653 = vunpack.c.0.s8 %v652
    %v654 = vlaneseq
    %v655 = vshrl.u32 %v654, 7
    %v656 = vsub.s32 %v653, %v655
    %v657 = vrot.slane %v643, %v656
    %v658 = vcombine.low %v557, %v565
    %v659 = vcombine.high %v557, %v565
    %v661 = vunpack.c.l.s4 1983009808
    %v662 = vunpack.c.0.s8 %v661
    %v663 = vlaneseq
    %v664 = vshrl.u32 %v663, 7
    %v665 = vsub.s32 %v662, %v664
    %v666 = vrot.slane %v658, %v665
    %v668 = vunpack.c.l.s4 1983009808
    %v669 = vunpack.c.0.s8 %v668
    %v670 = vlaneseq
    %v671 = vshrl.u32 %v670, 7
    %v672 = vsub.s32 %v669, %v671
    %v673 = vrot.slane %v659, %v672
    %v674 = vcombine.low %v650, %v666
    %v675 = vcombine.high %v650, %v666
    %v677 = vunpack.c.l.s4 1934713408
    %v678 = vunpack.c.0.s8 %v677
    %v679 = vlaneseq
    %v680 = vshrl.u32 %v679, 7
    %v681 = vsub.s32 %v678, %v680
    %v682 = vrot.slane %v674, %v681
    %v684 = vunpack.c.l.s4 1934713408
    %v685 = vunpack.c.0.s8 %v684
    %v686 = vlaneseq
    %v687 = vshrl.u32 %v686, 7
    %v688 = vsub.s32 %v685, %v687
    %v689 = vrot.slane %v675, %v688
    %v690 = vcombine.low %v657, %v673
    %v691 = vcombine.high %v657, %v673
    %v693 = vunpack.c.l.s4 1934713408
    %v694 = vunpack.c.0.s8 %v693
    %v695 = vlaneseq
    %v696 = vshrl.u32 %v695, 7
    %v697 = vsub.s32 %v694, %v696
    %v698 = vrot.slane %v690, %v697
    %v700 = vunpack.c.l.s4 1934713408
    %v701 = vunpack.c.0.s8 %v700
    %v702 = vlaneseq
    %v703 = vshrl.u32 %v702, 7
    %v704 = vsub.s32 %v701, %v703
    %v705 = vrot.slane %v691, %v704
    %v706 = vcombine.high %v682, 0.0
    %v707 = vcombine.high %v689, 0.0
    %v708 = vcombine.high %v698, 0.0
    %v709 = vcombine.high %v705, 0.0
    %v710 = vcombine.low %v614, %v621
    %v712 = vunpack.c.l.s4 1983009808
    %v713 = vunpack.c.0.s8 %v712
    %v714 = vlaneseq
    %v715 = vshrl.u32 %v714, 7
    %v716 = vsub.s32 %v713, %v715
    %v717 = vrot.slane %v710, %v716
    %v718 = vcombine.low %v638, %v639
    %v720 = vunpack.c.l.s4 1983009808
    %v721 = vunpack.c.0.s8 %v720
    %v722 = vlaneseq
    %v723 = vshrl.u32 %v722, 7
    %v724 = vsub.s32 %v721, %v723
    %v725 = vrot.slane %v718, %v724
    %v726 = vcombine.low %v630, %v637
    %v728 = vunpack.c.l.s4 1983009808
    %v729 = vunpack.c.0.s8 %v728
    %v730 = vlaneseq
    %v731 = vshrl.u32 %v730, 7
    %v732 = vsub.s32 %v729, %v731
    %v733 = vrot.slane %v726, %v732
    %v734 = vcombine.low %v640, %v641
    %v736 = vunpack.c.l.s4 1983009808
    %v737 = vunpack.c.0.s8 %v736
    %v738 = vlaneseq
    %v739 = vshrl.u32 %v738, 7
    %v740 = vsub.s32 %v737, %v739
    %v741 = vrot.slane %v734, %v740
    %v742 = vcombine.low %v717, %v725
    %v743 = vcombine.high %v717, %v725
    %v745 = vunpack.c.l.s4 1934713408
    %v746 = vunpack.c.0.s8 %v745
    %v747 = vlaneseq
    %v748 = vshrl.u32 %v747, 7
    %v749 = vsub.s32 %v746, %v748
    %v750 = vrot.slane %v742, %v749
    %v752 = vunpack.c.l.s4 1934713408
    %v753 = vunpack.c.0.s8 %v752
    %v754 = vlaneseq
    %v755 = vshrl.u32 %v754, 7
    %v756 = vsub.s32 %v753, %v755
    %v757 = vrot.slane %v743, %v756
    %v758 = vcombine.low %v733, %v741
    %v759 = vcombine.high %v733, %v741
    %v761 = vunpack.c.l.s4 1934713408
    %v762 = vunpack.c.0.s8 %v761
    %v763 = vlaneseq
    %v764 = vshrl.u32 %v763, 7
    %v765 = vsub.s32 %v762, %v764
    %v766 = vrot.slane %v758, %v765
    %v768 = vunpack.c.l.s4 1934713408
    %v769 = vunpack.c.0.s8 %v768
    %v770 = vlaneseq
    %v771 = vshrl.u32 %v770, 7
    %v772 = vsub.s32 %v769, %v771
    %v773 = vrot.slane %v759, %v772
    %v774 = vcombine.low %v750, %v766
    %v775 = vcombine.high %v750, %v766
    %v776 = vcombine.low %v757, %v773
    %v777 = vcombine.high %v757, %v773
    %v778 = vcombine.low %v682, %v689
    %v780 = vunpack.c.l.s4 1983009808
    %v781 = vunpack.c.0.s8 %v780
    %v782 = vlaneseq
    %v783 = vshrl.u32 %v782, 7
    %v784 = vsub.s32 %v781, %v783
    %v785 = vrot.slane %v778, %v784
    %v786 = vcombine.low %v706, %v707
    %v788 = vunpack.c.l.s4 1983009808
    %v789 = vunpack.c.0.s8 %v788
    %v790 = vlaneseq
    %v791 = vshrl.u32 %v790, 7
    %v792 = vsub.s32 %v789, %v791
    %v793 = vrot.slane %v786, %v792
    %v794 = vcombine.low %v698, %v705
    %v796 = vunpack.c.l.s4 1983009808
    %v797 = vunpack.c.0.s8 %v796
    %v798 = vlaneseq
    %v799 = vshrl.u32 %v798, 7
    %v800 = vsub.s32 %v797, %v799
    %v801 = vrot.slane %v794, %v800
    %v802 = vcombine.low %v708, %v709
    %v804 = vunpack.c.l.s4 1983009808
    %v805 = vunpack.c.0.s8 %v804
    %v806 = vlaneseq
    %v807 = vshrl.u32 %v806, 7
    %v808 = vsub.s32 %v805, %v807
    %v809 = vrot.slane %v802, %v808
    %v810 = vcombine.low %v785, %v793
    %v811 = vcombine.high %v785, %v793
    %v813 = vunpack.c.l.s4 1934713408
    %v814 = vunpack.c.0.s8 %v813
    %v815 = vlaneseq
    %v816 = vshrl.u32 %v815, 7
    %v817 = vsub.s32 %v814, %v816
    %v818 = vrot.slane %v810, %v817
    %v820 = vunpack.c.l.s4 1934713408
    %v821 = vunpack.c.0.s8 %v820
    %v822 = vlaneseq
    %v823 = vshrl.u32 %v822, 7
    %v824 = vsub.s32 %v821, %v823
    %v825 = vrot.slane %v811, %v824
    %v826 = vcombine.low %v801, %v809
    %v827 = vcombine.high %v801, %v809
    %v829 = vunpack.c.l.s4 1934713408
    %v830 = vunpack.c.0.s8 %v829
    %v831 = vlaneseq
    %v832 = vshrl.u32 %v831, 7
    %v833 = vsub.s32 %v830, %v832
    %v834 = vrot.slane %v826, %v833
    %v836 = vunpack.c.l.s4 1934713408
    %v837 = vunpack.c.0.s8 %v836
    %v838 = vlaneseq
    %v839 = vshrl.u32 %v838, 7
    %v840 = vsub.s32 %v837, %v839
    %v841 = vrot.slane %v827, %v840
    %v842 = vcombine.low %v818, %v834
    %v843 = vcombine.high %v818, %v834
    %v844 = vcombine.low %v825, %v841
    %v845 = vcombine.high %v825, %v841
    %846 = vrot.lane.b32.xlu0 %v252, 64
    %v847 = vpop.permute.xlu0 %846
    %848 = vrot.lane.b32.xlu0 %v255, 64
    %v849 = vpop.permute.xlu0 %848
    %850 = vrot.lane.b32.xlu0 %v261, 64
    %v851 = vpop.permute.xlu0 %850
    %852 = vrot.lane.b32.xlu0 %v263, 64
    %v853 = vpop.permute.xlu0 %852
    %854 = vrot.lane.b32.xlu0 %v267, 64
    %v855 = vpop.permute.xlu0 %854
    %856 = vrot.lane.b32.xlu0 %v269, 64
    %v857 = vpop.permute.xlu0 %856
    %858 = vrot.lane.b32.xlu0 %v273, 64
    %v859 = vpop.permute.xlu0 %858
    %860 = vrot.lane.b32.xlu0 %v275, 64
    %v861 = vpop.permute.xlu0 %860
    %v870 = vcombine.low %v847, %v855
    %v871 = vcombine.high %v847, %v855
    %v873 = vunpack.c.l.s4 1983009808
    %v874 = vunpack.c.0.s8 %v873
    %v875 = vlaneseq
    %v876 = vshrl.u32 %v875, 7
    %v877 = vsub.s32 %v874, %v876
    %v878 = vrot.slane %v870, %v877
    %v880 = vunpack.c.l.s4 1983009808
    %v881 = vunpack.c.0.s8 %v880
    %v882 = vlaneseq
    %v883 = vshrl.u32 %v882, 7
    %v884 = vsub.s32 %v881, %v883
    %v885 = vrot.slane %v871, %v884
    %v886 = vcombine.low %v851, %v859
    %v887 = vcombine.high %v851, %v859
    %v889 = vunpack.c.l.s4 1983009808
    %v890 = vunpack.c.0.s8 %v889
    %v891 = vlaneseq
    %v892 = vshrl.u32 %v891, 7
    %v893 = vsub.s32 %v890, %v892
    %v894 = vrot.slane %v886, %v893
    %v896 = vunpack.c.l.s4 1983009808
    %v897 = vunpack.c.0.s8 %v896
    %v898 = vlaneseq
    %v899 = vshrl.u32 %v898, 7
    %v900 = vsub.s32 %v897, %v899
    %v901 = vrot.slane %v887, %v900
    %v902 = vcombine.low %v878, %v894
    %v903 = vcombine.high %v878, %v894
    %v905 = vunpack.c.l.s4 1934713408
    %v906 = vunpack.c.0.s8 %v905
    %v907 = vlaneseq
    %v908 = vshrl.u32 %v907, 7
    %v909 = vsub.s32 %v906, %v908
    %v910 = vrot.slane %v902, %v909
    %v912 = vunpack.c.l.s4 1934713408
    %v913 = vunpack.c.0.s8 %v912
    %v914 = vlaneseq
    %v915 = vshrl.u32 %v914, 7
    %v916 = vsub.s32 %v913, %v915
    %v917 = vrot.slane %v903, %v916
    %v918 = vcombine.low %v885, %v901
    %v919 = vcombine.high %v885, %v901
    %v921 = vunpack.c.l.s4 1934713408
    %v922 = vunpack.c.0.s8 %v921
    %v923 = vlaneseq
    %v924 = vshrl.u32 %v923, 7
    %v925 = vsub.s32 %v922, %v924
    %v926 = vrot.slane %v918, %v925
    %v928 = vunpack.c.l.s4 1934713408
    %v929 = vunpack.c.0.s8 %v928
    %v930 = vlaneseq
    %v931 = vshrl.u32 %v930, 7
    %v932 = vsub.s32 %v929, %v931
    %v933 = vrot.slane %v919, %v932
    %v934 = vcombine.high %v910, 0.0
    %v935 = vcombine.high %v917, 0.0
    %v936 = vcombine.high %v926, 0.0
    %v937 = vcombine.high %v933, 0.0
    %v938 = vcombine.low %v849, %v857
    %v939 = vcombine.high %v849, %v857
    %v941 = vunpack.c.l.s4 1983009808
    %v942 = vunpack.c.0.s8 %v941
    %v943 = vlaneseq
    %v944 = vshrl.u32 %v943, 7
    %v945 = vsub.s32 %v942, %v944
    %v946 = vrot.slane %v938, %v945
    %v948 = vunpack.c.l.s4 1983009808
    %v949 = vunpack.c.0.s8 %v948
    %v950 = vlaneseq
    %v951 = vshrl.u32 %v950, 7
    %v952 = vsub.s32 %v949, %v951
    %v953 = vrot.slane %v939, %v952
    %v954 = vcombine.low %v853, %v861
    %v955 = vcombine.high %v853, %v861
    %v957 = vunpack.c.l.s4 1983009808
    %v958 = vunpack.c.0.s8 %v957
    %v959 = vlaneseq
    %v960 = vshrl.u32 %v959, 7
    %v961 = vsub.s32 %v958, %v960
    %v962 = vrot.slane %v954, %v961
    %v964 = vunpack.c.l.s4 1983009808
    %v965 = vunpack.c.0.s8 %v964
    %v966 = vlaneseq
    %v967 = vshrl.u32 %v966, 7
    %v968 = vsub.s32 %v965, %v967
    %v969 = vrot.slane %v955, %v968
    %v970 = vcombine.low %v946, %v962
    %v971 = vcombine.high %v946, %v962
    %v973 = vunpack.c.l.s4 1934713408
    %v974 = vunpack.c.0.s8 %v973
    %v975 = vlaneseq
    %v976 = vshrl.u32 %v975, 7
    %v977 = vsub.s32 %v974, %v976
    %v978 = vrot.slane %v970, %v977
    %v980 = vunpack.c.l.s4 1934713408
    %v981 = vunpack.c.0.s8 %v980
    %v982 = vlaneseq
    %v983 = vshrl.u32 %v982, 7
    %v984 = vsub.s32 %v981, %v983
    %v985 = vrot.slane %v971, %v984
    %v986 = vcombine.low %v953, %v969
    %v987 = vcombine.high %v953, %v969
    %v989 = vunpack.c.l.s4 1934713408
    %v990 = vunpack.c.0.s8 %v989
    %v991 = vlaneseq
    %v992 = vshrl.u32 %v991, 7
    %v993 = vsub.s32 %v990, %v992
    %v994 = vrot.slane %v986, %v993
    %v996 = vunpack.c.l.s4 1934713408
    %v997 = vunpack.c.0.s8 %v996
    %v998 = vlaneseq
    %v999 = vshrl.u32 %v998, 7
    %v1000 = vsub.s32 %v997, %v999
    %v1001 = vrot.slane %v987, %v1000
    %v1002 = vcombine.high %v978, 0.0
    %v1003 = vcombine.high %v985, 0.0
    %v1004 = vcombine.high %v994, 0.0
    %v1005 = vcombine.high %v1001, 0.0
    %v1006 = vcombine.low %v910, %v917
    %v1008 = vunpack.c.l.s4 1983009808
    %v1009 = vunpack.c.0.s8 %v1008
    %v1010 = vlaneseq
    %v1011 = vshrl.u32 %v1010, 7
    %v1012 = vsub.s32 %v1009, %v1011
    %v1013 = vrot.slane %v1006, %v1012
    %v1014 = vcombine.low %v934, %v935
    %v1016 = vunpack.c.l.s4 1983009808
    %v1017 = vunpack.c.0.s8 %v1016
    %v1018 = vlaneseq
    %v1019 = vshrl.u32 %v1018, 7
    %v1020 = vsub.s32 %v1017, %v1019
    %v1021 = vrot.slane %v1014, %v1020
    %v1022 = vcombine.low %v926, %v933
    %v1024 = vunpack.c.l.s4 1983009808
    %v1025 = vunpack.c.0.s8 %v1024
    %v1026 = vlaneseq
    %v1027 = vshrl.u32 %v1026, 7
    %v1028 = vsub.s32 %v1025, %v1027
    %v1029 = vrot.slane %v1022, %v1028
    %v1030 = vcombine.low %v936, %v937
    %v1032 = vunpack.c.l.s4 1983009808
    %v1033 = vunpack.c.0.s8 %v1032
    %v1034 = vlaneseq
    %v1035 = vshrl.u32 %v1034, 7
    %v1036 = vsub.s32 %v1033, %v1035
    %v1037 = vrot.slane %v1030, %v1036
    %v1038 = vcombine.low %v1013, %v1021
    %v1039 = vcombine.high %v1013, %v1021
    %v1041 = vunpack.c.l.s4 1934713408
    %v1042 = vunpack.c.0.s8 %v1041
    %v1043 = vlaneseq
    %v1044 = vshrl.u32 %v1043, 7
    %v1045 = vsub.s32 %v1042, %v1044
    %v1046 = vrot.slane %v1038, %v1045
    %v1048 = vunpack.c.l.s4 1934713408
    %v1049 = vunpack.c.0.s8 %v1048
    %v1050 = vlaneseq
    %v1051 = vshrl.u32 %v1050, 7
    %v1052 = vsub.s32 %v1049, %v1051
    %v1053 = vrot.slane %v1039, %v1052
    %v1054 = vcombine.low %v1029, %v1037
    %v1055 = vcombine.high %v1029, %v1037
    %v1057 = vunpack.c.l.s4 1934713408
    %v1058 = vunpack.c.0.s8 %v1057
    %v1059 = vlaneseq
    %v1060 = vshrl.u32 %v1059, 7
    %v1061 = vsub.s32 %v1058, %v1060
    %v1062 = vrot.slane %v1054, %v1061
    %v1064 = vunpack.c.l.s4 1934713408
    %v1065 = vunpack.c.0.s8 %v1064
    %v1066 = vlaneseq
    %v1067 = vshrl.u32 %v1066, 7
    %v1068 = vsub.s32 %v1065, %v1067
    %v1069 = vrot.slane %v1055, %v1068
    %v1070 = vcombine.low %v1046, %v1062
    %v1071 = vcombine.high %v1046, %v1062
    %v1072 = vcombine.low %v1053, %v1069
    %v1073 = vcombine.high %v1053, %v1069
    %v1074 = vcombine.low %v978, %v985
    %v1076 = vunpack.c.l.s4 1983009808
    %v1077 = vunpack.c.0.s8 %v1076
    %v1078 = vlaneseq
    %v1079 = vshrl.u32 %v1078, 7
    %v1080 = vsub.s32 %v1077, %v1079
    %v1081 = vrot.slane %v1074, %v1080
    %v1082 = vcombine.low %v1002, %v1003
    %v1084 = vunpack.c.l.s4 1983009808
    %v1085 = vunpack.c.0.s8 %v1084
    %v1086 = vlaneseq
    %v1087 = vshrl.u32 %v1086, 7
    %v1088 = vsub.s32 %v1085, %v1087
    %v1089 = vrot.slane %v1082, %v1088
    %v1090 = vcombine.low %v994, %v1001
    %v1092 = vunpack.c.l.s4 1983009808
    %v1093 = vunpack.c.0.s8 %v1092
    %v1094 = vlaneseq
    %v1095 = vshrl.u32 %v1094, 7
    %v1096 = vsub.s32 %v1093, %v1095
    %v1097 = vrot.slane %v1090, %v1096
    %v1098 = vcombine.low %v1004, %v1005
    %v1100 = vunpack.c.l.s4 1983009808
    %v1101 = vunpack.c.0.s8 %v1100
    %v1102 = vlaneseq
    %v1103 = vshrl.u32 %v1102, 7
    %v1104 = vsub.s32 %v1101, %v1103
    %v1105 = vrot.slane %v1098, %v1104
    %v1106 = vcombine.low %v1081, %v1089
    %v1107 = vcombine.high %v1081, %v1089
    %v1109 = vunpack.c.l.s4 1934713408
    %v1110 = vunpack.c.0.s8 %v1109
    %v1111 = vlaneseq
    %v1112 = vshrl.u32 %v1111, 7
    %v1113 = vsub.s32 %v1110, %v1112
    %v1114 = vrot.slane %v1106, %v1113
    %v1116 = vunpack.c.l.s4 1934713408
    %v1117 = vunpack.c.0.s8 %v1116
    %v1118 = vlaneseq
    %v1119 = vshrl.u32 %v1118, 7
    %v1120 = vsub.s32 %v1117, %v1119
    %v1121 = vrot.slane %v1107, %v1120
    %v1122 = vcombine.low %v1097, %v1105
    %v1123 = vcombine.high %v1097, %v1105
    %v1125 = vunpack.c.l.s4 1934713408
    %v1126 = vunpack.c.0.s8 %v1125
    %v1127 = vlaneseq
    %v1128 = vshrl.u32 %v1127, 7
    %v1129 = vsub.s32 %v1126, %v1128
    %v1130 = vrot.slane %v1122, %v1129
    %v1132 = vunpack.c.l.s4 1934713408
    %v1133 = vunpack.c.0.s8 %v1132
    %v1134 = vlaneseq
    %v1135 = vshrl.u32 %v1134, 7
    %v1136 = vsub.s32 %v1133, %v1135
    %v1137 = vrot.slane %v1123, %v1136
    %v1138 = vcombine.low %v1114, %v1130
    %v1139 = vcombine.high %v1114, %v1130
    %v1140 = vcombine.low %v1121, %v1137
    %v1141 = vcombine.high %v1121, %v1137
    %vm1142 = vcmask 64512
    %v1144 = vsel %vm1142, %v478, 0
    %v1147 = vsel %vm1142, %v774, 0
    %1149 = vmatprep.subr.mxu0 0.0
    %1150 = vmatpush1.xpose.msra.mxu0 %v1147
    %1151 = vmatprep.subr.mxu0 0.0
    %1152 = vmatpush1.xpose.msra.mxu0 0.0
    %1153 = vmatprep.subr.mxu0 0.0
    %1154 = vmatpush1.xpose.msra.mxu0 0.0
    %1155 = vmatprep.subr.mxu0 0.0
    %1156 = vmatpush1.xpose.msra.mxu0 0.0
    %1157 = vmatprep.subr.mxu0 0.0
    %1158 = vmatpush1.xpose.msra.mxu0 0.0
    %1159 = vmatprep.subr.mxu0 0.0
    %1160 = vmatpush1.xpose.msra.mxu0 0.0
    %1161 = vmatprep.subr.mxu0 0.0
    %1162 = vmatpush1.xpose.msra.mxu0 0.0
    %1163 = vmatprep.subr.mxu0 0.0
    %1164 = vmatpush1.xpose.msra.mxu0 0.0
    %1165 = vmatprep.subr.mxu0 0.0
    %1166 = vmatpush1.xpose.msra.mxu0 0.0
    %1167 = vmatprep.subr.mxu0 0.0
    %1168 = vmatpush1.xpose.msra.mxu0 0.0
    %1169 = vmatprep.subr.mxu0 0.0
    %1170 = vmatpush1.xpose.msra.mxu0 0.0
    %1171 = vmatprep.subr.mxu0 0.0
    %1172 = vmatpush1.xpose.msra.mxu0 0.0
    %1173 = vmatprep.subr.mxu0 0.0
    %1174 = vmatpush1.xpose.msra.mxu0 0.0
    %1175 = vmatprep.subr.mxu0 0.0
    %1176 = vmatpush1.xpose.msra.mxu0 0.0
    %1177 = vmatprep.subr.mxu0 0.0
    %1178 = vmatpush1.xpose.msra.mxu0 0.0
    %1179 = vmatprep.subr.mxu0 0.0
    %1180 = vmatpush1.xpose.msra.mxu0 0.0
    %1181 = vmatprep.subr.mxu0 0.0
    %1182 = vmatpush1.xpose.msra.mxu0 0.0
    %1183 = vmatprep.subr.mxu0 0.0
    %1184 = vmatpush1.xpose.msra.mxu0 0.0
    %1185 = vmatprep.subr.mxu0 0.0
    %1186 = vmatpush1.xpose.msra.mxu0 0.0
    %1187 = vmatprep.subr.mxu0 0.0
    %1188 = vmatpush1.xpose.msra.mxu0 0.0
    %1189 = vmatprep.subr.mxu0 0.0
    %1190 = vmatpush1.xpose.msra.mxu0 0.0
    %1191 = vmatprep.subr.mxu0 0.0
    %1192 = vmatpush1.xpose.msra.mxu0 0.0
    %1193 = vmatprep.subr.mxu0 0.0
    %1194 = vmatpush1.xpose.msra.mxu0 0.0
    %1195 = vmatprep.subr.mxu0 0.0
    %1196 = vmatpush1.xpose.msra.mxu0 0.0
    %1197 = vmatprep.subr.mxu0 0.0
    %1198 = vmatpush1.xpose.msra.mxu0 0.0
    %1199 = vmatprep.subr.mxu0 0.0
    %1200 = vmatpush1.xpose.msra.mxu0 0.0
    %1201 = vmatprep.subr.mxu0 0.0
    %1202 = vmatpush1.xpose.msra.mxu0 0.0
    %1203 = vmatprep.subr.mxu0 0.0
    %1204 = vmatpush1.xpose.msra.mxu0 0.0
    %1205 = vmatprep.subr.mxu0 0.0
    %1206 = vmatpush1.xpose.msra.mxu0 0.0
    %1207 = vmatprep.subr.mxu0 0.0
    %1208 = vmatpush1.xpose.msra.mxu0 0.0
    %1209 = vmatprep.subr.mxu0 0.0
    %1210 = vmatpush1.xpose.msra.mxu0 0.0
    %1211 = vmatprep.subr.mxu0 0.0
    %1212 = vmatpush1.xpose.msra.mxu0 0.0
    %1213 = vmatprep.mubr.f32.mxu0 0.0
    %1214 = vmatmul.mubr.f32.gmra.mrb[0].mxu0 %v1144
    %v1215 = vpop.f32.mrb[0].mxu0
    %v1216 = vadd.f32 0.0, %v1215
    %v1217 = vpop.f32.mrb[0].mxu0
    %1218 = vdwg.mxu0
    %v1220 = vsel %vm1142, %v479, 0
    %v1223 = vsel %vm1142, %v775, 0
    %1225 = vmatprep.subr.mxu0 0.0
    %1226 = vmatpush1.xpose.msra.mxu0 %v1223
    %1227 = vmatprep.subr.mxu0 0.0
    %1228 = vmatpush1.xpose.msra.mxu0 0.0
    %1229 = vmatprep.subr.mxu0 0.0
    %1230 = vmatpush1.xpose.msra.mxu0 0.0
    %1231 = vmatprep.subr.mxu0 0.0
    %1232 = vmatpush1.xpose.msra.mxu0 0.0
    %1233 = vmatprep.subr.mxu0 0.0
    %1234 = vmatpush1.xpose.msra.mxu0 0.0
    %1235 = vmatprep.subr.mxu0 0.0
    %1236 = vmatpush1.xpose.msra.mxu0 0.0
    %1237 = vmatprep.subr.mxu0 0.0
    %1238 = vmatpush1.xpose.msra.mxu0 0.0
    %1239 = vmatprep.subr.mxu0 0.0
    %1240 = vmatpush1.xpose.msra.mxu0 0.0
    %1241 = vmatprep.subr.mxu0 0.0
    %1242 = vmatpush1.xpose.msra.mxu0 0.0
    %1243 = vmatprep.subr.mxu0 0.0
    %1244 = vmatpush1.xpose.msra.mxu0 0.0
    %1245 = vmatprep.subr.mxu0 0.0
    %1246 = vmatpush1.xpose.msra.mxu0 0.0
    %1247 = vmatprep.subr.mxu0 0.0
    %1248 = vmatpush1.xpose.msra.mxu0 0.0
    %1249 = vmatprep.subr.mxu0 0.0
    %1250 = vmatpush1.xpose.msra.mxu0 0.0
    %1251 = vmatprep.subr.mxu0 0.0
    %1252 = vmatpush1.xpose.msra.mxu0 0.0
    %1253 = vmatprep.subr.mxu0 0.0
    %1254 = vmatpush1.xpose.msra.mxu0 0.0
    %1255 = vmatprep.subr.mxu0 0.0
    %1256 = vmatpush1.xpose.msra.mxu0 0.0
    %1257 = vmatprep.subr.mxu0 0.0
    %1258 = vmatpush1.xpose.msra.mxu0 0.0
    %1259 = vmatprep.subr.mxu0 0.0
    %1260 = vmatpush1.xpose.msra.mxu0 0.0
    %1261 = vmatprep.subr.mxu0 0.0
    %1262 = vmatpush1.xpose.msra.mxu0 0.0
    %1263 = vmatprep.subr.mxu0 0.0
    %1264 = vmatpush1.xpose.msra.mxu0 0.0
    %1265 = vmatprep.subr.mxu0 0.0
    %1266 = vmatpush1.xpose.msra.mxu0 0.0
    %1267 = vmatprep.subr.mxu0 0.0
    %1268 = vmatpush1.xpose.msra.mxu0 0.0
    %1269 = vmatprep.subr.mxu0 0.0
    %1270 = vmatpush1.xpose.msra.mxu0 0.0
    %1271 = vmatprep.subr.mxu0 0.0
    %1272 = vmatpush1.xpose.msra.mxu0 0.0
    %1273 = vmatprep.subr.mxu0 0.0
    %1274 = vmatpush1.xpose.msra.mxu0 0.0
    %1275 = vmatprep.subr.mxu0 0.0
    %1276 = vmatpush1.xpose.msra.mxu0 0.0
    %1277 = vmatprep.subr.mxu0 0.0
    %1278 = vmatpush1.xpose.msra.mxu0 0.0
    %1279 = vmatprep.subr.mxu0 0.0
    %1280 = vmatpush1.xpose.msra.mxu0 0.0
    %1281 = vmatprep.subr.mxu0 0.0
    %1282 = vmatpush1.xpose.msra.mxu0 0.0
    %1283 = vmatprep.subr.mxu0 0.0
    %1284 = vmatpush1.xpose.msra.mxu0 0.0
    %1285 = vmatprep.subr.mxu0 0.0
    %1286 = vmatpush1.xpose.msra.mxu0 0.0
    %1287 = vmatprep.subr.mxu0 0.0
    %1288 = vmatpush1.xpose.msra.mxu0 0.0
    %1289 = vmatprep.mubr.f32.mxu0 0.0
    %1290 = vmatmul.mubr.f32.gmra.mrb[0].mxu0 %v1220
    %v1291 = vpop.f32.mrb[0].mxu0
    %v1292 = vadd.f32 0.0, %v1291
    %v1293 = vpop.f32.mrb[0].mxu0
    %1294 = vdwg.mxu0
    %v1296 = vsel %vm1142, %v480, 0
    %v1299 = vsel %vm1142, %v776, 0
    %1301 = vmatprep.subr.mxu0 0.0
    %1302 = vmatpush1.xpose.msra.mxu0 %v1299
    %1303 = vmatprep.subr.mxu0 0.0
    %1304 = vmatpush1.xpose.msra.mxu0 0.0
    %1305 = vmatprep.subr.mxu0 0.0
    %1306 = vmatpush1.xpose.msra.mxu0 0.0
    %1307 = vmatprep.subr.mxu0 0.0
    %1308 = vmatpush1.xpose.msra.mxu0 0.0
    %1309 = vmatprep.subr.mxu0 0.0
    %1310 = vmatpush1.xpose.msra.mxu0 0.0
    %1311 = vmatprep.subr.mxu0 0.0
    %1312 = vmatpush1.xpose.msra.mxu0 0.0
    %1313 = vmatprep.subr.mxu0 0.0
    %1314 = vmatpush1.xpose.msra.mxu0 0.0
    %1315 = vmatprep.subr.mxu0 0.0
    %1316 = vmatpush1.xpose.msra.mxu0 0.0
    %1317 = vmatprep.subr.mxu0 0.0
    %1318 = vmatpush1.xpose.msra.mxu0 0.0
    %1319 = vmatprep.subr.mxu0 0.0
    %1320 = vmatpush1.xpose.msra.mxu0 0.0
    %1321 = vmatprep.subr.mxu0 0.0
    %1322 = vmatpush1.xpose.msra.mxu0 0.0
    %1323 = vmatprep.subr.mxu0 0.0
    %1324 = vmatpush1.xpose.msra.mxu0 0.0
    %1325 = vmatprep.subr.mxu0 0.0
    %1326 = vmatpush1.xpose.msra.mxu0 0.0
    %1327 = vmatprep.subr.mxu0 0.0
    %1328 = vmatpush1.xpose.msra.mxu0 0.0
    %1329 = vmatprep.subr.mxu0 0.0
    %1330 = vmatpush1.xpose.msra.mxu0 0.0
    %1331 = vmatprep.subr.mxu0 0.0
    %1332 = vmatpush1.xpose.msra.mxu0 0.0
    %1333 = vmatprep.subr.mxu0 0.0
    %1334 = vmatpush1.xpose.msra.mxu0 0.0
    %1335 = vmatprep.subr.mxu0 0.0
    %1336 = vmatpush1.xpose.msra.mxu0 0.0
    %1337 = vmatprep.subr.mxu0 0.0
    %1338 = vmatpush1.xpose.msra.mxu0 0.0
    %1339 = vmatprep.subr.mxu0 0.0
    %1340 = vmatpush1.xpose.msra.mxu0 0.0
    %1341 = vmatprep.subr.mxu0 0.0
    %1342 = vmatpush1.xpose.msra.mxu0 0.0
    %1343 = vmatprep.subr.mxu0 0.0
    %1344 = vmatpush1.xpose.msra.mxu0 0.0
    %1345 = vmatprep.subr.mxu0 0.0
    %1346 = vmatpush1.xpose.msra.mxu0 0.0
    %1347 = vmatprep.subr.mxu0 0.0
    %1348 = vmatpush1.xpose.msra.mxu0 0.0
    %1349 = vmatprep.subr.mxu0 0.0
    %1350 = vmatpush1.xpose.msra.mxu0 0.0
    %1351 = vmatprep.subr.mxu0 0.0
    %1352 = vmatpush1.xpose.msra.mxu0 0.0
    %1353 = vmatprep.subr.mxu0 0.0
    %1354 = vmatpush1.xpose.msra.mxu0 0.0
    %1355 = vmatprep.subr.mxu0 0.0
    %1356 = vmatpush1.xpose.msra.mxu0 0.0
    %1357 = vmatprep.subr.mxu0 0.0
    %1358 = vmatpush1.xpose.msra.mxu0 0.0
    %1359 = vmatprep.subr.mxu0 0.0
    %1360 = vmatpush1.xpose.msra.mxu0 0.0
    %1361 = vmatprep.subr.mxu0 0.0
    %1362 = vmatpush1.xpose.msra.mxu0 0.0
    %1363 = vmatprep.subr.mxu0 0.0
    %1364 = vmatpush1.xpose.msra.mxu0 0.0
    %1365 = vmatprep.mubr.f32.mxu0 0.0
    %1366 = vmatmul.mubr.f32.gmra.mrb[0].mxu0 %v1296
    %v1367 = vpop.f32.mrb[0].mxu0
    %v1368 = vadd.f32 0.0, %v1367
    %v1369 = vpop.f32.mrb[0].mxu0
    %1370 = vdwg.mxu0
    %v1372 = vsel %vm1142, %v481, 0
    %v1375 = vsel %vm1142, %v777, 0
    %1377 = vmatprep.subr.mxu0 0.0
    %1378 = vmatpush1.xpose.msra.mxu0 %v1375
    %1379 = vmatprep.subr.mxu0 0.0
    %1380 = vmatpush1.xpose.msra.mxu0 0.0
    %1381 = vmatprep.subr.mxu0 0.0
    %1382 = vmatpush1.xpose.msra.mxu0 0.0
    %1383 = vmatprep.subr.mxu0 0.0
    %1384 = vmatpush1.xpose.msra.mxu0 0.0
    %1385 = vmatprep.subr.mxu0 0.0
    %1386 = vmatpush1.xpose.msra.mxu0 0.0
    %1387 = vmatprep.subr.mxu0 0.0
    %1388 = vmatpush1.xpose.msra.mxu0 0.0
    %1389 = vmatprep.subr.mxu0 0.0
    %1390 = vmatpush1.xpose.msra.mxu0 0.0
    %1391 = vmatprep.subr.mxu0 0.0
    %1392 = vmatpush1.xpose.msra.mxu0 0.0
    %1393 = vmatprep.subr.mxu0 0.0
    %1394 = vmatpush1.xpose.msra.mxu0 0.0
    %1395 = vmatprep.subr.mxu0 0.0
    %1396 = vmatpush1.xpose.msra.mxu0 0.0
    %1397 = vmatprep.subr.mxu0 0.0
    %1398 = vmatpush1.xpose.msra.mxu0 0.0
    %1399 = vmatprep.subr.mxu0 0.0
    %1400 = vmatpush1.xpose.msra.mxu0 0.0
    %1401 = vmatprep.subr.mxu0 0.0
    %1402 = vmatpush1.xpose.msra.mxu0 0.0
    %1403 = vmatprep.subr.mxu0 0.0
    %1404 = vmatpush1.xpose.msra.mxu0 0.0
    %1405 = vmatprep.subr.mxu0 0.0
    %1406 = vmatpush1.xpose.msra.mxu0 0.0
    %1407 = vmatprep.subr.mxu0 0.0
    %1408 = vmatpush1.xpose.msra.mxu0 0.0
    %1409 = vmatprep.subr.mxu0 0.0
    %1410 = vmatpush1.xpose.msra.mxu0 0.0
    %1411 = vmatprep.subr.mxu0 0.0
    %1412 = vmatpush1.xpose.msra.mxu0 0.0
    %1413 = vmatprep.subr.mxu0 0.0
    %1414 = vmatpush1.xpose.msra.mxu0 0.0
    %1415 = vmatprep.subr.mxu0 0.0
    %1416 = vmatpush1.xpose.msra.mxu0 0.0
    %1417 = vmatprep.subr.mxu0 0.0
    %1418 = vmatpush1.xpose.msra.mxu0 0.0
    %1419 = vmatprep.subr.mxu0 0.0
    %1420 = vmatpush1.xpose.msra.mxu0 0.0
    %1421 = vmatprep.subr.mxu0 0.0
    %1422 = vmatpush1.xpose.msra.mxu0 0.0
    %1423 = vmatprep.subr.mxu0 0.0
    %1424 = vmatpush1.xpose.msra.mxu0 0.0
    %1425 = vmatprep.subr.mxu0 0.0
    %1426 = vmatpush1.xpose.msra.mxu0 0.0
    %1427 = vmatprep.subr.mxu0 0.0
    %1428 = vmatpush1.xpose.msra.mxu0 0.0
    %1429 = vmatprep.subr.mxu0 0.0
    %1430 = vmatpush1.xpose.msra.mxu0 0.0
    %1431 = vmatprep.subr.mxu0 0.0
    %1432 = vmatpush1.xpose.msra.mxu0 0.0
    %1433 = vmatprep.subr.mxu0 0.0
    %1434 = vmatpush1.xpose.msra.mxu0 0.0
    %1435 = vmatprep.subr.mxu0 0.0
    %1436 = vmatpush1.xpose.msra.mxu0 0.0
    %1437 = vmatprep.subr.mxu0 0.0
    %1438 = vmatpush1.xpose.msra.mxu0 0.0
    %1439 = vmatprep.subr.mxu0 0.0
    %1440 = vmatpush1.xpose.msra.mxu0 0.0
    %1441 = vmatprep.mubr.f32.mxu0 0.0
    %1442 = vmatmul.mubr.f32.gmra.mrb[0].mxu0 %v1372
    %v1443 = vpop.f32.mrb[0].mxu0
    %v1444 = vadd.f32 0.0, %v1443
    %v1445 = vpop.f32.mrb[0].mxu0
    %1446 = vdwg.mxu0
    %v1448 = vsel %vm1142, %v546, 0
    %v1451 = vsel %vm1142, %v842, 0
    %1453 = vmatprep.subr.mxu0 0.0
    %1454 = vmatpush1.xpose.msra.mxu0 %v1451
    %1455 = vmatprep.subr.mxu0 0.0
    %1456 = vmatpush1.xpose.msra.mxu0 0.0
    %1457 = vmatprep.subr.mxu0 0.0
    %1458 = vmatpush1.xpose.msra.mxu0 0.0
    %1459 = vmatprep.subr.mxu0 0.0
    %1460 = vmatpush1.xpose.msra.mxu0 0.0
    %1461 = vmatprep.subr.mxu0 0.0
    %1462 = vmatpush1.xpose.msra.mxu0 0.0
    %1463 = vmatprep.subr.mxu0 0.0
    %1464 = vmatpush1.xpose.msra.mxu0 0.0
    %1465 = vmatprep.subr.mxu0 0.0
    %1466 = vmatpush1.xpose.msra.mxu0 0.0
    %1467 = vmatprep.subr.mxu0 0.0
    %1468 = vmatpush1.xpose.msra.mxu0 0.0
    %1469 = vmatprep.subr.mxu0 0.0
    %1470 = vmatpush1.xpose.msra.mxu0 0.0
    %1471 = vmatprep.subr.mxu0 0.0
    %1472 = vmatpush1.xpose.msra.mxu0 0.0
    %1473 = vmatprep.subr.mxu0 0.0
    %1474 = vmatpush1.xpose.msra.mxu0 0.0
    %1475 = vmatprep.subr.mxu0 0.0
    %1476 = vmatpush1.xpose.msra.mxu0 0.0
    %1477 = vmatprep.subr.mxu0 0.0
    %1478 = vmatpush1.xpose.msra.mxu0 0.0
    %1479 = vmatprep.subr.mxu0 0.0
    %1480 = vmatpush1.xpose.msra.mxu0 0.0
    %1481 = vmatprep.subr.mxu0 0.0
    %1482 = vmatpush1.xpose.msra.mxu0 0.0
    %1483 = vmatprep.subr.mxu0 0.0
    %1484 = vmatpush1.xpose.msra.mxu0 0.0
    %1485 = vmatprep.subr.mxu0 0.0
    %1486 = vmatpush1.xpose.msra.mxu0 0.0
    %1487 = vmatprep.subr.mxu0 0.0
    %1488 = vmatpush1.xpose.msra.mxu0 0.0
    %1489 = vmatprep.subr.mxu0 0.0
    %1490 = vmatpush1.xpose.msra.mxu0 0.0
    %1491 = vmatprep.subr.mxu0 0.0
    %1492 = vmatpush1.xpose.msra.mxu0 0.0
    %1493 = vmatprep.subr.mxu0 0.0
    %1494 = vmatpush1.xpose.msra.mxu0 0.0
    %1495 = vmatprep.subr.mxu0 0.0
    %1496 = vmatpush1.xpose.msra.mxu0 0.0
    %1497 = vmatprep.subr.mxu0 0.0
    %1498 = vmatpush1.xpose.msra.mxu0 0.0
    %1499 = vmatprep.subr.mxu0 0.0
    %1500 = vmatpush1.xpose.msra.mxu0 0.0
    %1501 = vmatprep.subr.mxu0 0.0
    %1502 = vmatpush1.xpose.msra.mxu0 0.0
    %1503 = vmatprep.subr.mxu0 0.0
    %1504 = vmatpush1.xpose.msra.mxu0 0.0
    %1505 = vmatprep.subr.mxu0 0.0
    %1506 = vmatpush1.xpose.msra.mxu0 0.0
    %1507 = vmatprep.subr.mxu0 0.0
    %1508 = vmatpush1.xpose.msra.mxu0 0.0
    %1509 = vmatprep.subr.mxu0 0.0
    %1510 = vmatpush1.xpose.msra.mxu0 0.0
    %1511 = vmatprep.subr.mxu0 0.0
    %1512 = vmatpush1.xpose.msra.mxu0 0.0
    %1513 = vmatprep.subr.mxu0 0.0
    %1514 = vmatpush1.xpose.msra.mxu0 0.0
    %1515 = vmatprep.subr.mxu0 0.0
    %1516 = vmatpush1.xpose.msra.mxu0 0.0
    %1517 = vmatprep.mubr.f32.mxu0 0.0
    %1518 = vmatmul.mubr.f32.gmra.mrb[0].mxu0 %v1448
    %v1519 = vpop.f32.mrb[0].mxu0
    %v1520 = vadd.f32 0.0, %v1519
    %v1521 = vpop.f32.mrb[0].mxu0
    %1522 = vdwg.mxu0
    %v1524 = vsel %vm1142, %v547, 0
    %v1527 = vsel %vm1142, %v843, 0
    %1529 = vmatprep.subr.mxu0 0.0
    %1530 = vmatpush1.xpose.msra.mxu0 %v1527
    %1531 = vmatprep.subr.mxu0 0.0
    %1532 = vmatpush1.xpose.msra.mxu0 0.0
    %1533 = vmatprep.subr.mxu0 0.0
    %1534 = vmatpush1.xpose.msra.mxu0 0.0
    %1535 = vmatprep.subr.mxu0 0.0
    %1536 = vmatpush1.xpose.msra.mxu0 0.0
    %1537 = vmatprep.subr.mxu0 0.0
    %1538 = vmatpush1.xpose.msra.mxu0 0.0
    %1539 = vmatprep.subr.mxu0 0.0
    %1540 = vmatpush1.xpose.msra.mxu0 0.0
    %1541 = vmatprep.subr.mxu0 0.0
    %1542 = vmatpush1.xpose.msra.mxu0 0.0
    %1543 = vmatprep.subr.mxu0 0.0
    %1544 = vmatpush1.xpose.msra.mxu0 0.0
    %1545 = vmatprep.subr.mxu0 0.0
    %1546 = vmatpush1.xpose.msra.mxu0 0.0
    %1547 = vmatprep.subr.mxu0 0.0
    %1548 = vmatpush1.xpose.msra.mxu0 0.0
    %1549 = vmatprep.subr.mxu0 0.0
    %1550 = vmatpush1.xpose.msra.mxu0 0.0
    %1551 = vmatprep.subr.mxu0 0.0
    %1552 = vmatpush1.xpose.msra.mxu0 0.0
    %1553 = vmatprep.subr.mxu0 0.0
    %1554 = vmatpush1.xpose.msra.mxu0 0.0
    %1555 = vmatprep.subr.mxu0 0.0
    %1556 = vmatpush1.xpose.msra.mxu0 0.0
    %1557 = vmatprep.subr.mxu0 0.0
    %1558 = vmatpush1.xpose.msra.mxu0 0.0
    %1559 = vmatprep.subr.mxu0 0.0
    %1560 = vmatpush1.xpose.msra.mxu0 0.0
    %1561 = vmatprep.subr.mxu0 0.0
    %1562 = vmatpush1.xpose.msra.mxu0 0.0
    %1563 = vmatprep.subr.mxu0 0.0
    %1564 = vmatpush1.xpose.msra.mxu0 0.0
    %1565 = vmatprep.subr.mxu0 0.0
    %1566 = vmatpush1.xpose.msra.mxu0 0.0
    %1567 = vmatprep.subr.mxu0 0.0
    %1568 = vmatpush1.xpose.msra.mxu0 0.0
    %1569 = vmatprep.subr.mxu0 0.0
    %1570 = vmatpush1.xpose.msra.mxu0 0.0
    %1571 = vmatprep.subr.mxu0 0.0
    %1572 = vmatpush1.xpose.msra.mxu0 0.0
    %1573 = vmatprep.subr.mxu0 0.0
    %1574 = vmatpush1.xpose.msra.mxu0 0.0
    %1575 = vmatprep.subr.mxu0 0.0
    %1576 = vmatpush1.xpose.msra.mxu0 0.0
    %1577 = vmatprep.subr.mxu0 0.0
    %1578 = vmatpush1.xpose.msra.mxu0 0.0
    %1579 = vmatprep.subr.mxu0 0.0
    %1580 = vmatpush1.xpose.msra.mxu0 0.0
    %1581 = vmatprep.subr.mxu0 0.0
    %1582 = vmatpush1.xpose.msra.mxu0 0.0
    %1583 = vmatprep.subr.mxu0 0.0
    %1584 = vmatpush1.xpose.msra.mxu0 0.0
    %1585 = vmatprep.subr.mxu0 0.0
    %1586 = vmatpush1.xpose.msra.mxu0 0.0
    %1587 = vmatprep.subr.mxu0 0.0
    %1588 = vmatpush1.xpose.msra.mxu0 0.0
    %1589 = vmatprep.subr.mxu0 0.0
    %1590 = vmatpush1.xpose.msra.mxu0 0.0
    %1591 = vmatprep.subr.mxu0 0.0
    %1592 = vmatpush1.xpose.msra.mxu0 0.0
    %1593 = vmatprep.mubr.f32.mxu0 0.0
    %1594 = vmatmul.mubr.f32.gmra.mrb[0].mxu0 %v1524
    %v1595 = vpop.f32.mrb[0].mxu0
    %v1596 = vadd.f32 0.0, %v1595
    %v1597 = vpop.f32.mrb[0].mxu0
    %1598 = vdwg.mxu0
    %v1600 = vsel %vm1142, %v548, 0
    %v1603 = vsel %vm1142, %v844, 0
    %1605 = vmatprep.subr.mxu0 0.0
    %1606 = vmatpush1.xpose.msra.mxu0 %v1603
    %1607 = vmatprep.subr.mxu0 0.0
    %1608 = vmatpush1.xpose.msra.mxu0 0.0
    %1609 = vmatprep.subr.mxu0 0.0
    %1610 = vmatpush1.xpose.msra.mxu0 0.0
    %1611 = vmatprep.subr.mxu0 0.0
    %1612 = vmatpush1.xpose.msra.mxu0 0.0
    %1613 = vmatprep.subr.mxu0 0.0
    %1614 = vmatpush1.xpose.msra.mxu0 0.0
    %1615 = vmatprep.subr.mxu0 0.0
    %1616 = vmatpush1.xpose.msra.mxu0 0.0
    %1617 = vmatprep.subr.mxu0 0.0
    %1618 = vmatpush1.xpose.msra.mxu0 0.0
    %1619 = vmatprep.subr.mxu0 0.0
    %1620 = vmatpush1.xpose.msra.mxu0 0.0
    %1621 = vmatprep.subr.mxu0 0.0
    %1622 = vmatpush1.xpose.msra.mxu0 0.0
    %1623 = vmatprep.subr.mxu0 0.0
    %1624 = vmatpush1.xpose.msra.mxu0 0.0
    %1625 = vmatprep.subr.mxu0 0.0
    %1626 = vmatpush1.xpose.msra.mxu0 0.0
    %1627 = vmatprep.subr.mxu0 0.0
    %1628 = vmatpush1.xpose.msra.mxu0 0.0
    %1629 = vmatprep.subr.mxu0 0.0
    %1630 = vmatpush1.xpose.msra.mxu0 0.0
    %1631 = vmatprep.subr.mxu0 0.0
    %1632 = vmatpush1.xpose.msra.mxu0 0.0
    %1633 = vmatprep.subr.mxu0 0.0
    %1634 = vmatpush1.xpose.msra.mxu0 0.0
    %1635 = vmatprep.subr.mxu0 0.0
    %1636 = vmatpush1.xpose.msra.mxu0 0.0
    %1637 = vmatprep.subr.mxu0 0.0
    %1638 = vmatpush1.xpose.msra.mxu0 0.0
    %1639 = vmatprep.subr.mxu0 0.0
    %1640 = vmatpush1.xpose.msra.mxu0 0.0
    %1641 = vmatprep.subr.mxu0 0.0
    %1642 = vmatpush1.xpose.msra.mxu0 0.0
    %1643 = vmatprep.subr.mxu0 0.0
    %1644 = vmatpush1.xpose.msra.mxu0 0.0
    %1645 = vmatprep.subr.mxu0 0.0
    %1646 = vmatpush1.xpose.msra.mxu0 0.0
    %1647 = vmatprep.subr.mxu0 0.0
    %1648 = vmatpush1.xpose.msra.mxu0 0.0
    %1649 = vmatprep.subr.mxu0 0.0
    %1650 = vmatpush1.xpose.msra.mxu0 0.0
    %1651 = vmatprep.subr.mxu0 0.0
    %1652 = vmatpush1.xpose.msra.mxu0 0.0
    %1653 = vmatprep.subr.mxu0 0.0
    %1654 = vmatpush1.xpose.msra.mxu0 0.0
    %1655 = vmatprep.subr.mxu0 0.0
    %1656 = vmatpush1.xpose.msra.mxu0 0.0
    %1657 = vmatprep.subr.mxu0 0.0
    %1658 = vmatpush1.xpose.msra.mxu0 0.0
    %1659 = vmatprep.subr.mxu0 0.0
    %1660 = vmatpush1.xpose.msra.mxu0 0.0
    %1661 = vmatprep.subr.mxu0 0.0
    %1662 = vmatpush1.xpose.msra.mxu0 0.0
    %1663 = vmatprep.subr.mxu0 0.0
    %1664 = vmatpush1.xpose.msra.mxu0 0.0
    %1665 = vmatprep.subr.mxu0 0.0
    %1666 = vmatpush1.xpose.msra.mxu0 0.0
    %1667 = vmatprep.subr.mxu0 0.0
    %1668 = vmatpush1.xpose.msra.mxu0 0.0
    %1669 = vmatprep.mubr.f32.mxu0 0.0
    %1670 = vmatmul.mubr.f32.gmra.mrb[0].mxu0 %v1600
    %v1671 = vpop.f32.mrb[0].mxu0
    %v1672 = vadd.f32 0.0, %v1671
    %v1673 = vpop.f32.mrb[0].mxu0
    %1674 = vdwg.mxu0
    %v1676 = vsel %vm1142, %v549, 0
    %v1679 = vsel %vm1142, %v845, 0
    %1681 = vmatprep.subr.mxu0 0.0
    %1682 = vmatpush1.xpose.msra.mxu0 %v1679
    %1683 = vmatprep.subr.mxu0 0.0
    %1684 = vmatpush1.xpose.msra.mxu0 0.0
    %1685 = vmatprep.subr.mxu0 0.0
    %1686 = vmatpush1.xpose.msra.mxu0 0.0
    %1687 = vmatprep.subr.mxu0 0.0
    %1688 = vmatpush1.xpose.msra.mxu0 0.0
    %1689 = vmatprep.subr.mxu0 0.0
    %1690 = vmatpush1.xpose.msra.mxu0 0.0
    %1691 = vmatprep.subr.mxu0 0.0
    %1692 = vmatpush1.xpose.msra.mxu0 0.0
    %1693 = vmatprep.subr.mxu0 0.0
    %1694 = vmatpush1.xpose.msra.mxu0 0.0
    %1695 = vmatprep.subr.mxu0 0.0
    %1696 = vmatpush1.xpose.msra.mxu0 0.0
    %1697 = vmatprep.subr.mxu0 0.0
    %1698 = vmatpush1.xpose.msra.mxu0 0.0
    %1699 = vmatprep.subr.mxu0 0.0
    %1700 = vmatpush1.xpose.msra.mxu0 0.0
    %1701 = vmatprep.subr.mxu0 0.0
    %1702 = vmatpush1.xpose.msra.mxu0 0.0
    %1703 = vmatprep.subr.mxu0 0.0
    %1704 = vmatpush1.xpose.msra.mxu0 0.0
    %1705 = vmatprep.subr.mxu0 0.0
    %1706 = vmatpush1.xpose.msra.mxu0 0.0
    %1707 = vmatprep.subr.mxu0 0.0
    %1708 = vmatpush1.xpose.msra.mxu0 0.0
    %1709 = vmatprep.subr.mxu0 0.0
    %1710 = vmatpush1.xpose.msra.mxu0 0.0
    %1711 = vmatprep.subr.mxu0 0.0
    %1712 = vmatpush1.xpose.msra.mxu0 0.0
    %1713 = vmatprep.subr.mxu0 0.0
    %1714 = vmatpush1.xpose.msra.mxu0 0.0
    %1715 = vmatprep.subr.mxu0 0.0
    %1716 = vmatpush1.xpose.msra.mxu0 0.0
    %1717 = vmatprep.subr.mxu0 0.0
    %1718 = vmatpush1.xpose.msra.mxu0 0.0
    %1719 = vmatprep.subr.mxu0 0.0
    %1720 = vmatpush1.xpose.msra.mxu0 0.0
    %1721 = vmatprep.subr.mxu0 0.0
    %1722 = vmatpush1.xpose.msra.mxu0 0.0
    %1723 = vmatprep.subr.mxu0 0.0
    %1724 = vmatpush1.xpose.msra.mxu0 0.0
    %1725 = vmatprep.subr.mxu0 0.0
    %1726 = vmatpush1.xpose.msra.mxu0 0.0
    %1727 = vmatprep.subr.mxu0 0.0
    %1728 = vmatpush1.xpose.msra.mxu0 0.0
    %1729 = vmatprep.subr.mxu0 0.0
    %1730 = vmatpush1.xpose.msra.mxu0 0.0
    %1731 = vmatprep.subr.mxu0 0.0
    %1732 = vmatpush1.xpose.msra.mxu0 0.0
    %1733 = vmatprep.subr.mxu0 0.0
    %1734 = vmatpush1.xpose.msra.mxu0 0.0
    %1735 = vmatprep.subr.mxu0 0.0
    %1736 = vmatpush1.xpose.msra.mxu0 0.0
    %1737 = vmatprep.subr.mxu0 0.0
    %1738 = vmatpush1.xpose.msra.mxu0 0.0
    %1739 = vmatprep.subr.mxu0 0.0
    %1740 = vmatpush1.xpose.msra.mxu0 0.0
    %1741 = vmatprep.subr.mxu0 0.0
    %1742 = vmatpush1.xpose.msra.mxu0 0.0
    %1743 = vmatprep.subr.mxu0 0.0
    %1744 = vmatpush1.xpose.msra.mxu0 0.0
    %1745 = vmatprep.mubr.f32.mxu0 0.0
    %1746 = vmatmul.mubr.f32.gmra.mrb[0].mxu0 %v1676
    %v1747 = vpop.f32.mrb[0].mxu0
    %v1748 = vadd.f32 0.0, %v1747
    %v1749 = vpop.f32.mrb[0].mxu0
    %1750 = vdwg.mxu0
    %v1751 = vadd.f32 %v1216, %v140
    %v1752 = vadd.f32 %v1292, %v140
    %v1753 = vadd.f32 %v1368, %v140
    %v1754 = vadd.f32 %v1444, %v140
    %v1755 = vadd.f32 %v1520, %v141
    %v1756 = vadd.f32 %v1596, %v141
    %v1757 = vadd.f32 %v1672, %v141
    %v1758 = vadd.f32 %v1748, %v141
    %v1759 = vsel %vm1142, %v1751, -inf
    %1760 = vmax.xlane.f32.xlu0 %v1759
    %v1761 = vpop.xlane.xlu0 %1760
    %v1762 = vsel %vm1142, %v1752, -inf
    %1763 = vmax.xlane.f32.xlu0 %v1762
    %v1764 = vpop.xlane.xlu0 %1763
    %v1765 = vsel %vm1142, %v1753, -inf
    %1766 = vmax.xlane.f32.xlu0 %v1765
    %v1767 = vpop.xlane.xlu0 %1766
    %v1768 = vsel %vm1142, %v1754, -inf
    %1769 = vmax.xlane.f32.xlu0 %v1768
    %v1770 = vpop.xlane.xlu0 %1769
    %v1771 = vsel %vm1142, %v1755, -inf
    %1772 = vmax.xlane.f32.xlu0 %v1771
    %v1773 = vpop.xlane.xlu0 %1772
    %v1774 = vsel %vm1142, %v1756, -inf
    %1775 = vmax.xlane.f32.xlu0 %v1774
    %v1776 = vpop.xlane.xlu0 %1775
    %v1777 = vsel %vm1142, %v1757, -inf
    %1778 = vmax.xlane.f32.xlu0 %v1777
    %v1779 = vpop.xlane.xlu0 %1778
    %v1780 = vsel %vm1142, %v1758, -inf
    %1781 = vmax.xlane.f32.xlu0 %v1780
    %v1782 = vpop.xlane.xlu0 %1781
    %v1783 = vsub.f32 %v1751, %v1761
    %v1784 = vsub.f32 %v1752, %v1764
    %v1785 = vsub.f32 %v1753, %v1767
    %v1786 = vsub.f32 %v1754, %v1770
    %v1787 = vsub.f32 %v1755, %v1773
    %v1788 = vsub.f32 %v1756, %v1776
    %v1789 = vsub.f32 %v1757, %v1779
    %v1790 = vsub.f32 %v1758, %v1782
    %v1791 = vmul.f32 %v1783, 1.442695
    %v1792 = vpow.pop %v1791
    %v1793 = vmul.f32 %v1784, 1.442695
    %v1794 = vpow.pop %v1793
    %v1795 = vmul.f32 %v1785, 1.442695
    %v1796 = vpow.pop %v1795
    %v1797 = vmul.f32 %v1786, 1.442695
    %v1798 = vpow.pop %v1797
    %v1799 = vmul.f32 %v1787, 1.442695
    %v1800 = vpow.pop %v1799
    %v1801 = vmul.f32 %v1788, 1.442695
    %v1802 = vpow.pop %v1801
    %v1803 = vmul.f32 %v1789, 1.442695
    %v1804 = vpow.pop %v1803
    %v1805 = vmul.f32 %v1790, 1.442695
    %v1806 = vpow.pop %v1805
    %v1807 = vsel %vm1142, %v1792, 0.0
    %1808 = vadd.xlane.f32.xlu0 %v1807
    %v1809 = vpop.xlane.xlu0 %1808
    %v1810 = vsel %vm1142, %v1794, 0.0
    %1811 = vadd.xlane.f32.xlu0 %v1810
    %v1812 = vpop.xlane.xlu0 %1811
    %v1813 = vsel %vm1142, %v1796, 0.0
    %1814 = vadd.xlane.f32.xlu0 %v1813
    %v1815 = vpop.xlane.xlu0 %1814
    %v1816 = vsel %vm1142, %v1798, 0.0
    %1817 = vadd.xlane.f32.xlu0 %v1816
    %v1818 = vpop.xlane.xlu0 %1817
    %v1819 = vsel %vm1142, %v1800, 0.0
    %1820 = vadd.xlane.f32.xlu0 %v1819
    %v1821 = vpop.xlane.xlu0 %1820
    %v1822 = vsel %vm1142, %v1802, 0.0
    %1823 = vadd.xlane.f32.xlu0 %v1822
    %v1824 = vpop.xlane.xlu0 %1823
    %v1825 = vsel %vm1142, %v1804, 0.0
    %1826 = vadd.xlane.f32.xlu0 %v1825
    %v1827 = vpop.xlane.xlu0 %1826
    %v1828 = vsel %vm1142, %v1806, 0.0
    %1829 = vadd.xlane.f32.xlu0 %v1828
    %v1830 = vpop.xlane.xlu0 %1829
    %v1831 = vrcp.pop %v1809
    %v1832 = vrcp.pop %v1812
    %v1833 = vrcp.pop %v1815
    %v1834 = vrcp.pop %v1818
    %v1835 = vrcp.pop %v1821
    %v1836 = vrcp.pop %v1824
    %v1837 = vrcp.pop %v1827
    %v1838 = vrcp.pop %v1830
    %v1839 = vmul.f32 %v1792, %v1831
    %v1840 = vmul.f32 %v1794, %v1832
    %v1841 = vmul.f32 %v1796, %v1833
    %v1842 = vmul.f32 %v1798, %v1834
    %v1843 = vmul.f32 %v1800, %v1835
    %v1844 = vmul.f32 %v1802, %v1836
    %v1845 = vmul.f32 %v1804, %v1837
    %v1846 = vmul.f32 %v1806, %v1838
    %v1848 = vsel %vm1142, %v1839, 0
    %1850 = vmatprep.subr.mxu0 0.0
    %1851 = vmatpush1.msra.mxu0 %v1070
    %1852 = vmatprep.subr.mxu0 0.0
    %1853 = vmatpush1.msra.mxu0 0.0
    %1854 = vmatprep.subr.mxu0 0.0
    %1855 = vmatpush1.msra.mxu0 0.0
    %1856 = vmatprep.subr.mxu0 0.0
    %1857 = vmatpush1.msra.mxu0 0.0
    %1858 = vmatprep.subr.mxu0 0.0
    %1859 = vmatpush1.msra.mxu0 0.0
    %1860 = vmatprep.subr.mxu0 0.0
    %1861 = vmatpush1.msra.mxu0 0.0
    %1862 = vmatprep.subr.mxu0 0.0
    %1863 = vmatpush1.msra.mxu0 0.0
    %1864 = vmatprep.subr.mxu0 0.0
    %1865 = vmatpush1.msra.mxu0 0.0
    %1866 = vmatprep.subr.mxu0 0.0
    %1867 = vmatpush1.msra.mxu0 0.0
    %1868 = vmatprep.subr.mxu0 0.0
    %1869 = vmatpush1.msra.mxu0 0.0
    %1870 = vmatprep.subr.mxu0 0.0
    %1871 = vmatpush1.msra.mxu0 0.0
    %1872 = vmatprep.subr.mxu0 0.0
    %1873 = vmatpush1.msra.mxu0 0.0
    %1874 = vmatprep.subr.mxu0 0.0
    %1875 = vmatpush1.msra.mxu0 0.0
    %1876 = vmatprep.subr.mxu0 0.0
    %1877 = vmatpush1.msra.mxu0 0.0
    %1878 = vmatprep.subr.mxu0 0.0
    %1879 = vmatpush1.msra.mxu0 0.0
    %1880 = vmatprep.subr.mxu0 0.0
    %1881 = vmatpush1.msra.mxu0 0.0
    %1882 = vmatprep.subr.mxu0 0.0
    %1883 = vmatpush1.msra.mxu0 0.0
    %1884 = vmatprep.subr.mxu0 0.0
    %1885 = vmatpush1.msra.mxu0 0.0
    %1886 = vmatprep.subr.mxu0 0.0
    %1887 = vmatpush1.msra.mxu0 0.0
    %1888 = vmatprep.subr.mxu0 0.0
    %1889 = vmatpush1.msra.mxu0 0.0
    %1890 = vmatprep.subr.mxu0 0.0
    %1891 = vmatpush1.msra.mxu0 0.0
    %1892 = vmatprep.subr.mxu0 0.0
    %1893 = vmatpush1.msra.mxu0 0.0
    %1894 = vmatprep.subr.mxu0 0.0
    %1895 = vmatpush1.msra.mxu0 0.0
    %1896 = vmatprep.subr.mxu0 0.0
    %1897 = vmatpush1.msra.mxu0 0.0
    %1898 = vmatprep.subr.mxu0 0.0
    %1899 = vmatpush1.msra.mxu0 0.0
    %1900 = vmatprep.subr.mxu0 0.0
    %1901 = vmatpush1.msra.mxu0 0.0
    %1902 = vmatprep.subr.mxu0 0.0
    %1903 = vmatpush1.msra.mxu0 0.0
    %1904 = vmatprep.subr.mxu0 0.0
    %1905 = vmatpush1.msra.mxu0 0.0
    %1906 = vmatprep.subr.mxu0 0.0
    %1907 = vmatpush1.msra.mxu0 0.0
    %1908 = vmatprep.subr.mxu0 0.0
    %1909 = vmatpush1.msra.mxu0 0.0
    %1910 = vmatprep.subr.mxu0 0.0
    %1911 = vmatpush1.msra.mxu0 0.0
    %1912 = vmatprep.subr.mxu0 0.0
    %1913 = vmatpush1.msra.mxu0 0.0
    %1914 = vmatprep.mubr.f32.mxu0 0.0
    %1915 = vmatmul.mubr.f32.gmra.mrb[0].mxu0 %v1848
    %v1916 = vpop.f32.mrb[0].mxu0
    %v1917 = vadd.f32 0.0, %v1916
    %v1918 = vpop.f32.mrb[0].mxu0
    %1919 = vdwg.mxu0
    %v1921 = vsel %vm1142, %v1840, 0
    %1923 = vmatprep.subr.mxu0 0.0
    %1924 = vmatpush1.msra.mxu0 %v1071
    %1925 = vmatprep.subr.mxu0 0.0
    %1926 = vmatpush1.msra.mxu0 0.0
    %1927 = vmatprep.subr.mxu0 0.0
    %1928 = vmatpush1.msra.mxu0 0.0
    %1929 = vmatprep.subr.mxu0 0.0
    %1930 = vmatpush1.msra.mxu0 0.0
    %1931 = vmatprep.subr.mxu0 0.0
    %1932 = vmatpush1.msra.mxu0 0.0
    %1933 = vmatprep.subr.mxu0 0.0
    %1934 = vmatpush1.msra.mxu0 0.0
    %1935 = vmatprep.subr.mxu0 0.0
    %1936 = vmatpush1.msra.mxu0 0.0
    %1937 = vmatprep.subr.mxu0 0.0
    %1938 = vmatpush1.msra.mxu0 0.0
    %1939 = vmatprep.subr.mxu0 0.0
    %1940 = vmatpush1.msra.mxu0 0.0
    %1941 = vmatprep.subr.mxu0 0.0
    %1942 = vmatpush1.msra.mxu0 0.0
    %1943 = vmatprep.subr.mxu0 0.0
    %1944 = vmatpush1.msra.mxu0 0.0
    %1945 = vmatprep.subr.mxu0 0.0
    %1946 = vmatpush1.msra.mxu0 0.0
    %1947 = vmatprep.subr.mxu0 0.0
    %1948 = vmatpush1.msra.mxu0 0.0
    %1949 = vmatprep.subr.mxu0 0.0
    %1950 = vmatpush1.msra.mxu0 0.0
    %1951 = vmatprep.subr.mxu0 0.0
    %1952 = vmatpush1.msra.mxu0 0.0
    %1953 = vmatprep.subr.mxu0 0.0
    %1954 = vmatpush1.msra.mxu0 0.0
    %1955 = vmatprep.subr.mxu0 0.0
    %1956 = vmatpush1.msra.mxu0 0.0
    %1957 = vmatprep.subr.mxu0 0.0
    %1958 = vmatpush1.msra.mxu0 0.0
    %1959 = vmatprep.subr.mxu0 0.0
    %1960 = vmatpush1.msra.mxu0 0.0
    %1961 = vmatprep.subr.mxu0 0.0
    %1962 = vmatpush1.msra.mxu0 0.0
    %1963 = vmatprep.subr.mxu0 0.0
    %1964 = vmatpush1.msra.mxu0 0.0
    %1965 = vmatprep.subr.mxu0 0.0
    %1966 = vmatpush1.msra.mxu0 0.0
    %1967 = vmatprep.subr.mxu0 0.0
    %1968 = vmatpush1.msra.mxu0 0.0
    %1969 = vmatprep.subr.mxu0 0.0
    %1970 = vmatpush1.msra.mxu0 0.0
    %1971 = vmatprep.subr.mxu0 0.0
    %1972 = vmatpush1.msra.mxu0 0.0
    %1973 = vmatprep.subr.mxu0 0.0
    %1974 = vmatpush1.msra.mxu0 0.0
    %1975 = vmatprep.subr.mxu0 0.0
    %1976 = vmatpush1.msra.mxu0 0.0
    %1977 = vmatprep.subr.mxu0 0.0
    %1978 = vmatpush1.msra.mxu0 0.0
    %1979 = vmatprep.subr.mxu0 0.0
    %1980 = vmatpush1.msra.mxu0 0.0
    %1981 = vmatprep.subr.mxu0 0.0
    %1982 = vmatpush1.msra.mxu0 0.0
    %1983 = vmatprep.subr.mxu0 0.0
    %1984 = vmatpush1.msra.mxu0 0.0
    %1985 = vmatprep.subr.mxu0 0.0
    %1986 = vmatpush1.msra.mxu0 0.0
    %1987 = vmatprep.mubr.f32.mxu0 0.0
    %1988 = vmatmul.mubr.f32.gmra.mrb[0].mxu0 %v1921
    %v1989 = vpop.f32.mrb[0].mxu0
    %v1990 = vadd.f32 0.0, %v1989
    %v1991 = vpop.f32.mrb[0].mxu0
    %1992 = vdwg.mxu0
    %v1994 = vsel %vm1142, %v1841, 0
    %1996 = vmatprep.subr.mxu0 0.0
    %1997 = vmatpush1.msra.mxu0 %v1072
    %1998 = vmatprep.subr.mxu0 0.0
    %1999 = vmatpush1.msra.mxu0 0.0
    %2000 = vmatprep.subr.mxu0 0.0
    %2001 = vmatpush1.msra.mxu0 0.0
    %2002 = vmatprep.subr.mxu0 0.0
    %2003 = vmatpush1.msra.mxu0 0.0
    %2004 = vmatprep.subr.mxu0 0.0
    %2005 = vmatpush1.msra.mxu0 0.0
    %2006 = vmatprep.subr.mxu0 0.0
    %2007 = vmatpush1.msra.mxu0 0.0
    %2008 = vmatprep.subr.mxu0 0.0
    %2009 = vmatpush1.msra.mxu0 0.0
    %2010 = vmatprep.subr.mxu0 0.0
    %2011 = vmatpush1.msra.mxu0 0.0
    %2012 = vmatprep.subr.mxu0 0.0
    %2013 = vmatpush1.msra.mxu0 0.0
    %2014 = vmatprep.subr.mxu0 0.0
    %2015 = vmatpush1.msra.mxu0 0.0
    %2016 = vmatprep.subr.mxu0 0.0
    %2017 = vmatpush1.msra.mxu0 0.0
    %2018 = vmatprep.subr.mxu0 0.0
    %2019 = vmatpush1.msra.mxu0 0.0
    %2020 = vmatprep.subr.mxu0 0.0
    %2021 = vmatpush1.msra.mxu0 0.0
    %2022 = vmatprep.subr.mxu0 0.0
    %2023 = vmatpush1.msra.mxu0 0.0
    %2024 = vmatprep.subr.mxu0 0.0
    %2025 = vmatpush1.msra.mxu0 0.0
    %2026 = vmatprep.subr.mxu0 0.0
    %2027 = vmatpush1.msra.mxu0 0.0
    %2028 = vmatprep.subr.mxu0 0.0
    %2029 = vmatpush1.msra.mxu0 0.0
    %2030 = vmatprep.subr.mxu0 0.0
    %2031 = vmatpush1.msra.mxu0 0.0
    %2032 = vmatprep.subr.mxu0 0.0
    %2033 = vmatpush1.msra.mxu0 0.0
    %2034 = vmatprep.subr.mxu0 0.0
    %2035 = vmatpush1.msra.mxu0 0.0
    %2036 = vmatprep.subr.mxu0 0.0
    %2037 = vmatpush1.msra.mxu0 0.0
    %2038 = vmatprep.subr.mxu0 0.0
    %2039 = vmatpush1.msra.mxu0 0.0
    %2040 = vmatprep.subr.mxu0 0.0
    %2041 = vmatpush1.msra.mxu0 0.0
    %2042 = vmatprep.subr.mxu0 0.0
    %2043 = vmatpush1.msra.mxu0 0.0
    %2044 = vmatprep.subr.mxu0 0.0
    %2045 = vmatpush1.msra.mxu0 0.0
    %2046 = vmatprep.subr.mxu0 0.0
    %2047 = vmatpush1.msra.mxu0 0.0
    %2048 = vmatprep.subr.mxu0 0.0
    %2049 = vmatpush1.msra.mxu0 0.0
    %2050 = vmatprep.subr.mxu0 0.0
    %2051 = vmatpush1.msra.mxu0 0.0
    %2052 = vmatprep.subr.mxu0 0.0
    %2053 = vmatpush1.msra.mxu0 0.0
    %2054 = vmatprep.subr.mxu0 0.0
    %2055 = vmatpush1.msra.mxu0 0.0
    %2056 = vmatprep.subr.mxu0 0.0
    %2057 = vmatpush1.msra.mxu0 0.0
    %2058 = vmatprep.subr.mxu0 0.0
    %2059 = vmatpush1.msra.mxu0 0.0
    %2060 = vmatprep.mubr.f32.mxu0 0.0
    %2061 = vmatmul.mubr.f32.gmra.mrb[0].mxu0 %v1994
    %v2062 = vpop.f32.mrb[0].mxu0
    %v2063 = vadd.f32 0.0, %v2062
    %v2064 = vpop.f32.mrb[0].mxu0
    %2065 = vdwg.mxu0
    %v2067 = vsel %vm1142, %v1842, 0
    %2069 = vmatprep.subr.mxu0 0.0
    %2070 = vmatpush1.msra.mxu0 %v1073
    %2071 = vmatprep.subr.mxu0 0.0
    %2072 = vmatpush1.msra.mxu0 0.0
    %2073 = vmatprep.subr.mxu0 0.0
    %2074 = vmatpush1.msra.mxu0 0.0
    %2075 = vmatprep.subr.mxu0 0.0
    %2076 = vmatpush1.msra.mxu0 0.0
    %2077 = vmatprep.subr.mxu0 0.0
    %2078 = vmatpush1.msra.mxu0 0.0
    %2079 = vmatprep.subr.mxu0 0.0
    %2080 = vmatpush1.msra.mxu0 0.0
    %2081 = vmatprep.subr.mxu0 0.0
    %2082 = vmatpush1.msra.mxu0 0.0
    %2083 = vmatprep.subr.mxu0 0.0
    %2084 = vmatpush1.msra.mxu0 0.0
    %2085 = vmatprep.subr.mxu0 0.0
    %2086 = vmatpush1.msra.mxu0 0.0
    %2087 = vmatprep.subr.mxu0 0.0
    %2088 = vmatpush1.msra.mxu0 0.0
    %2089 = vmatprep.subr.mxu0 0.0
    %2090 = vmatpush1.msra.mxu0 0.0
    %2091 = vmatprep.subr.mxu0 0.0
    %2092 = vmatpush1.msra.mxu0 0.0
    %2093 = vmatprep.subr.mxu0 0.0
    %2094 = vmatpush1.msra.mxu0 0.0
    %2095 = vmatprep.subr.mxu0 0.0
    %2096 = vmatpush1.msra.mxu0 0.0
    %2097 = vmatprep.subr.mxu0 0.0
    %2098 = vmatpush1.msra.mxu0 0.0
    %2099 = vmatprep.subr.mxu0 0.0
    %2100 = vmatpush1.msra.mxu0 0.0
    %2101 = vmatprep.subr.mxu0 0.0
    %2102 = vmatpush1.msra.mxu0 0.0
    %2103 = vmatprep.subr.mxu0 0.0
    %2104 = vmatpush1.msra.mxu0 0.0
    %2105 = vmatprep.subr.mxu0 0.0
    %2106 = vmatpush1.msra.mxu0 0.0
    %2107 = vmatprep.subr.mxu0 0.0
    %2108 = vmatpush1.msra.mxu0 0.0
    %2109 = vmatprep.subr.mxu0 0.0
    %2110 = vmatpush1.msra.mxu0 0.0
    %2111 = vmatprep.subr.mxu0 0.0
    %2112 = vmatpush1.msra.mxu0 0.0
    %2113 = vmatprep.subr.mxu0 0.0
    %2114 = vmatpush1.msra.mxu0 0.0
    %2115 = vmatprep.subr.mxu0 0.0
    %2116 = vmatpush1.msra.mxu0 0.0
    %2117 = vmatprep.subr.mxu0 0.0
    %2118 = vmatpush1.msra.mxu0 0.0
    %2119 = vmatprep.subr.mxu0 0.0
    %2120 = vmatpush1.msra.mxu0 0.0
    %2121 = vmatprep.subr.mxu0 0.0
    %2122 = vmatpush1.msra.mxu0 0.0
    %2123 = vmatprep.subr.mxu0 0.0
    %2124 = vmatpush1.msra.mxu0 0.0
    %2125 = vmatprep.subr.mxu0 0.0
    %2126 = vmatpush1.msra.mxu0 0.0
    %2127 = vmatprep.subr.mxu0 0.0
    %2128 = vmatpush1.msra.mxu0 0.0
    %2129 = vmatprep.subr.mxu0 0.0
    %2130 = vmatpush1.msra.mxu0 0.0
    %2131 = vmatprep.subr.mxu0 0.0
    %2132 = vmatpush1.msra.mxu0 0.0
    %2133 = vmatprep.mubr.f32.mxu0 0.0
    %2134 = vmatmul.mubr.f32.gmra.mrb[0].mxu0 %v2067
    %v2135 = vpop.f32.mrb[0].mxu0
    %v2136 = vadd.f32 0.0, %v2135
    %v2137 = vpop.f32.mrb[0].mxu0
    %2138 = vdwg.mxu0
    %v2140 = vsel %vm1142, %v1843, 0
    %2142 = vmatprep.subr.mxu0 0.0
    %2143 = vmatpush1.msra.mxu0 %v1138
    %2144 = vmatprep.subr.mxu0 0.0
    %2145 = vmatpush1.msra.mxu0 0.0
    %2146 = vmatprep.subr.mxu0 0.0
    %2147 = vmatpush1.msra.mxu0 0.0
    %2148 = vmatprep.subr.mxu0 0.0
    %2149 = vmatpush1.msra.mxu0 0.0
    %2150 = vmatprep.subr.mxu0 0.0
    %2151 = vmatpush1.msra.mxu0 0.0
    %2152 = vmatprep.subr.mxu0 0.0
    %2153 = vmatpush1.msra.mxu0 0.0
    %2154 = vmatprep.subr.mxu0 0.0
    %2155 = vmatpush1.msra.mxu0 0.0
    %2156 = vmatprep.subr.mxu0 0.0
    %2157 = vmatpush1.msra.mxu0 0.0
    %2158 = vmatprep.subr.mxu0 0.0
    %2159 = vmatpush1.msra.mxu0 0.0
    %2160 = vmatprep.subr.mxu0 0.0
    %2161 = vmatpush1.msra.mxu0 0.0
    %2162 = vmatprep.subr.mxu0 0.0
    %2163 = vmatpush1.msra.mxu0 0.0
    %2164 = vmatprep.subr.mxu0 0.0
    %2165 = vmatpush1.msra.mxu0 0.0
    %2166 = vmatprep.subr.mxu0 0.0
    %2167 = vmatpush1.msra.mxu0 0.0
    %2168 = vmatprep.subr.mxu0 0.0
    %2169 = vmatpush1.msra.mxu0 0.0
    %2170 = vmatprep.subr.mxu0 0.0
    %2171 = vmatpush1.msra.mxu0 0.0
    %2172 = vmatprep.subr.mxu0 0.0
    %2173 = vmatpush1.msra.mxu0 0.0
    %2174 = vmatprep.subr.mxu0 0.0
    %2175 = vmatpush1.msra.mxu0 0.0
    %2176 = vmatprep.subr.mxu0 0.0
    %2177 = vmatpush1.msra.mxu0 0.0
    %2178 = vmatprep.subr.mxu0 0.0
    %2179 = vmatpush1.msra.mxu0 0.0
    %2180 = vmatprep.subr.mxu0 0.0
    %2181 = vmatpush1.msra.mxu0 0.0
    %2182 = vmatprep.subr.mxu0 0.0
    %2183 = vmatpush1.msra.mxu0 0.0
    %2184 = vmatprep.subr.mxu0 0.0
    %2185 = vmatpush1.msra.mxu0 0.0
    %2186 = vmatprep.subr.mxu0 0.0
    %2187 = vmatpush1.msra.mxu0 0.0
    %2188 = vmatprep.subr.mxu0 0.0
    %2189 = vmatpush1.msra.mxu0 0.0
    %2190 = vmatprep.subr.mxu0 0.0
    %2191 = vmatpush1.msra.mxu0 0.0
    %2192 = vmatprep.subr.mxu0 0.0
    %2193 = vmatpush1.msra.mxu0 0.0
    %2194 = vmatprep.subr.mxu0 0.0
    %2195 = vmatpush1.msra.mxu0 0.0
    %2196 = vmatprep.subr.mxu0 0.0
    %2197 = vmatpush1.msra.mxu0 0.0
    %2198 = vmatprep.subr.mxu0 0.0
    %2199 = vmatpush1.msra.mxu0 0.0
    %2200 = vmatprep.subr.mxu0 0.0
    %2201 = vmatpush1.msra.mxu0 0.0
    %2202 = vmatprep.subr.mxu0 0.0
    %2203 = vmatpush1.msra.mxu0 0.0
    %2204 = vmatprep.subr.mxu0 0.0
    %2205 = vmatpush1.msra.mxu0 0.0
    %2206 = vmatprep.mubr.f32.mxu0 0.0
    %2207 = vmatmul.mubr.f32.gmra.mrb[0].mxu0 %v2140
    %v2208 = vpop.f32.mrb[0].mxu0
    %v2209 = vadd.f32 0.0, %v2208
    %v2210 = vpop.f32.mrb[0].mxu0
    %2211 = vdwg.mxu0
    %v2213 = vsel %vm1142, %v1844, 0
    %2215 = vmatprep.subr.mxu0 0.0
    %2216 = vmatpush1.msra.mxu0 %v1139
    %2217 = vmatprep.subr.mxu0 0.0
    %2218 = vmatpush1.msra.mxu0 0.0
    %2219 = vmatprep.subr.mxu0 0.0
    %2220 = vmatpush1.msra.mxu0 0.0
    %2221 = vmatprep.subr.mxu0 0.0
    %2222 = vmatpush1.msra.mxu0 0.0
    %2223 = vmatprep.subr.mxu0 0.0
    %2224 = vmatpush1.msra.mxu0 0.0
    %2225 = vmatprep.subr.mxu0 0.0
    %2226 = vmatpush1.msra.mxu0 0.0
    %2227 = vmatprep.subr.mxu0 0.0
    %2228 = vmatpush1.msra.mxu0 0.0
    %2229 = vmatprep.subr.mxu0 0.0
    %2230 = vmatpush1.msra.mxu0 0.0
    %2231 = vmatprep.subr.mxu0 0.0
    %2232 = vmatpush1.msra.mxu0 0.0
    %2233 = vmatprep.subr.mxu0 0.0
    %2234 = vmatpush1.msra.mxu0 0.0
    %2235 = vmatprep.subr.mxu0 0.0
    %2236 = vmatpush1.msra.mxu0 0.0
    %2237 = vmatprep.subr.mxu0 0.0
    %2238 = vmatpush1.msra.mxu0 0.0
    %2239 = vmatprep.subr.mxu0 0.0
    %2240 = vmatpush1.msra.mxu0 0.0
    %2241 = vmatprep.subr.mxu0 0.0
    %2242 = vmatpush1.msra.mxu0 0.0
    %2243 = vmatprep.subr.mxu0 0.0
    %2244 = vmatpush1.msra.mxu0 0.0
    %2245 = vmatprep.subr.mxu0 0.0
    %2246 = vmatpush1.msra.mxu0 0.0
    %2247 = vmatprep.subr.mxu0 0.0
    %2248 = vmatpush1.msra.mxu0 0.0
    %2249 = vmatprep.subr.mxu0 0.0
    %2250 = vmatpush1.msra.mxu0 0.0
    %2251 = vmatprep.subr.mxu0 0.0
    %2252 = vmatpush1.msra.mxu0 0.0
    %2253 = vmatprep.subr.mxu0 0.0
    %2254 = vmatpush1.msra.mxu0 0.0
    %2255 = vmatprep.subr.mxu0 0.0
    %2256 = vmatpush1.msra.mxu0 0.0
    %2257 = vmatprep.subr.mxu0 0.0
    %2258 = vmatpush1.msra.mxu0 0.0
    %2259 = vmatprep.subr.mxu0 0.0
    %2260 = vmatpush1.msra.mxu0 0.0
    %2261 = vmatprep.subr.mxu0 0.0
    %2262 = vmatpush1.msra.mxu0 0.0
    %2263 = vmatprep.subr.mxu0 0.0
    %2264 = vmatpush1.msra.mxu0 0.0
    %2265 = vmatprep.subr.mxu0 0.0
    %2266 = vmatpush1.msra.mxu0 0.0
    %2267 = vmatprep.subr.mxu0 0.0
    %2268 = vmatpush1.msra.mxu0 0.0
    %2269 = vmatprep.subr.mxu0 0.0
    %2270 = vmatpush1.msra.mxu0 0.0
    %2271 = vmatprep.subr.mxu0 0.0
    %2272 = vmatpush1.msra.mxu0 0.0
    %2273 = vmatprep.subr.mxu0 0.0
    %2274 = vmatpush1.msra.mxu0 0.0
    %2275 = vmatprep.subr.mxu0 0.0
    %2276 = vmatpush1.msra.mxu0 0.0
    %2277 = vmatprep.subr.mxu0 0.0
    %2278 = vmatpush1.msra.mxu0 0.0
    %2279 = vmatprep.mubr.f32.mxu0 0.0
    %2280 = vmatmul.mubr.f32.gmra.mrb[0].mxu0 %v2213
    %v2281 = vpop.f32.mrb[0].mxu0
    %v2282 = vadd.f32 0.0, %v2281
    %v2283 = vpop.f32.mrb[0].mxu0
    %2284 = vdwg.mxu0
    %v2286 = vsel %vm1142, %v1845, 0
    %2288 = vmatprep.subr.mxu0 0.0
    %2289 = vmatpush1.msra.mxu0 %v1140
    %2290 = vmatprep.subr.mxu0 0.0
    %2291 = vmatpush1.msra.mxu0 0.0
    %2292 = vmatprep.subr.mxu0 0.0
    %2293 = vmatpush1.msra.mxu0 0.0
    %2294 = vmatprep.subr.mxu0 0.0
    %2295 = vmatpush1.msra.mxu0 0.0
    %2296 = vmatprep.subr.mxu0 0.0
    %2297 = vmatpush1.msra.mxu0 0.0
    %2298 = vmatprep.subr.mxu0 0.0
    %2299 = vmatpush1.msra.mxu0 0.0
    %2300 = vmatprep.subr.mxu0 0.0
    %2301 = vmatpush1.msra.mxu0 0.0
    %2302 = vmatprep.subr.mxu0 0.0
    %2303 = vmatpush1.msra.mxu0 0.0
    %2304 = vmatprep.subr.mxu0 0.0
    %2305 = vmatpush1.msra.mxu0 0.0
    %2306 = vmatprep.subr.mxu0 0.0
    %2307 = vmatpush1.msra.mxu0 0.0
    %2308 = vmatprep.subr.mxu0 0.0
    %2309 = vmatpush1.msra.mxu0 0.0
    %2310 = vmatprep.subr.mxu0 0.0
    %2311 = vmatpush1.msra.mxu0 0.0
    %2312 = vmatprep.subr.mxu0 0.0
    %2313 = vmatpush1.msra.mxu0 0.0
    %2314 = vmatprep.subr.mxu0 0.0
    %2315 = vmatpush1.msra.mxu0 0.0
    %2316 = vmatprep.subr.mxu0 0.0
    %2317 = vmatpush1.msra.mxu0 0.0
    %2318 = vmatprep.subr.mxu0 0.0
    %2319 = vmatpush1.msra.mxu0 0.0
    %2320 = vmatprep.subr.mxu0 0.0
    %2321 = vmatpush1.msra.mxu0 0.0
    %2322 = vmatprep.subr.mxu0 0.0
    %2323 = vmatpush1.msra.mxu0 0.0
    %2324 = vmatprep.subr.mxu0 0.0
    %2325 = vmatpush1.msra.mxu0 0.0
    %2326 = vmatprep.subr.mxu0 0.0
    %2327 = vmatpush1.msra.mxu0 0.0
    %2328 = vmatprep.subr.mxu0 0.0
    %2329 = vmatpush1.msra.mxu0 0.0
    %2330 = vmatprep.subr.mxu0 0.0
    %2331 = vmatpush1.msra.mxu0 0.0
    %2332 = vmatprep.subr.mxu0 0.0
    %2333 = vmatpush1.msra.mxu0 0.0
    %2334 = vmatprep.subr.mxu0 0.0
    %2335 = vmatpush1.msra.mxu0 0.0
    %2336 = vmatprep.subr.mxu0 0.0
    %2337 = vmatpush1.msra.mxu0 0.0
    %2338 = vmatprep.subr.mxu0 0.0
    %2339 = vmatpush1.msra.mxu0 0.0
    %2340 = vmatprep.subr.mxu0 0.0
    %2341 = vmatpush1.msra.mxu0 0.0
    %2342 = vmatprep.subr.mxu0 0.0
    %2343 = vmatpush1.msra.mxu0 0.0
    %2344 = vmatprep.subr.mxu0 0.0
    %2345 = vmatpush1.msra.mxu0 0.0
    %2346 = vmatprep.subr.mxu0 0.0
    %2347 = vmatpush1.msra.mxu0 0.0
    %2348 = vmatprep.subr.mxu0 0.0
    %2349 = vmatpush1.msra.mxu0 0.0
    %2350 = vmatprep.subr.mxu0 0.0
    %2351 = vmatpush1.msra.mxu0 0.0
    %2352 = vmatprep.mubr.f32.mxu0 0.0
    %2353 = vmatmul.mubr.f32.gmra.mrb[0].mxu0 %v2286
    %v2354 = vpop.f32.mrb[0].mxu0
    %v2355 = vadd.f32 0.0, %v2354
    %v2356 = vpop.f32.mrb[0].mxu0
    %2357 = vdwg.mxu0
    %v2359 = vsel %vm1142, %v1846, 0
    %2361 = vmatprep.subr.mxu0 0.0
    %2362 = vmatpush1.msra.mxu0 %v1141
    %2363 = vmatprep.subr.mxu0 0.0
    %2364 = vmatpush1.msra.mxu0 0.0
    %2365 = vmatprep.subr.mxu0 0.0
    %2366 = vmatpush1.msra.mxu0 0.0
    %2367 = vmatprep.subr.mxu0 0.0
    %2368 = vmatpush1.msra.mxu0 0.0
    %2369 = vmatprep.subr.mxu0 0.0
    %2370 = vmatpush1.msra.mxu0 0.0
    %2371 = vmatprep.subr.mxu0 0.0
    %2372 = vmatpush1.msra.mxu0 0.0
    %2373 = vmatprep.subr.mxu0 0.0
    %2374 = vmatpush1.msra.mxu0 0.0
    %2375 = vmatprep.subr.mxu0 0.0
    %2376 = vmatpush1.msra.mxu0 0.0
    %2377 = vmatprep.subr.mxu0 0.0
    %2378 = vmatpush1.msra.mxu0 0.0
    %2379 = vmatprep.subr.mxu0 0.0
    %2380 = vmatpush1.msra.mxu0 0.0
    %2381 = vmatprep.subr.mxu0 0.0
    %2382 = vmatpush1.msra.mxu0 0.0
    %2383 = vmatprep.subr.mxu0 0.0
    %2384 = vmatpush1.msra.mxu0 0.0
    %2385 = vmatprep.subr.mxu0 0.0
    %2386 = vmatpush1.msra.mxu0 0.0
    %2387 = vmatprep.subr.mxu0 0.0
    %2388 = vmatpush1.msra.mxu0 0.0
    %2389 = vmatprep.subr.mxu0 0.0
    %2390 = vmatpush1.msra.mxu0 0.0
    %2391 = vmatprep.subr.mxu0 0.0
    %2392 = vmatpush1.msra.mxu0 0.0
    %2393 = vmatprep.subr.mxu0 0.0
    %2394 = vmatpush1.msra.mxu0 0.0
    %2395 = vmatprep.subr.mxu0 0.0
    %2396 = vmatpush1.msra.mxu0 0.0
    %2397 = vmatprep.subr.mxu0 0.0
    %2398 = vmatpush1.msra.mxu0 0.0
    %2399 = vmatprep.subr.mxu0 0.0
    %2400 = vmatpush1.msra.mxu0 0.0
    %2401 = vmatprep.subr.mxu0 0.0
    %2402 = vmatpush1.msra.mxu0 0.0
    %2403 = vmatprep.subr.mxu0 0.0
    %2404 = vmatpush1.msra.mxu0 0.0
    %2405 = vmatprep.subr.mxu0 0.0
    %2406 = vmatpush1.msra.mxu0 0.0
    %2407 = vmatprep.subr.mxu0 0.0
    %2408 = vmatpush1.msra.mxu0 0.0
    %2409 = vmatprep.subr.mxu0 0.0
    %2410 = vmatpush1.msra.mxu0 0.0
    %2411 = vmatprep.subr.mxu0 0.0
    %2412 = vmatpush1.msra.mxu0 0.0
    %2413 = vmatprep.subr.mxu0 0.0
    %2414 = vmatpush1.msra.mxu0 0.0
    %2415 = vmatprep.subr.mxu0 0.0
    %2416 = vmatpush1.msra.mxu0 0.0
    %2417 = vmatprep.subr.mxu0 0.0
    %2418 = vmatpush1.msra.mxu0 0.0
    %2419 = vmatprep.subr.mxu0 0.0
    %2420 = vmatpush1.msra.mxu0 0.0
    %2421 = vmatprep.subr.mxu0 0.0
    %2422 = vmatpush1.msra.mxu0 0.0
    %2423 = vmatprep.subr.mxu0 0.0
    %2424 = vmatpush1.msra.mxu0 0.0
    %2425 = vmatprep.mubr.f32.mxu0 0.0
    %2426 = vmatmul.mubr.f32.gmra.mrb[0].mxu0 %v2359
    %v2427 = vpop.f32.mrb[0].mxu0
    %v2428 = vadd.f32 0.0, %v2427
    %v2429 = vpop.f32.mrb[0].mxu0
    %2430 = vdwg.mxu0
    %v2431 = vcombine.low %v1917, %v2063
    %v2432 = vcombine.high %v1917, %v2063
    %v2434 = vunpack.c.l.s4 1983009808
    %v2435 = vunpack.c.0.s8 %v2434
    %v2436 = vlaneseq
    %v2437 = vshrl.u32 %v2436, 7
    %v2438 = vsub.s32 %v2435, %v2437
    %v2439 = vrot.slane %v2431, %v2438
    %v2441 = vunpack.c.l.s4 1983009808
    %v2442 = vunpack.c.0.s8 %v2441
    %v2443 = vlaneseq
    %v2444 = vshrl.u32 %v2443, 7
    %v2445 = vsub.s32 %v2442, %v2444
    %v2446 = vrot.slane %v2432, %v2445
    %v2447 = vcombine.low %v1990, %v2136
    %v2448 = vcombine.high %v1990, %v2136
    %v2450 = vunpack.c.l.s4 1983009808
    %v2451 = vunpack.c.0.s8 %v2450
    %v2452 = vlaneseq
    %v2453 = vshrl.u32 %v2452, 7
    %v2454 = vsub.s32 %v2451, %v2453
    %v2455 = vrot.slane %v2447, %v2454
    %v2457 = vunpack.c.l.s4 1983009808
    %v2458 = vunpack.c.0.s8 %v2457
    %v2459 = vlaneseq
    %v2460 = vshrl.u32 %v2459, 7
    %v2461 = vsub.s32 %v2458, %v2460
    %v2462 = vrot.slane %v2448, %v2461
    %v2463 = vcombine.low %v2439, %v2455
    %v2464 = vcombine.high %v2439, %v2455
    %v2466 = vunpack.c.l.s4 1934713408
    %v2467 = vunpack.c.0.s8 %v2466
    %v2468 = vlaneseq
    %v2469 = vshrl.u32 %v2468, 7
    %v2470 = vsub.s32 %v2467, %v2469
    %v2471 = vrot.slane %v2463, %v2470
    %v2473 = vunpack.c.l.s4 1934713408
    %v2474 = vunpack.c.0.s8 %v2473
    %v2475 = vlaneseq
    %v2476 = vshrl.u32 %v2475, 7
    %v2477 = vsub.s32 %v2474, %v2476
    %v2478 = vrot.slane %v2464, %v2477
    %v2479 = vcombine.low %v2446, %v2462
    %v2480 = vcombine.high %v2446, %v2462
    %v2482 = vunpack.c.l.s4 1934713408
    %v2483 = vunpack.c.0.s8 %v2482
    %v2484 = vlaneseq
    %v2485 = vshrl.u32 %v2484, 7
    %v2486 = vsub.s32 %v2483, %v2485
    %v2487 = vrot.slane %v2479, %v2486
    %v2489 = vunpack.c.l.s4 1934713408
    %v2490 = vunpack.c.0.s8 %v2489
    %v2491 = vlaneseq
    %v2492 = vshrl.u32 %v2491, 7
    %v2493 = vsub.s32 %v2490, %v2492
    %v2494 = vrot.slane %v2480, %v2493
    %v2495 = vcombine.high %v2471, 0.0
    %v2496 = vcombine.high %v2478, 0.0
    %v2497 = vcombine.high %v2487, 0.0
    %v2498 = vcombine.high %v2494, 0.0
    %v2499 = vcombine.low %v2209, %v2355
    %v2500 = vcombine.high %v2209, %v2355
    %v2502 = vunpack.c.l.s4 1983009808
    %v2503 = vunpack.c.0.s8 %v2502
    %v2504 = vlaneseq
    %v2505 = vshrl.u32 %v2504, 7
    %v2506 = vsub.s32 %v2503, %v2505
    %v2507 = vrot.slane %v2499, %v2506
    %v2509 = vunpack.c.l.s4 1983009808
    %v2510 = vunpack.c.0.s8 %v2509
    %v2511 = vlaneseq
    %v2512 = vshrl.u32 %v2511, 7
    %v2513 = vsub.s32 %v2510, %v2512
    %v2514 = vrot.slane %v2500, %v2513
    %v2515 = vcombine.low %v2282, %v2428
    %v2516 = vcombine.high %v2282, %v2428
    %v2518 = vunpack.c.l.s4 1983009808
    %v2519 = vunpack.c.0.s8 %v2518
    %v2520 = vlaneseq
    %v2521 = vshrl.u32 %v2520, 7
    %v2522 = vsub.s32 %v2519, %v2521
    %v2523 = vrot.slane %v2515, %v2522
    %v2525 = vunpack.c.l.s4 1983009808
    %v2526 = vunpack.c.0.s8 %v2525
    %v2527 = vlaneseq
    %v2528 = vshrl.u32 %v2527, 7
    %v2529 = vsub.s32 %v2526, %v2528
    %v2530 = vrot.slane %v2516, %v2529
    %v2531 = vcombine.low %v2507, %v2523
    %v2532 = vcombine.high %v2507, %v2523
    %v2534 = vunpack.c.l.s4 1934713408
    %v2535 = vunpack.c.0.s8 %v2534
    %v2536 = vlaneseq
    %v2537 = vshrl.u32 %v2536, 7
    %v2538 = vsub.s32 %v2535, %v2537
    %v2539 = vrot.slane %v2531, %v2538
    %v2541 = vunpack.c.l.s4 1934713408
    %v2542 = vunpack.c.0.s8 %v2541
    %v2543 = vlaneseq
    %v2544 = vshrl.u32 %v2543, 7
    %v2545 = vsub.s32 %v2542, %v2544
    %v2546 = vrot.slane %v2532, %v2545
    %v2547 = vcombine.low %v2514, %v2530
    %v2548 = vcombine.high %v2514, %v2530
    %v2550 = vunpack.c.l.s4 1934713408
    %v2551 = vunpack.c.0.s8 %v2550
    %v2552 = vlaneseq
    %v2553 = vshrl.u32 %v2552, 7
    %v2554 = vsub.s32 %v2551, %v2553
    %v2555 = vrot.slane %v2547, %v2554
    %v2557 = vunpack.c.l.s4 1934713408
    %v2558 = vunpack.c.0.s8 %v2557
    %v2559 = vlaneseq
    %v2560 = vshrl.u32 %v2559, 7
    %v2561 = vsub.s32 %v2558, %v2560
    %v2562 = vrot.slane %v2548, %v2561
    %v2563 = vcombine.high %v2539, 0.0
    %v2564 = vcombine.high %v2546, 0.0
    %v2565 = vcombine.high %v2555, 0.0
    %v2566 = vcombine.high %v2562, 0.0
    %v2567 = vcombine.low %v2471, %v2478
    %v2569 = vunpack.c.l.s4 1983009808
    %v2570 = vunpack.c.0.s8 %v2569
    %v2571 = vlaneseq
    %v2572 = vshrl.u32 %v2571, 7
    %v2573 = vsub.s32 %v2570, %v2572
    %v2574 = vrot.slane %v2567, %v2573
    %v2575 = vcombine.low %v2495, %v2496
    %v2577 = vunpack.c.l.s4 1983009808
    %v2578 = vunpack.c.0.s8 %v2577
    %v2579 = vlaneseq
    %v2580 = vshrl.u32 %v2579, 7
    %v2581 = vsub.s32 %v2578, %v2580
    %v2582 = vrot.slane %v2575, %v2581
    %v2583 = vcombine.low %v2487, %v2494
    %v2585 = vunpack.c.l.s4 1983009808
    %v2586 = vunpack.c.0.s8 %v2585
    %v2587 = vlaneseq
    %v2588 = vshrl.u32 %v2587, 7
    %v2589 = vsub.s32 %v2586, %v2588
    %v2590 = vrot.slane %v2583, %v2589
    %v2591 = vcombine.low %v2497, %v2498
    %v2593 = vunpack.c.l.s4 1983009808
    %v2594 = vunpack.c.0.s8 %v2593
    %v2595 = vlaneseq
    %v2596 = vshrl.u32 %v2595, 7
    %v2597 = vsub.s32 %v2594, %v2596
    %v2598 = vrot.slane %v2591, %v2597
    %v2599 = vcombine.low %v2574, %v2582
    %v2600 = vcombine.high %v2574, %v2582
    %v2602 = vunpack.c.l.s4 1934713408
    %v2603 = vunpack.c.0.s8 %v2602
    %v2604 = vlaneseq
    %v2605 = vshrl.u32 %v2604, 7
    %v2606 = vsub.s32 %v2603, %v2605
    %v2607 = vrot.slane %v2599, %v2606
    %v2609 = vunpack.c.l.s4 1934713408
    %v2610 = vunpack.c.0.s8 %v2609
    %v2611 = vlaneseq
    %v2612 = vshrl.u32 %v2611, 7
    %v2613 = vsub.s32 %v2610, %v2612
    %v2614 = vrot.slane %v2600, %v2613
    %v2615 = vcombine.low %v2590, %v2598
    %v2616 = vcombine.high %v2590, %v2598
    %v2618 = vunpack.c.l.s4 1934713408
    %v2619 = vunpack.c.0.s8 %v2618
    %v2620 = vlaneseq
    %v2621 = vshrl.u32 %v2620, 7
    %v2622 = vsub.s32 %v2619, %v2621
    %v2623 = vrot.slane %v2615, %v2622
    %v2625 = vunpack.c.l.s4 1934713408
    %v2626 = vunpack.c.0.s8 %v2625
    %v2627 = vlaneseq
    %v2628 = vshrl.u32 %v2627, 7
    %v2629 = vsub.s32 %v2626, %v2628
    %v2630 = vrot.slane %v2616, %v2629
    %v2631 = vcombine.low %v2607, %v2623
    %v2632 = vcombine.high %v2607, %v2623
    %v2633 = vcombine.low %v2614, %v2630
    %v2634 = vcombine.high %v2614, %v2630
    %v2635 = vcombine.low %v2539, %v2546
    %v2637 = vunpack.c.l.s4 1983009808
    %v2638 = vunpack.c.0.s8 %v2637
    %v2639 = vlaneseq
    %v2640 = vshrl.u32 %v2639, 7
    %v2641 = vsub.s32 %v2638, %v2640
    %v2642 = vrot.slane %v2635, %v2641
    %v2643 = vcombine.low %v2563, %v2564
    %v2645 = vunpack.c.l.s4 1983009808
    %v2646 = vunpack.c.0.s8 %v2645
    %v2647 = vlaneseq
    %v2648 = vshrl.u32 %v2647, 7
    %v2649 = vsub.s32 %v2646, %v2648
    %v2650 = vrot.slane %v2643, %v2649
    %v2651 = vcombine.low %v2555, %v2562
    %v2653 = vunpack.c.l.s4 1983009808
    %v2654 = vunpack.c.0.s8 %v2653
    %v2655 = vlaneseq
    %v2656 = vshrl.u32 %v2655, 7
    %v2657 = vsub.s32 %v2654, %v2656
    %v2658 = vrot.slane %v2651, %v2657
    %v2659 = vcombine.low %v2565, %v2566
    %v2661 = vunpack.c.l.s4 1983009808
    %v2662 = vunpack.c.0.s8 %v2661
    %v2663 = vlaneseq
    %v2664 = vshrl.u32 %v2663, 7
    %v2665 = vsub.s32 %v2662, %v2664
    %v2666 = vrot.slane %v2659, %v2665
    %v2667 = vcombine.low %v2642, %v2650
    %v2668 = vcombine.high %v2642, %v2650
    %v2670 = vunpack.c.l.s4 1934713408
    %v2671 = vunpack.c.0.s8 %v2670
    %v2672 = vlaneseq
    %v2673 = vshrl.u32 %v2672, 7
    %v2674 = vsub.s32 %v2671, %v2673
    %v2675 = vrot.slane %v2667, %v2674
    %v2677 = vunpack.c.l.s4 1934713408
    %v2678 = vunpack.c.0.s8 %v2677
    %v2679 = vlaneseq
    %v2680 = vshrl.u32 %v2679, 7
    %v2681 = vsub.s32 %v2678, %v2680
    %v2682 = vrot.slane %v2668, %v2681
    %v2683 = vcombine.low %v2658, %v2666
    %v2684 = vcombine.high %v2658, %v2666
    %v2686 = vunpack.c.l.s4 1934713408
    %v2687 = vunpack.c.0.s8 %v2686
    %v2688 = vlaneseq
    %v2689 = vshrl.u32 %v2688, 7
    %v2690 = vsub.s32 %v2687, %v2689
    %v2691 = vrot.slane %v2683, %v2690
    %v2693 = vunpack.c.l.s4 1934713408
    %v2694 = vunpack.c.0.s8 %v2693
    %v2695 = vlaneseq
    %v2696 = vshrl.u32 %v2695, 7
    %v2697 = vsub.s32 %v2694, %v2696
    %v2698 = vrot.slane %v2684, %v2697
    %v2699 = vcombine.low %v2675, %v2691
    %v2700 = vcombine.high %v2675, %v2691
    %v2701 = vcombine.low %v2682, %v2698
    %v2702 = vcombine.high %v2682, %v2698
    %2705 = vrot.lane.b32.xlu0 %v2632, 8
    %v2706 = vpop.permute.xlu0 %2705
    %2707 = vrot.lane.b32.xlu0 %v2700, 8
    %v2708 = vpop.permute.xlu0 %2707
    %2713 = vrot.lane.b32.xlu0 %v2633, 16
    %v2714 = vpop.permute.xlu0 %2713
    %2715 = vrot.lane.b32.xlu0 %v2701, 16
    %v2716 = vpop.permute.xlu0 %2715
    %2721 = vrot.lane.b32.xlu0 %v2634, 24
    %v2722 = vpop.permute.xlu0 %2721
    %2723 = vrot.lane.b32.xlu0 %v2702, 24
    %v2724 = vpop.permute.xlu0 %2723
    %v2727 = vsel %vm1142, %v2631, %v2706
    %v2728 = vsel %vm1142, %v2699, %v2708
    %vm2729 = vcmask 130048
    %v2730 = vsel %vm2729, %v2727, %v2714
    %v2731 = vsel %vm2729, %v2728, %v2716
    %vm2732 = vcmask 195584
    %v2733 = vsel %vm2732, %v2730, %v2722
    %v2734 = vsel %vm2732, %v2731, %v2724
    %v2735 = vpack.c.bf16 %v2734, %v2733
    %v2736 = vld [vmem:[%s7] sm:$0xf]
    %v2737 = vld [vmem:[%s7 + $0x4] sm:$0xf]
    %v2738 = vld [vmem:[%s7 + $0x8] sm:$0xf]
    %v2739 = vld [vmem:[%s7 + $0xc] sm:$0xf]
    %v2740 = vld [vmem:[#allocation5] sm:$0x1]
    %v2742 = vlaneseq
    %v2743 = vshrl.u32 %v2742, 7
    %v2744 = vsub.s32 0, %v2743
    %v2745 = vrot.slane %v2740, %v2744
    %v2751 = vunpack.c.l.b16 %v2736
    %v2752 = vunpack.c.l.b16 %v2737
    %v2753 = vunpack.c.l.b16 %v2738
    %v2754 = vunpack.c.l.b16 %v2739
    %v2755 = vpack.c.b16 %v2752, %v2751
    %v2756 = vpack.c.b16 %v2754, %v2753
    %v2760 = vsel %vm146, %v2735, 0
    %2762 = vmatprep.subr.bf16.mxu0 0
    %2763 = vmatpush1.bf16.msra.mxu0 %v2755
    %2764 = vmatprep.subr.bf16.mxu0 0
    %2765 = vmatpush1.bf16.msra.mxu0 %v2756
    %2766 = vmatprep.subr.bf16.mxu0 0
    %2767 = vmatpush1.bf16.msra.mxu0 0
    %2768 = vmatprep.subr.bf16.mxu0 0
    %2769 = vmatpush1.bf16.msra.mxu0 0
    %2770 = vmatprep.subr.bf16.mxu0 0
    %2771 = vmatpush1.bf16.msra.mxu0 0
    %2772 = vmatprep.subr.bf16.mxu0 0
    %2773 = vmatpush1.bf16.msra.mxu0 0
    %2774 = vmatprep.subr.bf16.mxu0 0
    %2775 = vmatpush1.bf16.msra.mxu0 0
    %2776 = vmatprep.subr.bf16.mxu0 0
    %2777 = vmatpush1.bf16.msra.mxu0 0
    %2778 = vmatprep.subr.bf16.mxu0 0
    %2779 = vmatpush1.bf16.msra.mxu0 0
    %2780 = vmatprep.subr.bf16.mxu0 0
    %2781 = vmatpush1.bf16.msra.mxu0 0
    %2782 = vmatprep.subr.bf16.mxu0 0
    %2783 = vmatpush1.bf16.msra.mxu0 0
    %2784 = vmatprep.subr.bf16.mxu0 0
    %2785 = vmatpush1.bf16.msra.mxu0 0
    %2786 = vmatprep.subr.bf16.mxu0 0
    %2787 = vmatpush1.bf16.msra.mxu0 0
    %2788 = vmatprep.subr.bf16.mxu0 0
    %2789 = vmatpush1.bf16.msra.mxu0 0
    %2790 = vmatprep.subr.bf16.mxu0 0
    %2791 = vmatpush1.bf16.msra.mxu0 0
    %2792 = vmatprep.subr.bf16.mxu0 0
    %2793 = vmatpush1.bf16.msra.mxu0 0
    %2794 = vmatprep.mubr.bf16.mxu0 0
    %2795 = vmatmul.mubr.bf16.gmra.mrb[0].mxu0 %v2760
    %v2796 = vpop.f32.mrb[0].mxu0
    %v2797 = vadd.f32 %v2745, %v2796
    %v2798 = vpop.f32.mrb[0].mxu0
    %v2799 = vpop.f32.mrb[0].mxu0
    %v2800 = vadd.f32 %v2745, %v2799
    %v2801 = vpop.f32.mrb[0].mxu0
    %2802 = vdwg.mxu0
    %v2803 = vadd.f32 %v142, %v2797
    %v2804 = vadd.f32 %v143, %v2800
    %v2805 = vld [vmem:[#allocation7] sm:$0x1]
    %v2806 = vld [vmem:[#allocation8] sm:$0x1]
    %v2807 = vsel %vm146, %v2803, 0.0
    %2808 = vadd.xlane.f32.xlu0 %v2807
    %v2809 = vpop.xlane.xlu0 %2808
    %v2810 = vsel %vm146, %v2804, 0.0
    %2811 = vadd.xlane.f32.xlu0 %v2810
    %v2812 = vpop.xlane.xlu0 %2811
    %v2813 = vmul.f32 %v2809, %v153
    %v2814 = vmul.f32 %v2812, %v153
    %v2815 = vsub.f32 %v2803, %v2813
    %v2816 = vsub.f32 %v2804, %v2814
    %v2817 = vmul.f32 %v2815, %v2815
    %v2818 = vmul.f32 %v2816, %v2816
    %v2819 = vsel %vm146, %v2817, 0.0
    %2820 = vadd.xlane.f32.xlu0 %v2819
    %v2821 = vpop.xlane.xlu0 %2820
    %v2822 = vsel %vm146, %v2818, 0.0
    %2823 = vadd.xlane.f32.xlu0 %v2822
    %v2824 = vpop.xlane.xlu0 %2823
    %v2825 = vmul.f32 %v2821, %v153
    %v2826 = vmul.f32 %v2824, %v153
    %v2827 = vadd.f32 %v2825, 1e-05
    %v2828 = vadd.f32 %v2826, 1e-05
    %v2829 = vrsqrt.pop %v2827
    %v2830 = vrsqrt.pop %v2828
    %v2831 = vmul.f32 %v2815, %v2829
    %v2832 = vmul.f32 %v2816, %v2830
    %v2834 = vlaneseq
    %v2835 = vshrl.u32 %v2834, 7
    %v2836 = vsub.s32 0, %v2835
    %v2837 = vrot.slane %v2805, %v2836
    %v2839 = vmul.f32 %v2831, %v2837
    %v2840 = vmul.f32 %v2832, %v2837
    %v2842 = vlaneseq
    %v2843 = vshrl.u32 %v2842, 7
    %v2844 = vsub.s32 0, %v2843
    %v2845 = vrot.slane %v2806, %v2844
    %v2847 = vadd.f32 %v2839, %v2845
    %v2848 = vadd.f32 %v2840, %v2845
    %v2849 = vpack.c.bf16 %v2848, %v2847
    %v2850 = vld [vmem:[%s11] sm:$0xf]
    %v2851 = vld [vmem:[%s11 + $0x4] sm:$0xf]
    %v2852 = vld [vmem:[%s11 + $0x8] sm:$0xf]
    %v2853 = vld [vmem:[%s11 + $0xc] sm:$0xf]
    %v2854 = vld [vmem:[%s12] sm:$0x1]
    %v2856 = vlaneseq
    %v2857 = vshrl.u32 %v2856, 7
    %v2858 = vsub.s32 0, %v2857
    %v2859 = vrot.slane %v2854, %v2858
    %v2865 = vunpack.c.l.b16 %v2850
    %v2866 = vunpack.c.l.b16 %v2851
    %v2867 = vunpack.c.l.b16 %v2852
    %v2868 = vunpack.c.l.b16 %v2853
    %v2869 = vpack.c.b16 %v2866, %v2865
    %v2870 = vpack.c.b16 %v2868, %v2867
    %v2874 = vsel %vm146, %v2849, 0
    %2876 = vmatprep.subr.bf16.mxu0 0
    %2877 = vmatpush1.bf16.msra.mxu0 %v2869
    %2878 = vmatprep.subr.bf16.mxu0 0
    %2879 = vmatpush1.bf16.msra.mxu0 %v2870
    %2880 = vmatprep.subr.bf16.mxu0 0
    %2881 = vmatpush1.bf16.msra.mxu0 0
    %2882 = vmatprep.subr.bf16.mxu0 0
    %2883 = vmatpush1.bf16.msra.mxu0 0
    %2884 = vmatprep.subr.bf16.mxu0 0
    %2885 = vmatpush1.bf16.msra.mxu0 0
    %2886 = vmatprep.subr.bf16.mxu0 0
    %2887 = vmatpush1.bf16.msra.mxu0 0
    %2888 = vmatprep.subr.bf16.mxu0 0
    %2889 = vmatpush1.bf16.msra.mxu0 0
    %2890 = vmatprep.subr.bf16.mxu0 0
    %2891 = vmatpush1.bf16.msra.mxu0 0
    %2892 = vmatprep.subr.bf16.mxu0 0
    %2893 = vmatpush1.bf16.msra.mxu0 0
    %2894 = vmatprep.subr.bf16.mxu0 0
    %2895 = vmatpush1.bf16.msra.mxu0 0
    %2896 = vmatprep.subr.bf16.mxu0 0
    %2897 = vmatpush1.bf16.msra.mxu0 0
    %2898 = vmatprep.subr.bf16.mxu0 0
    %2899 = vmatpush1.bf16.msra.mxu0 0
    %2900 = vmatprep.subr.bf16.mxu0 0
    %2901 = vmatpush1.bf16.msra.mxu0 0
    %2902 = vmatprep.subr.bf16.mxu0 0
    %2903 = vmatpush1.bf16.msra.mxu0 0
    %2904 = vmatprep.subr.bf16.mxu0 0
    %2905 = vmatpush1.bf16.msra.mxu0 0
    %2906 = vmatprep.subr.bf16.mxu0 0
    %2907 = vmatpush1.bf16.msra.mxu0 0
    %2908 = vmatprep.mubr.bf16.mxu0 0
    %2909 = vmatmul.mubr.bf16.gmra.mrb[0].mxu0 %v2874
    %v2910 = vpop.f32.mrb[0].mxu0
    %v2911 = vadd.f32 %v2859, %v2910
    %v2912 = vpop.f32.mrb[0].mxu0
    %v2913 = vpop.f32.mrb[0].mxu0
    %v2914 = vadd.f32 %v2859, %v2913
    %v2915 = vpop.f32.mrb[0].mxu0
    %2916 = vdwg.mxu0
    %v2917 = vmul.f32 %v2911, 1.702
    %v2918 = vmul.f32 %v2914, 1.702
    %v2919 = vxor.u32 %v2917, 2147483648
    %v2920 = vxor.u32 %v2918, 2147483648
    %v2921 = vmul.f32 %v2919, 1.442695
    %v2922 = vpow.pop %v2921
    %v2923 = vmul.f32 %v2920, 1.442695
    %v2924 = vpow.pop %v2923
    %v2925 = vadd.f32 %v2922, 1.0
    %v2926 = vadd.f32 %v2924, 1.0
    %v2927 = vrcp.pop %v2925
    %v2928 = vmul.f32 1.0, %v2927
    %v2929 = vrcp.pop %v2926
    %v2930 = vmul.f32 1.0, %v2929
    %v2931 = vmul.f32 %v2911, %v2928
    %v2932 = vmul.f32 %v2914, %v2930
    %v2933 = vpack.c.bf16 %v2932, %v2931
    %v2934 = vld [vmem:[%s13] sm:$0xf]
    %v2935 = vld [vmem:[%s13 + $0x4] sm:$0xf]
    %v2936 = vld [vmem:[%s13 + $0x8] sm:$0xf]
    %v2937 = vld [vmem:[%s13 + $0xc] sm:$0xf]
    %v2938 = vld [vmem:[%s13 + $0x10] sm:$0xf]
    %v2939 = vld [vmem:[%s13 + $0x14] sm:$0xf]
    %v2940 = vld [vmem:[%s13 + $0x18] sm:$0xf]
    %v2941 = vld [vmem:[%s13 + $0x1c] sm:$0xf]
    %v2942 = vld [vmem:[%s14] sm:$0x1]
    %v2944 = vlaneseq
    %v2945 = vshrl.u32 %v2944, 7
    %v2946 = vsub.s32 0, %v2945
    %v2947 = vrot.slane %v2942, %v2946
    %v2957 = vunpack.c.l.b16 %v2934
    %v2958 = vunpack.c.l.b16 %v2935
    %v2959 = vunpack.c.l.b16 %v2936
    %v2960 = vunpack.c.l.b16 %v2937
    %v2961 = vunpack.c.l.b16 %v2938
    %v2962 = vunpack.c.l.b16 %v2939
    %v2963 = vunpack.c.l.b16 %v2940
    %v2964 = vunpack.c.l.b16 %v2941
    %v2965 = vpack.c.b16 %v2958, %v2957
    %v2966 = vpack.c.b16 %v2960, %v2959
    %v2967 = vpack.c.b16 %v2962, %v2961
    %v2968 = vpack.c.b16 %v2964, %v2963
    %vm2973 = vcmask 523264
    %v2975 = vsel %vm2973, %v2933, 0
    %2977 = vmatprep.subr.bf16.mxu0 0
    %2978 = vmatpush1.bf16.msra.mxu0 %v2965
    %2979 = vmatprep.subr.bf16.mxu0 0
    %2980 = vmatpush1.bf16.msra.mxu0 %v2966
    %2981 = vmatprep.subr.bf16.mxu0 0
    %2982 = vmatpush1.bf16.msra.mxu0 %v2967
    %2983 = vmatprep.subr.bf16.mxu0 0
    %2984 = vmatpush1.bf16.msra.mxu0 %v2968
    %2985 = vmatprep.subr.bf16.mxu0 0
    %2986 = vmatpush1.bf16.msra.mxu0 0
    %2987 = vmatprep.subr.bf16.mxu0 0
    %2988 = vmatpush1.bf16.msra.mxu0 0
    %2989 = vmatprep.subr.bf16.mxu0 0
    %2990 = vmatpush1.bf16.msra.mxu0 0
    %2991 = vmatprep.subr.bf16.mxu0 0
    %2992 = vmatpush1.bf16.msra.mxu0 0
    %2993 = vmatprep.subr.bf16.mxu0 0
    %2994 = vmatpush1.bf16.msra.mxu0 0
    %2995 = vmatprep.subr.bf16.mxu0 0
    %2996 = vmatpush1.bf16.msra.mxu0 0
    %2997 = vmatprep.subr.bf16.mxu0 0
    %2998 = vmatpush1.bf16.msra.mxu0 0
    %2999 = vmatprep.subr.bf16.mxu0 0
    %3000 = vmatpush1.bf16.msra.mxu0 0
    %3001 = vmatprep.subr.bf16.mxu0 0
    %3002 = vmatpush1.bf16.msra.mxu0 0
    %3003 = vmatprep.subr.bf16.mxu0 0
    %3004 = vmatpush1.bf16.msra.mxu0 0
    %3005 = vmatprep.subr.bf16.mxu0 0
    %3006 = vmatpush1.bf16.msra.mxu0 0
    %3007 = vmatprep.subr.bf16.mxu0 0
    %3008 = vmatpush1.bf16.msra.mxu0 0
    %3009 = vmatprep.mubr.bf16.mxu0 0
    %3010 = vmatmul.mubr.bf16.gmra.mrb[0].mxu0 %v2975
    %v3011 = vpop.f32.mrb[0].mxu0
    %v3012 = vadd.f32 %v2947, %v3011
    %v3013 = vpop.f32.mrb[0].mxu0
    %v3014 = vpop.f32.mrb[0].mxu0
    %v3015 = vadd.f32 %v2947, %v3014
    %v3016 = vpop.f32.mrb[0].mxu0
    %3017 = vdwg.mxu0
    %v3018 = vadd.f32 %v2803, %v3012
    %v3019 = vadd.f32 %v2804, %v3015
    %s3020 = scalar_lea.vmem %s3, 1
    %v3021 = vld [vmem:[%s3020] sm:$0x1]
    %s3022 = scalar_lea.vmem %s4, 1
    %v3023 = vld [vmem:[%s3022] sm:$0x1]
    %v3024 = vsel %vm146, %v3018, 0.0
    %3025 = vadd.xlane.f32.xlu0 %v3024
    %v3026 = vpop.xlane.xlu0 %3025
    %v3027 = vsel %vm146, %v3019, 0.0
    %3028 = vadd.xlane.f32.xlu0 %v3027
    %v3029 = vpop.xlane.xlu0 %3028
    %v3030 = vmul.f32 %v3026, %v153
    %v3031 = vmul.f32 %v3029, %v153
    %v3032 = vsub.f32 %v3018, %v3030
    %v3033 = vsub.f32 %v3019, %v3031
    %v3034 = vmul.f32 %v3032, %v3032
    %v3035 = vmul.f32 %v3033, %v3033
    %v3036 = vsel %vm146, %v3034, 0.0
    %3037 = vadd.xlane.f32.xlu0 %v3036
    %v3038 = vpop.xlane.xlu0 %3037
    %v3039 = vsel %vm146, %v3035, 0.0
    %3040 = vadd.xlane.f32.xlu0 %v3039
    %v3041 = vpop.xlane.xlu0 %3040
    %v3042 = vmul.f32 %v3038, %v153
    %v3043 = vmul.f32 %v3041, %v153
    %v3044 = vadd.f32 %v3042, 1e-05
    %v3045 = vadd.f32 %v3043, 1e-05
    %v3046 = vrsqrt.pop %v3044
    %v3047 = vrsqrt.pop %v3045
    %v3048 = vmul.f32 %v3032, %v3046
    %v3049 = vmul.f32 %v3033, %v3047
    %v3051 = vlaneseq
    %v3052 = vshrl.u32 %v3051, 7
    %v3053 = vsub.s32 0, %v3052
    %v3054 = vrot.slane %v3021, %v3053
    %v3056 = vmul.f32 %v3048, %v3054
    %v3057 = vmul.f32 %v3049, %v3054
    %v3059 = vlaneseq
    %v3060 = vshrl.u32 %v3059, 7
    %v3061 = vsub.s32 0, %v3060
    %v3062 = vrot.slane %v3023, %v3061
    %v3064 = vadd.f32 %v3056, %v3062
    %v3065 = vadd.f32 %v3057, %v3062
    %v3066 = vpack.c.bf16 %v3065, %v3064
    %s3067 = scalar_lea.vmem %s5, 16
    %v3068 = vld [vmem:[%s3067] sm:$0xf]
    %v3069 = vld [vmem:[%s3067 + $0x4] sm:$0xf]
    %v3070 = vld [vmem:[%s3067 + $0x8] sm:$0xf]
    %v3071 = vld [vmem:[%s3067 + $0xc] sm:$0xf]
    %s3072 = scalar_lea.vmem [#allocation2], 1
    %v3073 = vld [vmem:[%s3072] sm:$0x1]
    %v3075 = vlaneseq
    %v3076 = vshrl.u32 %v3075, 7
    %v3077 = vsub.s32 0, %v3076
    %v3078 = vrot.slane %v3073, %v3077
    %v3084 = vunpack.c.l.b16 %v3068
    %v3085 = vunpack.c.l.b16 %v3069
    %v3086 = vunpack.c.l.b16 %v3070
    %v3087 = vunpack.c.l.b16 %v3071
    %v3088 = vpack.c.b16 %v3085, %v3084
    %v3089 = vpack.c.b16 %v3087, %v3086
    %v3093 = vsel %vm146, %v3066, 0
    %3095 = vmatprep.subr.bf16.mxu0 0
    %3096 = vmatpush1.bf16.msra.mxu0 %v3088
    %3097 = vmatprep.subr.bf16.mxu0 0
    %3098 = vmatpush1.bf16.msra.mxu0 %v3089
    %3099 = vmatprep.subr.bf16.mxu0 0
    %3100 = vmatpush1.bf16.msra.mxu0 0
    %3101 = vmatprep.subr.bf16.mxu0 0
    %3102 = vmatpush1.bf16.msra.mxu0 0
    %3103 = vmatprep.subr.bf16.mxu0 0
    %3104 = vmatpush1.bf16.msra.mxu0 0
    %3105 = vmatprep.subr.bf16.mxu0 0
    %3106 = vmatpush1.bf16.msra.mxu0 0
    %3107 = vmatprep.subr.bf16.mxu0 0
    %3108 = vmatpush1.bf16.msra.mxu0 0
    %3109 = vmatprep.subr.bf16.mxu0 0
    %3110 = vmatpush1.bf16.msra.mxu0 0
    %3111 = vmatprep.subr.bf16.mxu0 0
    %3112 = vmatpush1.bf16.msra.mxu0 0
    %3113 = vmatprep.subr.bf16.mxu0 0
    %3114 = vmatpush1.bf16.msra.mxu0 0
    %3115 = vmatprep.subr.bf16.mxu0 0
    %3116 = vmatpush1.bf16.msra.mxu0 0
    %3117 = vmatprep.subr.bf16.mxu0 0
    %3118 = vmatpush1.bf16.msra.mxu0 0
    %3119 = vmatprep.subr.bf16.mxu0 0
    %3120 = vmatpush1.bf16.msra.mxu0 0
    %3121 = vmatprep.subr.bf16.mxu0 0
    %3122 = vmatpush1.bf16.msra.mxu0 0
    %3123 = vmatprep.subr.bf16.mxu0 0
    %3124 = vmatpush1.bf16.msra.mxu0 0
    %3125 = vmatprep.subr.bf16.mxu0 0
    %3126 = vmatpush1.bf16.msra.mxu0 0
    %3127 = vmatprep.mubr.bf16.mxu0 0
    %3128 = vmatmul.mubr.bf16.gmra.mrb[0].mxu0 %v3093
    %v3129 = vpop.f32.mrb[0].mxu0
    %v3130 = vadd.f32 %v3078, %v3129
    %v3131 = vpop.f32.mrb[0].mxu0
    %v3132 = vpop.f32.mrb[0].mxu0
    %v3133 = vadd.f32 %v3078, %v3132
    %v3134 = vpop.f32.mrb[0].mxu0
    %3135 = vdwg.mxu0
    %3138 = vrot.lane.b32.xlu0 %v3130, 120
    %v3139 = vpop.permute.xlu0 %3138
    %3140 = vrot.lane.b32.xlu0 %v3133, 120
    %v3141 = vpop.permute.xlu0 %3140
    %3144 = vrot.lane.b32.xlu0 %v3130, 112
    %v3145 = vpop.permute.xlu0 %3144
    %3146 = vrot.lane.b32.xlu0 %v3133, 112
    %v3147 = vpop.permute.xlu0 %3146
    %3150 = vrot.lane.b32.xlu0 %v3130, 104
    %v3151 = vpop.permute.xlu0 %3150
    %3152 = vrot.lane.b32.xlu0 %v3133, 104
    %v3153 = vpop.permute.xlu0 %3152
    %v3156 = vcombine.low %v3130, %v3145
    %v3157 = vcombine.high %v3130, %v3145
    %v3159 = vunpack.c.l.s4 1983009808
    %v3160 = vunpack.c.0.s8 %v3159
    %v3161 = vlaneseq
    %v3162 = vshrl.u32 %v3161, 7
    %v3163 = vsub.s32 %v3160, %v3162
    %v3164 = vrot.slane %v3156, %v3163
    %v3166 = vunpack.c.l.s4 1983009808
    %v3167 = vunpack.c.0.s8 %v3166
    %v3168 = vlaneseq
    %v3169 = vshrl.u32 %v3168, 7
    %v3170 = vsub.s32 %v3167, %v3169
    %v3171 = vrot.slane %v3157, %v3170
    %v3172 = vcombine.low %v3139, %v3151
    %v3173 = vcombine.high %v3139, %v3151
    %v3175 = vunpack.c.l.s4 1983009808
    %v3176 = vunpack.c.0.s8 %v3175
    %v3177 = vlaneseq
    %v3178 = vshrl.u32 %v3177, 7
    %v3179 = vsub.s32 %v3176, %v3178
    %v3180 = vrot.slane %v3172, %v3179
    %v3182 = vunpack.c.l.s4 1983009808
    %v3183 = vunpack.c.0.s8 %v3182
    %v3184 = vlaneseq
    %v3185 = vshrl.u32 %v3184, 7
    %v3186 = vsub.s32 %v3183, %v3185
    %v3187 = vrot.slane %v3173, %v3186
    %v3188 = vcombine.low %v3164, %v3180
    %v3189 = vcombine.high %v3164, %v3180
    %v3191 = vunpack.c.l.s4 1934713408
    %v3192 = vunpack.c.0.s8 %v3191
    %v3193 = vlaneseq
    %v3194 = vshrl.u32 %v3193, 7
    %v3195 = vsub.s32 %v3192, %v3194
    %v3196 = vrot.slane %v3188, %v3195
    %v3198 = vunpack.c.l.s4 1934713408
    %v3199 = vunpack.c.0.s8 %v3198
    %v3200 = vlaneseq
    %v3201 = vshrl.u32 %v3200, 7
    %v3202 = vsub.s32 %v3199, %v3201
    %v3203 = vrot.slane %v3189, %v3202
    %v3204 = vcombine.low %v3171, %v3187
    %v3205 = vcombine.high %v3171, %v3187
    %v3207 = vunpack.c.l.s4 1934713408
    %v3208 = vunpack.c.0.s8 %v3207
    %v3209 = vlaneseq
    %v3210 = vshrl.u32 %v3209, 7
    %v3211 = vsub.s32 %v3208, %v3210
    %v3212 = vrot.slane %v3204, %v3211
    %v3214 = vunpack.c.l.s4 1934713408
    %v3215 = vunpack.c.0.s8 %v3214
    %v3216 = vlaneseq
    %v3217 = vshrl.u32 %v3216, 7
    %v3218 = vsub.s32 %v3215, %v3217
    %v3219 = vrot.slane %v3205, %v3218
    %v3220 = vcombine.high %v3196, 0.0
    %v3221 = vcombine.high %v3203, 0.0
    %v3222 = vcombine.high %v3212, 0.0
    %v3223 = vcombine.high %v3219, 0.0
    %v3224 = vcombine.low %v3133, %v3147
    %v3225 = vcombine.high %v3133, %v3147
    %v3227 = vunpack.c.l.s4 1983009808
    %v3228 = vunpack.c.0.s8 %v3227
    %v3229 = vlaneseq
    %v3230 = vshrl.u32 %v3229, 7
    %v3231 = vsub.s32 %v3228, %v3230
    %v3232 = vrot.slane %v3224, %v3231
    %v3234 = vunpack.c.l.s4 1983009808
    %v3235 = vunpack.c.0.s8 %v3234
    %v3236 = vlaneseq
    %v3237 = vshrl.u32 %v3236, 7
    %v3238 = vsub.s32 %v3235, %v3237
    %v3239 = vrot.slane %v3225, %v3238
    %v3240 = vcombine.low %v3141, %v3153
    %v3241 = vcombine.high %v3141, %v3153
    %v3243 = vunpack.c.l.s4 1983009808
    %v3244 = vunpack.c.0.s8 %v3243
    %v3245 = vlaneseq
    %v3246 = vshrl.u32 %v3245, 7
    %v3247 = vsub.s32 %v3244, %v3246
    %v3248 = vrot.slane %v3240, %v3247
    %v3250 = vunpack.c.l.s4 1983009808
    %v3251 = vunpack.c.0.s8 %v3250
    %v3252 = vlaneseq
    %v3253 = vshrl.u32 %v3252, 7
    %v3254 = vsub.s32 %v3251, %v3253
    %v3255 = vrot.slane %v3241, %v3254
    %v3256 = vcombine.low %v3232, %v3248
    %v3257 = vcombine.high %v3232, %v3248
    %v3259 = vunpack.c.l.s4 1934713408
    %v3260 = vunpack.c.0.s8 %v3259
    %v3261 = vlaneseq
    %v3262 = vshrl.u32 %v3261, 7
    %v3263 = vsub.s32 %v3260, %v3262
    %v3264 = vrot.slane %v3256, %v3263
    %v3266 = vunpack.c.l.s4 1934713408
    %v3267 = vunpack.c.0.s8 %v3266
    %v3268 = vlaneseq
    %v3269 = vshrl.u32 %v3268, 7
    %v3270 = vsub.s32 %v3267, %v3269
    %v3271 = vrot.slane %v3257, %v3270
    %v3272 = vcombine.low %v3239, %v3255
    %v3273 = vcombine.high %v3239, %v3255
    %v3275 = vunpack.c.l.s4 1934713408
    %v3276 = vunpack.c.0.s8 %v3275
    %v3277 = vlaneseq
    %v3278 = vshrl.u32 %v3277, 7
    %v3279 = vsub.s32 %v3276, %v3278
    %v3280 = vrot.slane %v3272, %v3279
    %v3282 = vunpack.c.l.s4 1934713408
    %v3283 = vunpack.c.0.s8 %v3282
    %v3284 = vlaneseq
    %v3285 = vshrl.u32 %v3284, 7
    %v3286 = vsub.s32 %v3283, %v3285
    %v3287 = vrot.slane %v3273, %v3286
    %v3288 = vcombine.high %v3264, 0.0
    %v3289 = vcombine.high %v3271, 0.0
    %v3290 = vcombine.high %v3280, 0.0
    %v3291 = vcombine.high %v3287, 0.0
    %v3292 = vcombine.low %v3196, %v3203
    %v3294 = vunpack.c.l.s4 1983009808
    %v3295 = vunpack.c.0.s8 %v3294
    %v3296 = vlaneseq
    %v3297 = vshrl.u32 %v3296, 7
    %v3298 = vsub.s32 %v3295, %v3297
    %v3299 = vrot.slane %v3292, %v3298
    %v3300 = vcombine.low %v3220, %v3221
    %v3302 = vunpack.c.l.s4 1983009808
    %v3303 = vunpack.c.0.s8 %v3302
    %v3304 = vlaneseq
    %v3305 = vshrl.u32 %v3304, 7
    %v3306 = vsub.s32 %v3303, %v3305
    %v3307 = vrot.slane %v3300, %v3306
    %v3308 = vcombine.low %v3212, %v3219
    %v3310 = vunpack.c.l.s4 1983009808
    %v3311 = vunpack.c.0.s8 %v3310
    %v3312 = vlaneseq
    %v3313 = vshrl.u32 %v3312, 7
    %v3314 = vsub.s32 %v3311, %v3313
    %v3315 = vrot.slane %v3308, %v3314
    %v3316 = vcombine.low %v3222, %v3223
    %v3318 = vunpack.c.l.s4 1983009808
    %v3319 = vunpack.c.0.s8 %v3318
    %v3320 = vlaneseq
    %v3321 = vshrl.u32 %v3320, 7
    %v3322 = vsub.s32 %v3319, %v3321
    %v3323 = vrot.slane %v3316, %v3322
    %v3324 = vcombine.low %v3299, %v3307
    %v3325 = vcombine.high %v3299, %v3307
    %v3327 = vunpack.c.l.s4 1934713408
    %v3328 = vunpack.c.0.s8 %v3327
    %v3329 = vlaneseq
    %v3330 = vshrl.u32 %v3329, 7
    %v3331 = vsub.s32 %v3328, %v3330
    %v3332 = vrot.slane %v3324, %v3331
    %v3334 = vunpack.c.l.s4 1934713408
    %v3335 = vunpack.c.0.s8 %v3334
    %v3336 = vlaneseq
    %v3337 = vshrl.u32 %v3336, 7
    %v3338 = vsub.s32 %v3335, %v3337
    %v3339 = vrot.slane %v3325, %v3338
    %v3340 = vcombine.low %v3315, %v3323
    %v3341 = vcombine.high %v3315, %v3323
    %v3343 = vunpack.c.l.s4 1934713408
    %v3344 = vunpack.c.0.s8 %v3343
    %v3345 = vlaneseq
    %v3346 = vshrl.u32 %v3345, 7
    %v3347 = vsub.s32 %v3344, %v3346
    %v3348 = vrot.slane %v3340, %v3347
    %v3350 = vunpack.c.l.s4 1934713408
    %v3351 = vunpack.c.0.s8 %v3350
    %v3352 = vlaneseq
    %v3353 = vshrl.u32 %v3352, 7
    %v3354 = vsub.s32 %v3351, %v3353
    %v3355 = vrot.slane %v3341, %v3354
    %v3356 = vcombine.low %v3332, %v3348
    %v3357 = vcombine.high %v3332, %v3348
    %v3358 = vcombine.low %v3339, %v3355
    %v3359 = vcombine.high %v3339, %v3355
    %v3360 = vcombine.low %v3264, %v3271
    %v3362 = vunpack.c.l.s4 1983009808
    %v3363 = vunpack.c.0.s8 %v3362
    %v3364 = vlaneseq
    %v3365 = vshrl.u32 %v3364, 7
    %v3366 = vsub.s32 %v3363, %v3365
    %v3367 = vrot.slane %v3360, %v3366
    %v3368 = vcombine.low %v3288, %v3289
    %v3370 = vunpack.c.l.s4 1983009808
    %v3371 = vunpack.c.0.s8 %v3370
    %v3372 = vlaneseq
    %v3373 = vshrl.u32 %v3372, 7
    %v3374 = vsub.s32 %v3371, %v3373
    %v3375 = vrot.slane %v3368, %v3374
    %v3376 = vcombine.low %v3280, %v3287
    %v3378 = vunpack.c.l.s4 1983009808
    %v3379 = vunpack.c.0.s8 %v3378
    %v3380 = vlaneseq
    %v3381 = vshrl.u32 %v3380, 7
    %v3382 = vsub.s32 %v3379, %v3381
    %v3383 = vrot.slane %v3376, %v3382
    %v3384 = vcombine.low %v3290, %v3291
    %v3386 = vunpack.c.l.s4 1983009808
    %v3387 = vunpack.c.0.s8 %v3386
    %v3388 = vlaneseq
    %v3389 = vshrl.u32 %v3388, 7
    %v3390 = vsub.s32 %v3387, %v3389
    %v3391 = vrot.slane %v3384, %v3390
    %v3392 = vcombine.low %v3367, %v3375
    %v3393 = vcombine.high %v3367, %v3375
    %v3395 = vunpack.c.l.s4 1934713408
    %v3396 = vunpack.c.0.s8 %v3395
    %v3397 = vlaneseq
    %v3398 = vshrl.u32 %v3397, 7
    %v3399 = vsub.s32 %v3396, %v3398
    %v3400 = vrot.slane %v3392, %v3399
    %v3402 = vunpack.c.l.s4 1934713408
    %v3403 = vunpack.c.0.s8 %v3402
    %v3404 = vlaneseq
    %v3405 = vshrl.u32 %v3404, 7
    %v3406 = vsub.s32 %v3403, %v3405
    %v3407 = vrot.slane %v3393, %v3406
    %v3408 = vcombine.low %v3383, %v3391
    %v3409 = vcombine.high %v3383, %v3391
    %v3411 = vunpack.c.l.s4 1934713408
    %v3412 = vunpack.c.0.s8 %v3411
    %v3413 = vlaneseq
    %v3414 = vshrl.u32 %v3413, 7
    %v3415 = vsub.s32 %v3412, %v3414
    %v3416 = vrot.slane %v3408, %v3415
    %v3418 = vunpack.c.l.s4 1934713408
    %v3419 = vunpack.c.0.s8 %v3418
    %v3420 = vlaneseq
    %v3421 = vshrl.u32 %v3420, 7
    %v3422 = vsub.s32 %v3419, %v3421
    %v3423 = vrot.slane %v3409, %v3422
    %v3424 = vcombine.low %v3400, %v3416
    %v3425 = vcombine.high %v3400, %v3416
    %v3426 = vcombine.low %v3407, %v3423
    %v3427 = vcombine.high %v3407, %v3423
    %3428 = vrot.lane.b32.xlu0 %v3130, 96
    %v3429 = vpop.permute.xlu0 %3428
    %3430 = vrot.lane.b32.xlu0 %v3133, 96
    %v3431 = vpop.permute.xlu0 %3430
    %3432 = vrot.lane.b32.xlu0 %v3139, 96
    %v3433 = vpop.permute.xlu0 %3432
    %3434 = vrot.lane.b32.xlu0 %v3141, 96
    %v3435 = vpop.permute.xlu0 %3434
    %3436 = vrot.lane.b32.xlu0 %v3145, 96
    %v3437 = vpop.permute.xlu0 %3436
    %3438 = vrot.lane.b32.xlu0 %v3147, 96
    %v3439 = vpop.permute.xlu0 %3438
    %3440 = vrot.lane.b32.xlu0 %v3151, 96
    %v3441 = vpop.permute.xlu0 %3440
    %3442 = vrot.lane.b32.xlu0 %v3153, 96
    %v3443 = vpop.permute.xlu0 %3442
    %v3452 = vcombine.low %v3429, %v3437
    %v3453 = vcombine.high %v3429, %v3437
    %v3455 = vunpack.c.l.s4 1983009808
    %v3456 = vunpack.c.0.s8 %v3455
    %v3457 = vlaneseq
    %v3458 = vshrl.u32 %v3457, 7
    %v3459 = vsub.s32 %v3456, %v3458
    %v3460 = vrot.slane %v3452, %v3459
    %v3462 = vunpack.c.l.s4 1983009808
    %v3463 = vunpack.c.0.s8 %v3462
    %v3464 = vlaneseq
    %v3465 = vshrl.u32 %v3464, 7
    %v3466 = vsub.s32 %v3463, %v3465
    %v3467 = vrot.slane %v3453, %v3466
    %v3468 = vcombine.low %v3433, %v3441
    %v3469 = vcombine.high %v3433, %v3441
    %v3471 = vunpack.c.l.s4 1983009808
    %v3472 = vunpack.c.0.s8 %v3471
    %v3473 = vlaneseq
    %v3474 = vshrl.u32 %v3473, 7
    %v3475 = vsub.s32 %v3472, %v3474
    %v3476 = vrot.slane %v3468, %v3475
    %v3478 = vunpack.c.l.s4 1983009808
    %v3479 = vunpack.c.0.s8 %v3478
    %v3480 = vlaneseq
    %v3481 = vshrl.u32 %v3480, 7
    %v3482 = vsub.s32 %v3479, %v3481
    %v3483 = vrot.slane %v3469, %v3482
    %v3484 = vcombine.low %v3460, %v3476
    %v3485 = vcombine.high %v3460, %v3476
    %v3487 = vunpack.c.l.s4 1934713408
    %v3488 = vunpack.c.0.s8 %v3487
    %v3489 = vlaneseq
    %v3490 = vshrl.u32 %v3489, 7
    %v3491 = vsub.s32 %v3488, %v3490
    %v3492 = vrot.slane %v3484, %v3491
    %v3494 = vunpack.c.l.s4 1934713408
    %v3495 = vunpack.c.0.s8 %v3494
    %v3496 = vlaneseq
    %v3497 = vshrl.u32 %v3496, 7
    %v3498 = vsub.s32 %v3495, %v3497
    %v3499 = vrot.slane %v3485, %v3498
    %v3500 = vcombine.low %v3467, %v3483
    %v3501 = vcombine.high %v3467, %v3483
    %v3503 = vunpack.c.l.s4 1934713408
    %v3504 = vunpack.c.0.s8 %v3503
    %v3505 = vlaneseq
    %v3506 = vshrl.u32 %v3505, 7
    %v3507 = vsub.s32 %v3504, %v3506
    %v3508 = vrot.slane %v3500, %v3507
    %v3510 = vunpack.c.l.s4 1934713408
    %v3511 = vunpack.c.0.s8 %v3510
    %v3512 = vlaneseq
    %v3513 = vshrl.u32 %v3512, 7
    %v3514 = vsub.s32 %v3511, %v3513
    %v3515 = vrot.slane %v3501, %v3514
    %v3516 = vcombine.high %v3492, 0.0
    %v3517 = vcombine.high %v3499, 0.0
    %v3518 = vcombine.high %v3508, 0.0
    %v3519 = vcombine.high %v3515, 0.0
    %v3520 = vcombine.low %v3431, %v3439
    %v3521 = vcombine.high %v3431, %v3439
    %v3523 = vunpack.c.l.s4 1983009808
    %v3524 = vunpack.c.0.s8 %v3523
    %v3525 = vlaneseq
    %v3526 = vshrl.u32 %v3525, 7
    %v3527 = vsub.s32 %v3524, %v3526
    %v3528 = vrot.slane %v3520, %v3527
    %v3530 = vunpack.c.l.s4 1983009808
    %v3531 = vunpack.c.0.s8 %v3530
    %v3532 = vlaneseq
    %v3533 = vshrl.u32 %v3532, 7
    %v3534 = vsub.s32 %v3531, %v3533
    %v3535 = vrot.slane %v3521, %v3534
    %v3536 = vcombine.low %v3435, %v3443
    %v3537 = vcombine.high %v3435, %v3443
    %v3539 = vunpack.c.l.s4 1983009808
    %v3540 = vunpack.c.0.s8 %v3539
    %v3541 = vlaneseq
    %v3542 = vshrl.u32 %v3541, 7
    %v3543 = vsub.s32 %v3540, %v3542
    %v3544 = vrot.slane %v3536, %v3543
    %v3546 = vunpack.c.l.s4 1983009808
    %v3547 = vunpack.c.0.s8 %v3546
    %v3548 = vlaneseq
    %v3549 = vshrl.u32 %v3548, 7
    %v3550 = vsub.s32 %v3547, %v3549
    %v3551 = vrot.slane %v3537, %v3550
    %v3552 = vcombine.low %v3528, %v3544
    %v3553 = vcombine.high %v3528, %v3544
    %v3555 = vunpack.c.l.s4 1934713408
    %v3556 = vunpack.c.0.s8 %v3555
    %v3557 = vlaneseq
    %v3558 = vshrl.u32 %v3557, 7
    %v3559 = vsub.s32 %v3556, %v3558
    %v3560 = vrot.slane %v3552, %v3559
    %v3562 = vunpack.c.l.s4 1934713408
    %v3563 = vunpack.c.0.s8 %v3562
    %v3564 = vlaneseq
    %v3565 = vshrl.u32 %v3564, 7
    %v3566 = vsub.s32 %v3563, %v3565
    %v3567 = vrot.slane %v3553, %v3566
    %v3568 = vcombine.low %v3535, %v3551
    %v3569 = vcombine.high %v3535, %v3551
    %v3571 = vunpack.c.l.s4 1934713408
    %v3572 = vunpack.c.0.s8 %v3571
    %v3573 = vlaneseq
    %v3574 = vshrl.u32 %v3573, 7
    %v3575 = vsub.s32 %v3572, %v3574
    %v3576 = vrot.slane %v3568, %v3575
    %v3578 = vunpack.c.l.s4 1934713408
    %v3579 = vunpack.c.0.s8 %v3578
    %v3580 = vlaneseq
    %v3581 = vshrl.u32 %v3580, 7
    %v3582 = vsub.s32 %v3579, %v3581
    %v3583 = vrot.slane %v3569, %v3582
    %v3584 = vcombine.high %v3560, 0.0
    %v3585 = vcombine.high %v3567, 0.0
    %v3586 = vcombine.high %v3576, 0.0
    %v3587 = vcombine.high %v3583, 0.0
    %v3588 = vcombine.low %v3492, %v3499
    %v3590 = vunpack.c.l.s4 1983009808
    %v3591 = vunpack.c.0.s8 %v3590
    %v3592 = vlaneseq
    %v3593 = vshrl.u32 %v3592, 7
    %v3594 = vsub.s32 %v3591, %v3593
    %v3595 = vrot.slane %v3588, %v3594
    %v3596 = vcombine.low %v3516, %v3517
    %v3598 = vunpack.c.l.s4 1983009808
    %v3599 = vunpack.c.0.s8 %v3598
    %v3600 = vlaneseq
    %v3601 = vshrl.u32 %v3600, 7
    %v3602 = vsub.s32 %v3599, %v3601
    %v3603 = vrot.slane %v3596, %v3602
    %v3604 = vcombine.low %v3508, %v3515
    %v3606 = vunpack.c.l.s4 1983009808
    %v3607 = vunpack.c.0.s8 %v3606
    %v3608 = vlaneseq
    %v3609 = vshrl.u32 %v3608, 7
    %v3610 = vsub.s32 %v3607, %v3609
    %v3611 = vrot.slane %v3604, %v3610
    %v3612 = vcombine.low %v3518, %v3519
    %v3614 = vunpack.c.l.s4 1983009808
    %v3615 = vunpack.c.0.s8 %v3614
    %v3616 = vlaneseq
    %v3617 = vshrl.u32 %v3616, 7
    %v3618 = vsub.s32 %v3615, %v3617
    %v3619 = vrot.slane %v3612, %v3618
    %v3620 = vcombine.low %v3595, %v3603
    %v3621 = vcombine.high %v3595, %v3603
    %v3623 = vunpack.c.l.s4 1934713408
    %v3624 = vunpack.c.0.s8 %v3623
    %v3625 = vlaneseq
    %v3626 = vshrl.u32 %v3625, 7
    %v3627 = vsub.s32 %v3624, %v3626
    %v3628 = vrot.slane %v3620, %v3627
    %v3630 = vunpack.c.l.s4 1934713408
    %v3631 = vunpack.c.0.s8 %v3630
    %v3632 = vlaneseq
    %v3633 = vshrl.u32 %v3632, 7
    %v3634 = vsub.s32 %v3631, %v3633
    %v3635 = vrot.slane %v3621, %v3634
    %v3636 = vcombine.low %v3611, %v3619
    %v3637 = vcombine.high %v3611, %v3619
    %v3639 = vunpack.c.l.s4 1934713408
    %v3640 = vunpack.c.0.s8 %v3639
    %v3641 = vlaneseq
    %v3642 = vshrl.u32 %v3641, 7
    %v3643 = vsub.s32 %v3640, %v3642
    %v3644 = vrot.slane %v3636, %v3643
    %v3646 = vunpack.c.l.s4 1934713408
    %v3647 = vunpack.c.0.s8 %v3646
    %v3648 = vlaneseq
    %v3649 = vshrl.u32 %v3648, 7
    %v3650 = vsub.s32 %v3647, %v3649
    %v3651 = vrot.slane %v3637, %v3650
    %v3652 = vcombine.low %v3628, %v3644
    %v3653 = vcombine.high %v3628, %v3644
    %v3654 = vcombine.low %v3635, %v3651
    %v3655 = vcombine.high %v3635, %v3651
    %v3656 = vcombine.low %v3560, %v3567
    %v3658 = vunpack.c.l.s4 1983009808
    %v3659 = vunpack.c.0.s8 %v3658
    %v3660 = vlaneseq
    %v3661 = vshrl.u32 %v3660, 7
    %v3662 = vsub.s32 %v3659, %v3661
    %v3663 = vrot.slane %v3656, %v3662
    %v3664 = vcombine.low %v3584, %v3585
    %v3666 = vunpack.c.l.s4 1983009808
    %v3667 = vunpack.c.0.s8 %v3666
    %v3668 = vlaneseq
    %v3669 = vshrl.u32 %v3668, 7
    %v3670 = vsub.s32 %v3667, %v3669
    %v3671 = vrot.slane %v3664, %v3670
    %v3672 = vcombine.low %v3576, %v3583
    %v3674 = vunpack.c.l.s4 1983009808
    %v3675 = vunpack.c.0.s8 %v3674
    %v3676 = vlaneseq
    %v3677 = vshrl.u32 %v3676, 7
    %v3678 = vsub.s32 %v3675, %v3677
    %v3679 = vrot.slane %v3672, %v3678
    %v3680 = vcombine.low %v3586, %v3587
    %v3682 = vunpack.c.l.s4 1983009808
    %v3683 = vunpack.c.0.s8 %v3682
    %v3684 = vlaneseq
    %v3685 = vshrl.u32 %v3684, 7
    %v3686 = vsub.s32 %v3683, %v3685
    %v3687 = vrot.slane %v3680, %v3686
    %v3688 = vcombine.low %v3663, %v3671
    %v3689 = vcombine.high %v3663, %v3671
    %v3691 = vunpack.c.l.s4 1934713408
    %v3692 = vunpack.c.0.s8 %v3691
    %v3693 = vlaneseq
    %v3694 = vshrl.u32 %v3693, 7
    %v3695 = vsub.s32 %v3692, %v3694
    %v3696 = vrot.slane %v3688, %v3695
    %v3698 = vunpack.c.l.s4 1934713408
    %v3699 = vunpack.c.0.s8 %v3698
    %v3700 = vlaneseq
    %v3701 = vshrl.u32 %v3700, 7
    %v3702 = vsub.s32 %v3699, %v3701
    %v3703 = vrot.slane %v3689, %v3702
    %v3704 = vcombine.low %v3679, %v3687
    %v3705 = vcombine.high %v3679, %v3687
    %v3707 = vunpack.c.l.s4 1934713408
    %v3708 = vunpack.c.0.s8 %v3707
    %v3709 = vlaneseq
    %v3710 = vshrl.u32 %v3709, 7
    %v3711 = vsub.s32 %v3708, %v3710
    %v3712 = vrot.slane %v3704, %v3711
    %v3714 = vunpack.c.l.s4 1934713408
    %v3715 = vunpack.c.0.s8 %v3714
    %v3716 = vlaneseq
    %v3717 = vshrl.u32 %v3716, 7
    %v3718 = vsub.s32 %v3715, %v3717
    %v3719 = vrot.slane %v3705, %v3718
    %v3720 = vcombine.low %v3696, %v3712
    %v3721 = vcombine.high %v3696, %v3712
    %v3722 = vcombine.low %v3703, %v3719
    %v3723 = vcombine.high %v3703, %v3719
    %3724 = vrot.lane.b32.xlu0 %v3130, 64
    %v3725 = vpop.permute.xlu0 %3724
    %3726 = vrot.lane.b32.xlu0 %v3133, 64
    %v3727 = vpop.permute.xlu0 %3726
    %3728 = vrot.lane.b32.xlu0 %v3139, 64
    %v3729 = vpop.permute.xlu0 %3728
    %3730 = vrot.lane.b32.xlu0 %v3141, 64
    %v3731 = vpop.permute.xlu0 %3730
    %3732 = vrot.lane.b32.xlu0 %v3145, 64
    %v3733 = vpop.permute.xlu0 %3732
    %3734 = vrot.lane.b32.xlu0 %v3147, 64
    %v3735 = vpop.permute.xlu0 %3734
    %3736 = vrot.lane.b32.xlu0 %v3151, 64
    %v3737 = vpop.permute.xlu0 %3736
    %3738 = vrot.lane.b32.xlu0 %v3153, 64
    %v3739 = vpop.permute.xlu0 %3738
    %v3748 = vcombine.low %v3725, %v3733
    %v3749 = vcombine.high %v3725, %v3733
    %v3751 = vunpack.c.l.s4 1983009808
    %v3752 = vunpack.c.0.s8 %v3751
    %v3753 = vlaneseq
    %v3754 = vshrl.u32 %v3753, 7
    %v3755 = vsub.s32 %v3752, %v3754
    %v3756 = vrot.slane %v3748, %v3755
    %v3758 = vunpack.c.l.s4 1983009808
    %v3759 = vunpack.c.0.s8 %v3758
    %v3760 = vlaneseq
    %v3761 = vshrl.u32 %v3760, 7
    %v3762 = vsub.s32 %v3759, %v3761
    %v3763 = vrot.slane %v3749, %v3762
    %v3764 = vcombine.low %v3729, %v3737
    %v3765 = vcombine.high %v3729, %v3737
    %v3767 = vunpack.c.l.s4 1983009808
    %v3768 = vunpack.c.0.s8 %v3767
    %v3769 = vlaneseq
    %v3770 = vshrl.u32 %v3769, 7
    %v3771 = vsub.s32 %v3768, %v3770
    %v3772 = vrot.slane %v3764, %v3771
    %v3774 = vunpack.c.l.s4 1983009808
    %v3775 = vunpack.c.0.s8 %v3774
    %v3776 = vlaneseq
    %v3777 = vshrl.u32 %v3776, 7
    %v3778 = vsub.s32 %v3775, %v3777
    %v3779 = vrot.slane %v3765, %v3778
    %v3780 = vcombine.low %v3756, %v3772
    %v3781 = vcombine.high %v3756, %v3772
    %v3783 = vunpack.c.l.s4 1934713408
    %v3784 = vunpack.c.0.s8 %v3783
    %v3785 = vlaneseq
    %v3786 = vshrl.u32 %v3785, 7
    %v3787 = vsub.s32 %v3784, %v3786
    %v3788 = vrot.slane %v3780, %v3787
    %v3790 = vunpack.c.l.s4 1934713408
    %v3791 = vunpack.c.0.s8 %v3790
    %v3792 = vlaneseq
    %v3793 = vshrl.u32 %v3792, 7
    %v3794 = vsub.s32 %v3791, %v3793
    %v3795 = vrot.slane %v3781, %v3794
    %v3796 = vcombine.low %v3763, %v3779
    %v3797 = vcombine.high %v3763, %v3779
    %v3799 = vunpack.c.l.s4 1934713408
    %v3800 = vunpack.c.0.s8 %v3799
    %v3801 = vlaneseq
    %v3802 = vshrl.u32 %v3801, 7
    %v3803 = vsub.s32 %v3800, %v3802
    %v3804 = vrot.slane %v3796, %v3803
    %v3806 = vunpack.c.l.s4 1934713408
    %v3807 = vunpack.c.0.s8 %v3806
    %v3808 = vlaneseq
    %v3809 = vshrl.u32 %v3808, 7
    %v3810 = vsub.s32 %v3807, %v3809
    %v3811 = vrot.slane %v3797, %v3810
    %v3812 = vcombine.high %v3788, 0.0
    %v3813 = vcombine.high %v3795, 0.0
    %v3814 = vcombine.high %v3804, 0.0
    %v3815 = vcombine.high %v3811, 0.0
    %v3816 = vcombine.low %v3727, %v3735
    %v3817 = vcombine.high %v3727, %v3735
    %v3819 = vunpack.c.l.s4 1983009808
    %v3820 = vunpack.c.0.s8 %v3819
    %v3821 = vlaneseq
    %v3822 = vshrl.u32 %v3821, 7
    %v3823 = vsub.s32 %v3820, %v3822
    %v3824 = vrot.slane %v3816, %v3823
    %v3826 = vunpack.c.l.s4 1983009808
    %v3827 = vunpack.c.0.s8 %v3826
    %v3828 = vlaneseq
    %v3829 = vshrl.u32 %v3828, 7
    %v3830 = vsub.s32 %v3827, %v3829
    %v3831 = vrot.slane %v3817, %v3830
    %v3832 = vcombine.low %v3731, %v3739
    %v3833 = vcombine.high %v3731, %v3739
    %v3835 = vunpack.c.l.s4 1983009808
    %v3836 = vunpack.c.0.s8 %v3835
    %v3837 = vlaneseq
    %v3838 = vshrl.u32 %v3837, 7
    %v3839 = vsub.s32 %v3836, %v3838
    %v3840 = vrot.slane %v3832, %v3839
    %v3842 = vunpack.c.l.s4 1983009808
    %v3843 = vunpack.c.0.s8 %v3842
    %v3844 = vlaneseq
    %v3845 = vshrl.u32 %v3844, 7
    %v3846 = vsub.s32 %v3843, %v3845
    %v3847 = vrot.slane %v3833, %v3846
    %v3848 = vcombine.low %v3824, %v3840
    %v3849 = vcombine.high %v3824, %v3840
    %v3851 = vunpack.c.l.s4 1934713408
    %v3852 = vunpack.c.0.s8 %v3851
    %v3853 = vlaneseq
    %v3854 = vshrl.u32 %v3853, 7
    %v3855 = vsub.s32 %v3852, %v3854
    %v3856 = vrot.slane %v3848, %v3855
    %v3858 = vunpack.c.l.s4 1934713408
    %v3859 = vunpack.c.0.s8 %v3858
    %v3860 = vlaneseq
    %v3861 = vshrl.u32 %v3860, 7
    %v3862 = vsub.s32 %v3859, %v3861
    %v3863 = vrot.slane %v3849, %v3862
    %v3864 = vcombine.low %v3831, %v3847
    %v3865 = vcombine.high %v3831, %v3847
    %v3867 = vunpack.c.l.s4 1934713408
    %v3868 = vunpack.c.0.s8 %v3867
    %v3869 = vlaneseq
    %v3870 = vshrl.u32 %v3869, 7
    %v3871 = vsub.s32 %v3868, %v3870
    %v3872 = vrot.slane %v3864, %v3871
    %v3874 = vunpack.c.l.s4 1934713408
    %v3875 = vunpack.c.0.s8 %v3874
    %v3876 = vlaneseq
    %v3877 = vshrl.u32 %v3876, 7
    %v3878 = vsub.s32 %v3875, %v3877
    %v3879 = vrot.slane %v3865, %v3878
    %v3880 = vcombine.high %v3856, 0.0
    %v3881 = vcombine.high %v3863, 0.0
    %v3882 = vcombine.high %v3872, 0.0
    %v3883 = vcombine.high %v3879, 0.0
    %v3884 = vcombine.low %v3788, %v3795
    %v3886 = vunpack.c.l.s4 1983009808
    %v3887 = vunpack.c.0.s8 %v3886
    %v3888 = vlaneseq
    %v3889 = vshrl.u32 %v3888, 7
    %v3890 = vsub.s32 %v3887, %v3889
    %v3891 = vrot.slane %v3884, %v3890
    %v3892 = vcombine.low %v3812, %v3813
    %v3894 = vunpack.c.l.s4 1983009808
    %v3895 = vunpack.c.0.s8 %v3894
    %v3896 = vlaneseq
    %v3897 = vshrl.u32 %v3896, 7
    %v3898 = vsub.s32 %v3895, %v3897
    %v3899 = vrot.slane %v3892, %v3898
    %v3900 = vcombine.low %v3804, %v3811
    %v3902 = vunpack.c.l.s4 1983009808
    %v3903 = vunpack.c.0.s8 %v3902
    %v3904 = vlaneseq
    %v3905 = vshrl.u32 %v3904, 7
    %v3906 = vsub.s32 %v3903, %v3905
    %v3907 = vrot.slane %v3900, %v3906
    %v3908 = vcombine.low %v3814, %v3815
    %v3910 = vunpack.c.l.s4 1983009808
    %v3911 = vunpack.c.0.s8 %v3910
    %v3912 = vlaneseq
    %v3913 = vshrl.u32 %v3912, 7
    %v3914 = vsub.s32 %v3911, %v3913
    %v3915 = vrot.slane %v3908, %v3914
    %v3916 = vcombine.low %v3891, %v3899
    %v3917 = vcombine.high %v3891, %v3899
    %v3919 = vunpack.c.l.s4 1934713408
    %v3920 = vunpack.c.0.s8 %v3919
    %v3921 = vlaneseq
    %v3922 = vshrl.u32 %v3921, 7
    %v3923 = vsub.s32 %v3920, %v3922
    %v3924 = vrot.slane %v3916, %v3923
    %v3926 = vunpack.c.l.s4 1934713408
    %v3927 = vunpack.c.0.s8 %v3926
    %v3928 = vlaneseq
    %v3929 = vshrl.u32 %v3928, 7
    %v3930 = vsub.s32 %v3927, %v3929
    %v3931 = vrot.slane %v3917, %v3930
    %v3932 = vcombine.low %v3907, %v3915
    %v3933 = vcombine.high %v3907, %v3915
    %v3935 = vunpack.c.l.s4 1934713408
    %v3936 = vunpack.c.0.s8 %v3935
    %v3937 = vlaneseq
    %v3938 = vshrl.u32 %v3937, 7
    %v3939 = vsub.s32 %v3936, %v3938
    %v3940 = vrot.slane %v3932, %v3939
    %v3942 = vunpack.c.l.s4 1934713408
    %v3943 = vunpack.c.0.s8 %v3942
    %v3944 = vlaneseq
    %v3945 = vshrl.u32 %v3944, 7
    %v3946 = vsub.s32 %v3943, %v3945
    %v3947 = vrot.slane %v3933, %v3946
    %v3948 = vcombine.low %v3924, %v3940
    %v3949 = vcombine.high %v3924, %v3940
    %v3950 = vcombine.low %v3931, %v3947
    %v3951 = vcombine.high %v3931, %v3947
    %v3952 = vcombine.low %v3856, %v3863
    %v3954 = vunpack.c.l.s4 1983009808
    %v3955 = vunpack.c.0.s8 %v3954
    %v3956 = vlaneseq
    %v3957 = vshrl.u32 %v3956, 7
    %v3958 = vsub.s32 %v3955, %v3957
    %v3959 = vrot.slane %v3952, %v3958
    %v3960 = vcombine.low %v3880, %v3881
    %v3962 = vunpack.c.l.s4 1983009808
    %v3963 = vunpack.c.0.s8 %v3962
    %v3964 = vlaneseq
    %v3965 = vshrl.u32 %v3964, 7
    %v3966 = vsub.s32 %v3963, %v3965
    %v3967 = vrot.slane %v3960, %v3966
    %v3968 = vcombine.low %v3872, %v3879
    %v3970 = vunpack.c.l.s4 1983009808
    %v3971 = vunpack.c.0.s8 %v3970
    %v3972 = vlaneseq
    %v3973 = vshrl.u32 %v3972, 7
    %v3974 = vsub.s32 %v3971, %v3973
    %v3975 = vrot.slane %v3968, %v3974
    %v3976 = vcombine.low %v3882, %v3883
    %v3978 = vunpack.c.l.s4 1983009808
    %v3979 = vunpack.c.0.s8 %v3978
    %v3980 = vlaneseq
    %v3981 = vshrl.u32 %v3980, 7
    %v3982 = vsub.s32 %v3979, %v3981
    %v3983 = vrot.slane %v3976, %v3982
    %v3984 = vcombine.low %v3959, %v3967
    %v3985 = vcombine.high %v3959, %v3967
    %v3987 = vunpack.c.l.s4 1934713408
    %v3988 = vunpack.c.0.s8 %v3987
    %v3989 = vlaneseq
    %v3990 = vshrl.u32 %v3989, 7
    %v3991 = vsub.s32 %v3988, %v3990
    %v3992 = vrot.slane %v3984, %v3991
    %v3994 = vunpack.c.l.s4 1934713408
    %v3995 = vunpack.c.0.s8 %v3994
    %v3996 = vlaneseq
    %v3997 = vshrl.u32 %v3996, 7
    %v3998 = vsub.s32 %v3995, %v3997
    %v3999 = vrot.slane %v3985, %v3998
    %v4000 = vcombine.low %v3975, %v3983
    %v4001 = vcombine.high %v3975, %v3983
    %v4003 = vunpack.c.l.s4 1934713408
    %v4004 = vunpack.c.0.s8 %v4003
    %v4005 = vlaneseq
    %v4006 = vshrl.u32 %v4005, 7
    %v4007 = vsub.s32 %v4004, %v4006
    %v4008 = vrot.slane %v4000, %v4007
    %v4010 = vunpack.c.l.s4 1934713408
    %v4011 = vunpack.c.0.s8 %v4010
    %v4012 = vlaneseq
    %v4013 = vshrl.u32 %v4012, 7
    %v4014 = vsub.s32 %v4011, %v4013
    %v4015 = vrot.slane %v4001, %v4014
    %v4016 = vcombine.low %v3992, %v4008
    %v4017 = vcombine.high %v3992, %v4008
    %v4018 = vcombine.low %v3999, %v4015
    %v4019 = vcombine.high %v3999, %v4015
    %v4021 = vsel %vm1142, %v3356, 0
    %v4024 = vsel %vm1142, %v3652, 0
    %4026 = vmatprep.subr.mxu0 0.0
    %4027 = vmatpush1.xpose.msra.mxu0 %v4024
    %4028 = vmatprep.subr.mxu0 0.0
    %4029 = vmatpush1.xpose.msra.mxu0 0.0
    %4030 = vmatprep.subr.mxu0 0.0
    %4031 = vmatpush1.xpose.msra.mxu0 0.0
    %4032 = vmatprep.subr.mxu0 0.0
    %4033 = vmatpush1.xpose.msra.mxu0 0.0
    %4034 = vmatprep.subr.mxu0 0.0
    %4035 = vmatpush1.xpose.msra.mxu0 0.0
    %4036 = vmatprep.subr.mxu0 0.0
    %4037 = vmatpush1.xpose.msra.mxu0 0.0
    %4038 = vmatprep.subr.mxu0 0.0
    %4039 = vmatpush1.xpose.msra.mxu0 0.0
    %4040 = vmatprep.subr.mxu0 0.0
    %4041 = vmatpush1.xpose.msra.mxu0 0.0
    %4042 = vmatprep.subr.mxu0 0.0
    %4043 = vmatpush1.xpose.msra.mxu0 0.0
    %4044 = vmatprep.subr.mxu0 0.0
    %4045 = vmatpush1.xpose.msra.mxu0 0.0
    %4046 = vmatprep.subr.mxu0 0.0
    %4047 = vmatpush1.xpose.msra.mxu0 0.0
    %4048 = vmatprep.subr.mxu0 0.0
    %4049 = vmatpush1.xpose.msra.mxu0 0.0
    %4050 = vmatprep.subr.mxu0 0.0
    %4051 = vmatpush1.xpose.msra.mxu0 0.0
    %4052 = vmatprep.subr.mxu0 0.0
    %4053 = vmatpush1.xpose.msra.mxu0 0.0
    %4054 = vmatprep.subr.mxu0 0.0
    %4055 = vmatpush1.xpose.msra.mxu0 0.0
    %4056 = vmatprep.subr.mxu0 0.0
    %4057 = vmatpush1.xpose.msra.mxu0 0.0
    %4058 = vmatprep.subr.mxu0 0.0
    %4059 = vmatpush1.xpose.msra.mxu0 0.0
    %4060 = vmatprep.subr.mxu0 0.0
    %4061 = vmatpush1.xpose.msra.mxu0 0.0
    %4062 = vmatprep.subr.mxu0 0.0
    %4063 = vmatpush1.xpose.msra.mxu0 0.0
    %4064 = vmatprep.subr.mxu0 0.0
    %4065 = vmatpush1.xpose.msra.mxu0 0.0
    %4066 = vmatprep.subr.mxu0 0.0
    %4067 = vmatpush1.xpose.msra.mxu0 0.0
    %4068 = vmatprep.subr.mxu0 0.0
    %4069 = vmatpush1.xpose.msra.mxu0 0.0
    %4070 = vmatprep.subr.mxu0 0.0
    %4071 = vmatpush1.xpose.msra.mxu0 0.0
    %4072 = vmatprep.subr.mxu0 0.0
    %4073 = vmatpush1.xpose.msra.mxu0 0.0
    %4074 = vmatprep.subr.mxu0 0.0
    %4075 = vmatpush1.xpose.msra.mxu0 0.0
    %4076 = vmatprep.subr.mxu0 0.0
    %4077 = vmatpush1.xpose.msra.mxu0 0.0
    %4078 = vmatprep.subr.mxu0 0.0
    %4079 = vmatpush1.xpose.msra.mxu0 0.0
    %4080 = vmatprep.subr.mxu0 0.0
    %4081 = vmatpush1.xpose.msra.mxu0 0.0
    %4082 = vmatprep.subr.mxu0 0.0
    %4083 = vmatpush1.xpose.msra.mxu0 0.0
    %4084 = vmatprep.subr.mxu0 0.0
    %4085 = vmatpush1.xpose.msra.mxu0 0.0
    %4086 = vmatprep.subr.mxu0 0.0
    %4087 = vmatpush1.xpose.msra.mxu0 0.0
    %4088 = vmatprep.subr.mxu0 0.0
    %4089 = vmatpush1.xpose.msra.mxu0 0.0
    %4090 = vmatprep.mubr.f32.mxu0 0.0
    %4091 = vmatmul.mubr.f32.gmra.mrb[0].mxu0 %v4021
    %v4092 = vpop.f32.mrb[0].mxu0
    %v4093 = vadd.f32 0.0, %v4092
    %v4094 = vpop.f32.mrb[0].mxu0
    %4095 = vdwg.mxu0
    %v4097 = vsel %vm1142, %v3357, 0
    %v4100 = vsel %vm1142, %v3653, 0
    %4102 = vmatprep.subr.mxu0 0.0
    %4103 = vmatpush1.xpose.msra.mxu0 %v4100
    %4104 = vmatprep.subr.mxu0 0.0
    %4105 = vmatpush1.xpose.msra.mxu0 0.0
    %4106 = vmatprep.subr.mxu0 0.0
    %4107 = vmatpush1.xpose.msra.mxu0 0.0
    %4108 = vmatprep.subr.mxu0 0.0
    %4109 = vmatpush1.xpose.msra.mxu0 0.0
    %4110 = vmatprep.subr.mxu0 0.0
    %4111 = vmatpush1.xpose.msra.mxu0 0.0
    %4112 = vmatprep.subr.mxu0 0.0
    %4113 = vmatpush1.xpose.msra.mxu0 0.0
    %4114 = vmatprep.subr.mxu0 0.0
    %4115 = vmatpush1.xpose.msra.mxu0 0.0
    %4116 = vmatprep.subr.mxu0 0.0
    %4117 = vmatpush1.xpose.msra.mxu0 0.0
    %4118 = vmatprep.subr.mxu0 0.0
    %4119 = vmatpush1.xpose.msra.mxu0 0.0
    %4120 = vmatprep.subr.mxu0 0.0
    %4121 = vmatpush1.xpose.msra.mxu0 0.0
    %4122 = vmatprep.subr.mxu0 0.0
    %4123 = vmatpush1.xpose.msra.mxu0 0.0
    %4124 = vmatprep.subr.mxu0 0.0
    %4125 = vmatpush1.xpose.msra.mxu0 0.0
    %4126 = vmatprep.subr.mxu0 0.0
    %4127 = vmatpush1.xpose.msra.mxu0 0.0
    %4128 = vmatprep.subr.mxu0 0.0
    %4129 = vmatpush1.xpose.msra.mxu0 0.0
    %4130 = vmatprep.subr.mxu0 0.0
    %4131 = vmatpush1.xpose.msra.mxu0 0.0
    %4132 = vmatprep.subr.mxu0 0.0
    %4133 = vmatpush1.xpose.msra.mxu0 0.0
    %4134 = vmatprep.subr.mxu0 0.0
    %4135 = vmatpush1.xpose.msra.mxu0 0.0
    %4136 = vmatprep.subr.mxu0 0.0
    %4137 = vmatpush1.xpose.msra.mxu0 0.0
    %4138 = vmatprep.subr.mxu0 0.0
    %4139 = vmatpush1.xpose.msra.mxu0 0.0
    %4140 = vmatprep.subr.mxu0 0.0
    %4141 = vmatpush1.xpose.msra.mxu0 0.0
    %4142 = vmatprep.subr.mxu0 0.0
    %4143 = vmatpush1.xpose.msra.mxu0 0.0
    %4144 = vmatprep.subr.mxu0 0.0
    %4145 = vmatpush1.xpose.msra.mxu0 0.0
    %4146 = vmatprep.subr.mxu0 0.0
    %4147 = vmatpush1.xpose.msra.mxu0 0.0
    %4148 = vmatprep.subr.mxu0 0.0
    %4149 = vmatpush1.xpose.msra.mxu0 0.0
    %4150 = vmatprep.subr.mxu0 0.0
    %4151 = vmatpush1.xpose.msra.mxu0 0.0
    %4152 = vmatprep.subr.mxu0 0.0
    %4153 = vmatpush1.xpose.msra.mxu0 0.0
    %4154 = vmatprep.subr.mxu0 0.0
    %4155 = vmatpush1.xpose.msra.mxu0 0.0
    %4156 = vmatprep.subr.mxu0 0.0
    %4157 = vmatpush1.xpose.msra.mxu0 0.0
    %4158 = vmatprep.subr.mxu0 0.0
    %4159 = vmatpush1.xpose.msra.mxu0 0.0
    %4160 = vmatprep.subr.mxu0 0.0
    %4161 = vmatpush1.xpose.msra.mxu0 0.0
    %4162 = vmatprep.subr.mxu0 0.0
    %4163 = vmatpush1.xpose.msra.mxu0 0.0
    %4164 = vmatprep.subr.mxu0 0.0
    %4165 = vmatpush1.xpose.msra.mxu0 0.0
    %4166 = vmatprep.mubr.f32.mxu0 0.0
    %4167 = vmatmul.mubr.f32.gmra.mrb[0].mxu0 %v4097
    %v4168 = vpop.f32.mrb[0].mxu0
    %v4169 = vadd.f32 0.0, %v4168
    %v4170 = vpop.f32.mrb[0].mxu0
    %4171 = vdwg.mxu0
    %v4173 = vsel %vm1142, %v3358, 0
    %v4176 = vsel %vm1142, %v3654, 0
    %4178 = vmatprep.subr.mxu0 0.0
    %4179 = vmatpush1.xpose.msra.mxu0 %v4176
    %4180 = vmatprep.subr.mxu0 0.0
    %4181 = vmatpush1.xpose.msra.mxu0 0.0
    %4182 = vmatprep.subr.mxu0 0.0
    %4183 = vmatpush1.xpose.msra.mxu0 0.0
    %4184 = vmatprep.subr.mxu0 0.0
    %4185 = vmatpush1.xpose.msra.mxu0 0.0
    %4186 = vmatprep.subr.mxu0 0.0
    %4187 = vmatpush1.xpose.msra.mxu0 0.0
    %4188 = vmatprep.subr.mxu0 0.0
    %4189 = vmatpush1.xpose.msra.mxu0 0.0
    %4190 = vmatprep.subr.mxu0 0.0
    %4191 = vmatpush1.xpose.msra.mxu0 0.0
    %4192 = vmatprep.subr.mxu0 0.0
    %4193 = vmatpush1.xpose.msra.mxu0 0.0
    %4194 = vmatprep.subr.mxu0 0.0
    %4195 = vmatpush1.xpose.msra.mxu0 0.0
    %4196 = vmatprep.subr.mxu0 0.0
    %4197 = vmatpush1.xpose.msra.mxu0 0.0
    %4198 = vmatprep.subr.mxu0 0.0
    %4199 = vmatpush1.xpose.msra.mxu0 0.0
    %4200 = vmatprep.subr.mxu0 0.0
    %4201 = vmatpush1.xpose.msra.mxu0 0.0
    %4202 = vmatprep.subr.mxu0 0.0
    %4203 = vmatpush1.xpose.msra.mxu0 0.0
    %4204 = vmatprep.subr.mxu0 0.0
    %4205 = vmatpush1.xpose.msra.mxu0 0.0
    %4206 = vmatprep.subr.mxu0 0.0
    %4207 = vmatpush1.xpose.msra.mxu0 0.0
    %4208 = vmatprep.subr.mxu0 0.0
    %4209 = vmatpush1.xpose.msra.mxu0 0.0
    %4210 = vmatprep.subr.mxu0 0.0
    %4211 = vmatpush1.xpose.msra.mxu0 0.0
    %4212 = vmatprep.subr.mxu0 0.0
    %4213 = vmatpush1.xpose.msra.mxu0 0.0
    %4214 = vmatprep.subr.mxu0 0.0
    %4215 = vmatpush1.xpose.msra.mxu0 0.0
    %4216 = vmatprep.subr.mxu0 0.0
    %4217 = vmatpush1.xpose.msra.mxu0 0.0
    %4218 = vmatprep.subr.mxu0 0.0
    %4219 = vmatpush1.xpose.msra.mxu0 0.0
    %4220 = vmatprep.subr.mxu0 0.0
    %4221 = vmatpush1.xpose.msra.mxu0 0.0
    %4222 = vmatprep.subr.mxu0 0.0
    %4223 = vmatpush1.xpose.msra.mxu0 0.0
    %4224 = vmatprep.subr.mxu0 0.0
    %4225 = vmatpush1.xpose.msra.mxu0 0.0
    %4226 = vmatprep.subr.mxu0 0.0
    %4227 = vmatpush1.xpose.msra.mxu0 0.0
    %4228 = vmatprep.subr.mxu0 0.0
    %4229 = vmatpush1.xpose.msra.mxu0 0.0
    %4230 = vmatprep.subr.mxu0 0.0
    %4231 = vmatpush1.xpose.msra.mxu0 0.0
    %4232 = vmatprep.subr.mxu0 0.0
    %4233 = vmatpush1.xpose.msra.mxu0 0.0
    %4234 = vmatprep.subr.mxu0 0.0
    %4235 = vmatpush1.xpose.msra.mxu0 0.0
    %4236 = vmatprep.subr.mxu0 0.0
    %4237 = vmatpush1.xpose.msra.mxu0 0.0
    %4238 = vmatprep.subr.mxu0 0.0
    %4239 = vmatpush1.xpose.msra.mxu0 0.0
    %4240 = vmatprep.subr.mxu0 0.0
    %4241 = vmatpush1.xpose.msra.mxu0 0.0
    %4242 = vmatprep.mubr.f32.mxu0 0.0
    %4243 = vmatmul.mubr.f32.gmra.mrb[0].mxu0 %v4173
    %v4244 = vpop.f32.mrb[0].mxu0
    %v4245 = vadd.f32 0.0, %v4244
    %v4246 = vpop.f32.mrb[0].mxu0
    %4247 = vdwg.mxu0
    %v4249 = vsel %vm1142, %v3359, 0
    %v4252 = vsel %vm1142, %v3655, 0
    %4254 = vmatprep.subr.mxu0 0.0
    %4255 = vmatpush1.xpose.msra.mxu0 %v4252
    %4256 = vmatprep.subr.mxu0 0.0
    %4257 = vmatpush1.xpose.msra.mxu0 0.0
    %4258 = vmatprep.subr.mxu0 0.0
    %4259 = vmatpush1.xpose.msra.mxu0 0.0
    %4260 = vmatprep.subr.mxu0 0.0
    %4261 = vmatpush1.xpose.msra.mxu0 0.0
    %4262 = vmatprep.subr.mxu0 0.0
    %4263 = vmatpush1.xpose.msra.mxu0 0.0
    %4264 = vmatprep.subr.mxu0 0.0
    %4265 = vmatpush1.xpose.msra.mxu0 0.0
    %4266 = vmatprep.subr.mxu0 0.0
    %4267 = vmatpush1.xpose.msra.mxu0 0.0
    %4268 = vmatprep.subr.mxu0 0.0
    %4269 = vmatpush1.xpose.msra.mxu0 0.0
    %4270 = vmatprep.subr.mxu0 0.0
    %4271 = vmatpush1.xpose.msra.mxu0 0.0
    %4272 = vmatprep.subr.mxu0 0.0
    %4273 = vmatpush1.xpose.msra.mxu0 0.0
    %4274 = vmatprep.subr.mxu0 0.0
    %4275 = vmatpush1.xpose.msra.mxu0 0.0
    %4276 = vmatprep.subr.mxu0 0.0
    %4277 = vmatpush1.xpose.msra.mxu0 0.0
    %4278 = vmatprep.subr.mxu0 0.0
    %4279 = vmatpush1.xpose.msra.mxu0 0.0
    %4280 = vmatprep.subr.mxu0 0.0
    %4281 = vmatpush1.xpose.msra.mxu0 0.0
    %4282 = vmatprep.subr.mxu0 0.0
    %4283 = vmatpush1.xpose.msra.mxu0 0.0
    %4284 = vmatprep.subr.mxu0 0.0
    %4285 = vmatpush1.xpose.msra.mxu0 0.0
    %4286 = vmatprep.subr.mxu0 0.0
    %4287 = vmatpush1.xpose.msra.mxu0 0.0
    %4288 = vmatprep.subr.mxu0 0.0
    %4289 = vmatpush1.xpose.msra.mxu0 0.0
    %4290 = vmatprep.subr.mxu0 0.0
    %4291 = vmatpush1.xpose.msra.mxu0 0.0
    %4292 = vmatprep.subr.mxu0 0.0
    %4293 = vmatpush1.xpose.msra.mxu0 0.0
    %4294 = vmatprep.subr.mxu0 0.0
    %4295 = vmatpush1.xpose.msra.mxu0 0.0
    %4296 = vmatprep.subr.mxu0 0.0
    %4297 = vmatpush1.xpose.msra.mxu0 0.0
    %4298 = vmatprep.subr.mxu0 0.0
    %4299 = vmatpush1.xpose.msra.mxu0 0.0
    %4300 = vmatprep.subr.mxu0 0.0
    %4301 = vmatpush1.xpose.msra.mxu0 0.0
    %4302 = vmatprep.subr.mxu0 0.0
    %4303 = vmatpush1.xpose.msra.mxu0 0.0
    %4304 = vmatprep.subr.mxu0 0.0
    %4305 = vmatpush1.xpose.msra.mxu0 0.0
    %4306 = vmatprep.subr.mxu0 0.0
    %4307 = vmatpush1.xpose.msra.mxu0 0.0
    %4308 = vmatprep.subr.mxu0 0.0
    %4309 = vmatpush1.xpose.msra.mxu0 0.0
    %4310 = vmatprep.subr.mxu0 0.0
    %4311 = vmatpush1.xpose.msra.mxu0 0.0
    %4312 = vmatprep.subr.mxu0 0.0
    %4313 = vmatpush1.xpose.msra.mxu0 0.0
    %4314 = vmatprep.subr.mxu0 0.0
    %4315 = vmatpush1.xpose.msra.mxu0 0.0
    %4316 = vmatprep.subr.mxu0 0.0
    %4317 = vmatpush1.xpose.msra.mxu0 0.0
    %4318 = vmatprep.mubr.f32.mxu0 0.0
    %4319 = vmatmul.mubr.f32.gmra.mrb[0].mxu0 %v4249
    %v4320 = vpop.f32.mrb[0].mxu0
    %v4321 = vadd.f32 0.0, %v4320
    %v4322 = vpop.f32.mrb[0].mxu0
    %4323 = vdwg.mxu0
    %v4325 = vsel %vm1142, %v3424, 0
    %v4328 = vsel %vm1142, %v3720, 0
    %4330 = vmatprep.subr.mxu0 0.0
    %4331 = vmatpush1.xpose.msra.mxu0 %v4328
    %4332 = vmatprep.subr.mxu0 0.0
    %4333 = vmatpush1.xpose.msra.mxu0 0.0
    %4334 = vmatprep.subr.mxu0 0.0
    %4335 = vmatpush1.xpose.msra.mxu0 0.0
    %4336 = vmatprep.subr.mxu0 0.0
    %4337 = vmatpush1.xpose.msra.mxu0 0.0
    %4338 = vmatprep.subr.mxu0 0.0
    %4339 = vmatpush1.xpose.msra.mxu0 0.0
    %4340 = vmatprep.subr.mxu0 0.0
    %4341 = vmatpush1.xpose.msra.mxu0 0.0
    %4342 = vmatprep.subr.mxu0 0.0
    %4343 = vmatpush1.xpose.msra.mxu0 0.0
    %4344 = vmatprep.subr.mxu0 0.0
    %4345 = vmatpush1.xpose.msra.mxu0 0.0
    %4346 = vmatprep.subr.mxu0 0.0
    %4347 = vmatpush1.xpose.msra.mxu0 0.0
    %4348 = vmatprep.subr.mxu0 0.0
    %4349 = vmatpush1.xpose.msra.mxu0 0.0
    %4350 = vmatprep.subr.mxu0 0.0
    %4351 = vmatpush1.xpose.msra.mxu0 0.0
    %4352 = vmatprep.subr.mxu0 0.0
    %4353 = vmatpush1.xpose.msra.mxu0 0.0
    %4354 = vmatprep.subr.mxu0 0.0
    %4355 = vmatpush1.xpose.msra.mxu0 0.0
    %4356 = vmatprep.subr.mxu0 0.0
    %4357 = vmatpush1.xpose.msra.mxu0 0.0
    %4358 = vmatprep.subr.mxu0 0.0
    %4359 = vmatpush1.xpose.msra.mxu0 0.0
    %4360 = vmatprep.subr.mxu0 0.0
    %4361 = vmatpush1.xpose.msra.mxu0 0.0
    %4362 = vmatprep.subr.mxu0 0.0
    %4363 = vmatpush1.xpose.msra.mxu0 0.0
    %4364 = vmatprep.subr.mxu0 0.0
    %4365 = vmatpush1.xpose.msra.mxu0 0.0
    %4366 = vmatprep.subr.mxu0 0.0
    %4367 = vmatpush1.xpose.msra.mxu0 0.0
    %4368 = vmatprep.subr.mxu0 0.0
    %4369 = vmatpush1.xpose.msra.mxu0 0.0
    %4370 = vmatprep.subr.mxu0 0.0
    %4371 = vmatpush1.xpose.msra.mxu0 0.0
    %4372 = vmatprep.subr.mxu0 0.0
    %4373 = vmatpush1.xpose.msra.mxu0 0.0
    %4374 = vmatprep.subr.mxu0 0.0
    %4375 = vmatpush1.xpose.msra.mxu0 0.0
    %4376 = vmatprep.subr.mxu0 0.0
    %4377 = vmatpush1.xpose.msra.mxu0 0.0
    %4378 = vmatprep.subr.mxu0 0.0
    %4379 = vmatpush1.xpose.msra.mxu0 0.0
    %4380 = vmatprep.subr.mxu0 0.0
    %4381 = vmatpush1.xpose.msra.mxu0 0.0
    %4382 = vmatprep.subr.mxu0 0.0
    %4383 = vmatpush1.xpose.msra.mxu0 0.0
    %4384 = vmatprep.subr.mxu0 0.0
    %4385 = vmatpush1.xpose.msra.mxu0 0.0
    %4386 = vmatprep.subr.mxu0 0.0
    %4387 = vmatpush1.xpose.msra.mxu0 0.0
    %4388 = vmatprep.subr.mxu0 0.0
    %4389 = vmatpush1.xpose.msra.mxu0 0.0
    %4390 = vmatprep.subr.mxu0 0.0
    %4391 = vmatpush1.xpose.msra.mxu0 0.0
    %4392 = vmatprep.subr.mxu0 0.0
    %4393 = vmatpush1.xpose.msra.mxu0 0.0
    %4394 = vmatprep.mubr.f32.mxu0 0.0
    %4395 = vmatmul.mubr.f32.gmra.mrb[0].mxu0 %v4325
    %v4396 = vpop.f32.mrb[0].mxu0
    %v4397 = vadd.f32 0.0, %v4396
    %v4398 = vpop.f32.mrb[0].mxu0
    %4399 = vdwg.mxu0
    %v4401 = vsel %vm1142, %v3425, 0
    %v4404 = vsel %vm1142, %v3721, 0
    %4406 = vmatprep.subr.mxu0 0.0
    %4407 = vmatpush1.xpose.msra.mxu0 %v4404
    %4408 = vmatprep.subr.mxu0 0.0
    %4409 = vmatpush1.xpose.msra.mxu0 0.0
    %4410 = vmatprep.subr.mxu0 0.0
    %4411 = vmatpush1.xpose.msra.mxu0 0.0
    %4412 = vmatprep.subr.mxu0 0.0
    %4413 = vmatpush1.xpose.msra.mxu0 0.0
    %4414 = vmatprep.subr.mxu0 0.0
    %4415 = vmatpush1.xpose.msra.mxu0 0.0
    %4416 = vmatprep.subr.mxu0 0.0
    %4417 = vmatpush1.xpose.msra.mxu0 0.0
    %4418 = vmatprep.subr.mxu0 0.0
    %4419 = vmatpush1.xpose.msra.mxu0 0.0
    %4420 = vmatprep.subr.mxu0 0.0
    %4421 = vmatpush1.xpose.msra.mxu0 0.0
    %4422 = vmatprep.subr.mxu0 0.0
    %4423 = vmatpush1.xpose.msra.mxu0 0.0
    %4424 = vmatprep.subr.mxu0 0.0
    %4425 = vmatpush1.xpose.msra.mxu0 0.0
    %4426 = vmatprep.subr.mxu0 0.0
    %4427 = vmatpush1.xpose.msra.mxu0 0.0
    %4428 = vmatprep.subr.mxu0 0.0
    %4429 = vmatpush1.xpose.msra.mxu0 0.0
    %4430 = vmatprep.subr.mxu0 0.0
    %4431 = vmatpush1.xpose.msra.mxu0 0.0
    %4432 = vmatprep.subr.mxu0 0.0
    %4433 = vmatpush1.xpose.msra.mxu0 0.0
    %4434 = vmatprep.subr.mxu0 0.0
    %4435 = vmatpush1.xpose.msra.mxu0 0.0
    %4436 = vmatprep.subr.mxu0 0.0
    %4437 = vmatpush1.xpose.msra.mxu0 0.0
    %4438 = vmatprep.subr.mxu0 0.0
    %4439 = vmatpush1.xpose.msra.mxu0 0.0
    %4440 = vmatprep.subr.mxu0 0.0
    %4441 = vmatpush1.xpose.msra.mxu0 0.0
    %4442 = vmatprep.subr.mxu0 0.0
    %4443 = vmatpush1.xpose.msra.mxu0 0.0
    %4444 = vmatprep.subr.mxu0 0.0
    %4445 = vmatpush1.xpose.msra.mxu0 0.0
    %4446 = vmatprep.subr.mxu0 0.0
    %4447 = vmatpush1.xpose.msra.mxu0 0.0
    %4448 = vmatprep.subr.mxu0 0.0
    %4449 = vmatpush1.xpose.msra.mxu0 0.0
    %4450 = vmatprep.subr.mxu0 0.0
    %4451 = vmatpush1.xpose.msra.mxu0 0.0
    %4452 = vmatprep.subr.mxu0 0.0
    %4453 = vmatpush1.xpose.msra.mxu0 0.0
    %4454 = vmatprep.subr.mxu0 0.0
    %4455 = vmatpush1.xpose.msra.mxu0 0.0
    %4456 = vmatprep.subr.mxu0 0.0
    %4457 = vmatpush1.xpose.msra.mxu0 0.0
    %4458 = vmatprep.subr.mxu0 0.0
    %4459 = vmatpush1.xpose.msra.mxu0 0.0
    %4460 = vmatprep.subr.mxu0 0.0
    %4461 = vmatpush1.xpose.msra.mxu0 0.0
    %4462 = vmatprep.subr.mxu0 0.0
    %4463 = vmatpush1.xpose.msra.mxu0 0.0
    %4464 = vmatprep.subr.mxu0 0.0
    %4465 = vmatpush1.xpose.msra.mxu0 0.0
    %4466 = vmatprep.subr.mxu0 0.0
    %4467 = vmatpush1.xpose.msra.mxu0 0.0
    %4468 = vmatprep.subr.mxu0 0.0
    %4469 = vmatpush1.xpose.msra.mxu0 0.0
    %4470 = vmatprep.mubr.f32.mxu0 0.0
    %4471 = vmatmul.mubr.f32.gmra.mrb[0].mxu0 %v4401
    %v4472 = vpop.f32.mrb[0].mxu0
    %v4473 = vadd.f32 0.0, %v4472
    %v4474 = vpop.f32.mrb[0].mxu0
    %4475 = vdwg.mxu0
    %v4477 = vsel %vm1142, %v3426, 0
    %v4480 = vsel %vm1142, %v3722, 0
    %4482 = vmatprep.subr.mxu0 0.0
    %4483 = vmatpush1.xpose.msra.mxu0 %v4480
    %4484 = vmatprep.subr.mxu0 0.0
    %4485 = vmatpush1.xpose.msra.mxu0 0.0
    %4486 = vmatprep.subr.mxu0 0.0
    %4487 = vmatpush1.xpose.msra.mxu0 0.0
    %4488 = vmatprep.subr.mxu0 0.0
    %4489 = vmatpush1.xpose.msra.mxu0 0.0
    %4490 = vmatprep.subr.mxu0 0.0
    %4491 = vmatpush1.xpose.msra.mxu0 0.0
    %4492 = vmatprep.subr.mxu0 0.0
    %4493 = vmatpush1.xpose.msra.mxu0 0.0
    %4494 = vmatprep.subr.mxu0 0.0
    %4495 = vmatpush1.xpose.msra.mxu0 0.0
    %4496 = vmatprep.subr.mxu0 0.0
    %4497 = vmatpush1.xpose.msra.mxu0 0.0
    %4498 = vmatprep.subr.mxu0 0.0
    %4499 = vmatpush1.xpose.msra.mxu0 0.0
    %4500 = vmatprep.subr.mxu0 0.0
    %4501 = vmatpush1.xpose.msra.mxu0 0.0
    %4502 = vmatprep.subr.mxu0 0.0
    %4503 = vmatpush1.xpose.msra.mxu0 0.0
    %4504 = vmatprep.subr.mxu0 0.0
    %4505 = vmatpush1.xpose.msra.mxu0 0.0
    %4506 = vmatprep.subr.mxu0 0.0
    %4507 = vmatpush1.xpose.msra.mxu0 0.0
    %4508 = vmatprep.subr.mxu0 0.0
    %4509 = vmatpush1.xpose.msra.mxu0 0.0
    %4510 = vmatprep.subr.mxu0 0.0
    %4511 = vmatpush1.xpose.msra.mxu0 0.0
    %4512 = vmatprep.subr.mxu0 0.0
    %4513 = vmatpush1.xpose.msra.mxu0 0.0
    %4514 = vmatprep.subr.mxu0 0.0
    %4515 = vmatpush1.xpose.msra.mxu0 0.0
    %4516 = vmatprep.subr.mxu0 0.0
    %4517 = vmatpush1.xpose.msra.mxu0 0.0
    %4518 = vmatprep.subr.mxu0 0.0
    %4519 = vmatpush1.xpose.msra.mxu0 0.0
    %4520 = vmatprep.subr.mxu0 0.0
    %4521 = vmatpush1.xpose.msra.mxu0 0.0
    %4522 = vmatprep.subr.mxu0 0.0
    %4523 = vmatpush1.xpose.msra.mxu0 0.0
    %4524 = vmatprep.subr.mxu0 0.0
    %4525 = vmatpush1.xpose.msra.mxu0 0.0
    %4526 = vmatprep.subr.mxu0 0.0
    %4527 = vmatpush1.xpose.msra.mxu0 0.0
    %4528 = vmatprep.subr.mxu0 0.0
    %4529 = vmatpush1.xpose.msra.mxu0 0.0
    %4530 = vmatprep.subr.mxu0 0.0
    %4531 = vmatpush1.xpose.msra.mxu0 0.0
    %4532 = vmatprep.subr.mxu0 0.0
    %4533 = vmatpush1.xpose.msra.mxu0 0.0
    %4534 = vmatprep.subr.mxu0 0.0
    %4535 = vmatpush1.xpose.msra.mxu0 0.0
    %4536 = vmatprep.subr.mxu0 0.0
    %4537 = vmatpush1.xpose.msra.mxu0 0.0
    %4538 = vmatprep.subr.mxu0 0.0
    %4539 = vmatpush1.xpose.msra.mxu0 0.0
    %4540 = vmatprep.subr.mxu0 0.0
    %4541 = vmatpush1.xpose.msra.mxu0 0.0
    %4542 = vmatprep.subr.mxu0 0.0
    %4543 = vmatpush1.xpose.msra.mxu0 0.0
    %4544 = vmatprep.subr.mxu0 0.0
    %4545 = vmatpush1.xpose.msra.mxu0 0.0
    %4546 = vmatprep.mubr.f32.mxu0 0.0
    %4547 = vmatmul.mubr.f32.gmra.mrb[0].mxu0 %v4477
    %v4548 = vpop.f32.mrb[0].mxu0
    %v4549 = vadd.f32 0.0, %v4548
    %v4550 = vpop.f32.mrb[0].mxu0
    %4551 = vdwg.mxu0
    %v4553 = vsel %vm1142, %v3427, 0
    %v4556 = vsel %vm1142, %v3723, 0
    %4558 = vmatprep.subr.mxu0 0.0
    %4559 = vmatpush1.xpose.msra.mxu0 %v4556
    %4560 = vmatprep.subr.mxu0 0.0
    %4561 = vmatpush1.xpose.msra.mxu0 0.0
    %4562 = vmatprep.subr.mxu0 0.0
    %4563 = vmatpush1.xpose.msra.mxu0 0.0
    %4564 = vmatprep.subr.mxu0 0.0
    %4565 = vmatpush1.xpose.msra.mxu0 0.0
    %4566 = vmatprep.subr.mxu0 0.0
    %4567 = vmatpush1.xpose.msra.mxu0 0.0
    %4568 = vmatprep.subr.mxu0 0.0
    %4569 = vmatpush1.xpose.msra.mxu0 0.0
    %4570 = vmatprep.subr.mxu0 0.0
    %4571 = vmatpush1.xpose.msra.mxu0 0.0
    %4572 = vmatprep.subr.mxu0 0.0
    %4573 = vmatpush1.xpose.msra.mxu0 0.0
    %4574 = vmatprep.subr.mxu0 0.0
    %4575 = vmatpush1.xpose.msra.mxu0 0.0
    %4576 = vmatprep.subr.mxu0 0.0
    %4577 = vmatpush1.xpose.msra.mxu0 0.0
    %4578 = vmatprep.subr.mxu0 0.0
    %4579 = vmatpush1.xpose.msra.mxu0 0.0
    %4580 = vmatprep.subr.mxu0 0.0
    %4581 = vmatpush1.xpose.msra.mxu0 0.0
    %4582 = vmatprep.subr.mxu0 0.0
    %4583 = vmatpush1.xpose.msra.mxu0 0.0
    %4584 = vmatprep.subr.mxu0 0.0
    %4585 = vmatpush1.xpose.msra.mxu0 0.0
    %4586 = vmatprep.subr.mxu0 0.0
    %4587 = vmatpush1.xpose.msra.mxu0 0.0
    %4588 = vmatprep.subr.mxu0 0.0
    %4589 = vmatpush1.xpose.msra.mxu0 0.0
    %4590 = vmatprep.subr.mxu0 0.0
    %4591 = vmatpush1.xpose.msra.mxu0 0.0
    %4592 = vmatprep.subr.mxu0 0.0
    %4593 = vmatpush1.xpose.msra.mxu0 0.0
    %4594 = vmatprep.subr.mxu0 0.0
    %4595 = vmatpush1.xpose.msra.mxu0 0.0
    %4596 = vmatprep.subr.mxu0 0.0
    %4597 = vmatpush1.xpose.msra.mxu0 0.0
    %4598 = vmatprep.subr.mxu0 0.0
    %4599 = vmatpush1.xpose.msra.mxu0 0.0
    %4600 = vmatprep.subr.mxu0 0.0
    %4601 = vmatpush1.xpose.msra.mxu0 0.0
    %4602 = vmatprep.subr.mxu0 0.0
    %4603 = vmatpush1.xpose.msra.mxu0 0.0
    %4604 = vmatprep.subr.mxu0 0.0
    %4605 = vmatpush1.xpose.msra.mxu0 0.0
    %4606 = vmatprep.subr.mxu0 0.0
    %4607 = vmatpush1.xpose.msra.mxu0 0.0
    %4608 = vmatprep.subr.mxu0 0.0
    %4609 = vmatpush1.xpose.msra.mxu0 0.0
    %4610 = vmatprep.subr.mxu0 0.0
    %4611 = vmatpush1.xpose.msra.mxu0 0.0
    %4612 = vmatprep.subr.mxu0 0.0
    %4613 = vmatpush1.xpose.msra.mxu0 0.0
    %4614 = vmatprep.subr.mxu0 0.0
    %4615 = vmatpush1.xpose.msra.mxu0 0.0
    %4616 = vmatprep.subr.mxu0 0.0
    %4617 = vmatpush1.xpose.msra.mxu0 0.0
    %4618 = vmatprep.subr.mxu0 0.0
    %4619 = vmatpush1.xpose.msra.mxu0 0.0
    %4620 = vmatprep.subr.mxu0 0.0
    %4621 = vmatpush1.xpose.msra.mxu0 0.0
    %4622 = vmatprep.mubr.f32.mxu0 0.0
    %4623 = vmatmul.mubr.f32.gmra.mrb[0].mxu0 %v4553
    %v4624 = vpop.f32.mrb[0].mxu0
    %v4625 = vadd.f32 0.0, %v4624
    %v4626 = vpop.f32.mrb[0].mxu0
    %4627 = vdwg.mxu0
    %v4628 = vadd.f32 %v4093, %v140
    %v4629 = vadd.f32 %v4169, %v140
    %v4630 = vadd.f32 %v4245, %v140
    %v4631 = vadd.f32 %v4321, %v140
    %v4632 = vadd.f32 %v4397, %v141
    %v4633 = vadd.f32 %v4473, %v141
    %v4634 = vadd.f32 %v4549, %v141
    %v4635 = vadd.f32 %v4625, %v141
    %v4636 = vsel %vm1142, %v4628, -inf
    %4637 = vmax.xlane.f32.xlu0 %v4636
    %v4638 = vpop.xlane.xlu0 %4637
    %v4639 = vsel %vm1142, %v4629, -inf
    %4640 = vmax.xlane.f32.xlu0 %v4639
    %v4641 = vpop.xlane.xlu0 %4640
    %v4642 = vsel %vm1142, %v4630, -inf
    %4643 = vmax.xlane.f32.xlu0 %v4642
    %v4644 = vpop.xlane.xlu0 %4643
    %v4645 = vsel %vm1142, %v4631, -inf
    %4646 = vmax.xlane.f32.xlu0 %v4645
    %v4647 = vpop.xlane.xlu0 %4646
    %v4648 = vsel %vm1142, %v4632, -inf
    %4649 = vmax.xlane.f32.xlu0 %v4648
    %v4650 = vpop.xlane.xlu0 %4649
    %v4651 = vsel %vm1142, %v4633, -inf
    %4652 = vmax.xlane.f32.xlu0 %v4651
    %v4653 = vpop.xlane.xlu0 %4652
    %v4654 = vsel %vm1142, %v4634, -inf
    %4655 = vmax.xlane.f32.xlu0 %v4654
    %v4656 = vpop.xlane.xlu0 %4655
    %v4657 = vsel %vm1142, %v4635, -inf
    %4658 = vmax.xlane.f32.xlu0 %v4657
    %v4659 = vpop.xlane.xlu0 %4658
    %v4660 = vsub.f32 %v4628, %v4638
    %v4661 = vsub.f32 %v4629, %v4641
    %v4662 = vsub.f32 %v4630, %v4644
    %v4663 = vsub.f32 %v4631, %v4647
    %v4664 = vsub.f32 %v4632, %v4650
    %v4665 = vsub.f32 %v4633, %v4653
    %v4666 = vsub.f32 %v4634, %v4656
    %v4667 = vsub.f32 %v4635, %v4659
    %v4668 = vmul.f32 %v4660, 1.442695
    %v4669 = vpow.pop %v4668
    %v4670 = vmul.f32 %v4661, 1.442695
    %v4671 = vpow.pop %v4670
    %v4672 = vmul.f32 %v4662, 1.442695
    %v4673 = vpow.pop %v4672
    %v4674 = vmul.f32 %v4663, 1.442695
    %v4675 = vpow.pop %v4674
    %v4676 = vmul.f32 %v4664, 1.442695
    %v4677 = vpow.pop %v4676
    %v4678 = vmul.f32 %v4665, 1.442695
    %v4679 = vpow.pop %v4678
    %v4680 = vmul.f32 %v4666, 1.442695
    %v4681 = vpow.pop %v4680
    %v4682 = vmul.f32 %v4667, 1.442695
    %v4683 = vpow.pop %v4682
    %v4684 = vsel %vm1142, %v4669, 0.0
    %4685 = vadd.xlane.f32.xlu0 %v4684
    %v4686 = vpop.xlane.xlu0 %4685
    %v4687 = vsel %vm1142, %v4671, 0.0
    %4688 = vadd.xlane.f32.xlu0 %v4687
    %v4689 = vpop.xlane.xlu0 %4688
    %v4690 = vsel %vm1142, %v4673, 0.0
    %4691 = vadd.xlane.f32.xlu0 %v4690
    %v4692 = vpop.xlane.xlu0 %4691
    %v4693 = vsel %vm1142, %v4675, 0.0
    %4694 = vadd.xlane.f32.xlu0 %v4693
    %v4695 = vpop.xlane.xlu0 %4694
    %v4696 = vsel %vm1142, %v4677, 0.0
    %4697 = vadd.xlane.f32.xlu0 %v4696
    %v4698 = vpop.xlane.xlu0 %4697
    %v4699 = vsel %vm1142, %v4679, 0.0
    %4700 = vadd.xlane.f32.xlu0 %v4699
    %v4701 = vpop.xlane.xlu0 %4700
    %v4702 = vsel %vm1142, %v4681, 0.0
    %4703 = vadd.xlane.f32.xlu0 %v4702
    %v4704 = vpop.xlane.xlu0 %4703
    %v4705 = vsel %vm1142, %v4683, 0.0
    %4706 = vadd.xlane.f32.xlu0 %v4705
    %v4707 = vpop.xlane.xlu0 %4706
    %v4708 = vrcp.pop %v4686
    %v4709 = vrcp.pop %v4689
    %v4710 = vrcp.pop %v4692
    %v4711 = vrcp.pop %v4695
    %v4712 = vrcp.pop %v4698
    %v4713 = vrcp.pop %v4701
    %v4714 = vrcp.pop %v4704
    %v4715 = vrcp.pop %v4707
    %v4716 = vmul.f32 %v4669, %v4708
    %v4717 = vmul.f32 %v4671, %v4709
    %v4718 = vmul.f32 %v4673, %v4710
    %v4719 = vmul.f32 %v4675, %v4711
    %v4720 = vmul.f32 %v4677, %v4712
    %v4721 = vmul.f32 %v4679, %v4713
    %v4722 = vmul.f32 %v4681, %v4714
    %v4723 = vmul.f32 %v4683, %v4715
    %v4725 = vsel %vm1142, %v4716, 0
    %4727 = vmatprep.subr.mxu0 0.0
    %4728 = vmatpush1.msra.mxu0 %v3948
    %4729 = vmatprep.subr.mxu0 0.0
    %4730 = vmatpush1.msra.mxu0 0.0
    %4731 = vmatprep.subr.mxu0 0.0
    %4732 = vmatpush1.msra.mxu0 0.0
    %4733 = vmatprep.subr.mxu0 0.0
    %4734 = vmatpush1.msra.mxu0 0.0
    %4735 = vmatprep.subr.mxu0 0.0
    %4736 = vmatpush1.msra.mxu0 0.0
    %4737 = vmatprep.subr.mxu0 0.0
    %4738 = vmatpush1.msra.mxu0 0.0
    %4739 = vmatprep.subr.mxu0 0.0
    %4740 = vmatpush1.msra.mxu0 0.0
    %4741 = vmatprep.subr.mxu0 0.0
    %4742 = vmatpush1.msra.mxu0 0.0
    %4743 = vmatprep.subr.mxu0 0.0
    %4744 = vmatpush1.msra.mxu0 0.0
    %4745 = vmatprep.subr.mxu0 0.0
    %4746 = vmatpush1.msra.mxu0 0.0
    %4747 = vmatprep.subr.mxu0 0.0
    %4748 = vmatpush1.msra.mxu0 0.0
    %4749 = vmatprep.subr.mxu0 0.0
    %4750 = vmatpush1.msra.mxu0 0.0
    %4751 = vmatprep.subr.mxu0 0.0
    %4752 = vmatpush1.msra.mxu0 0.0
    %4753 = vmatprep.subr.mxu0 0.0
    %4754 = vmatpush1.msra.mxu0 0.0
    %4755 = vmatprep.subr.mxu0 0.0
    %4756 = vmatpush1.msra.mxu0 0.0
    %4757 = vmatprep.subr.mxu0 0.0
    %4758 = vmatpush1.msra.mxu0 0.0
    %4759 = vmatprep.subr.mxu0 0.0
    %4760 = vmatpush1.msra.mxu0 0.0
    %4761 = vmatprep.subr.mxu0 0.0
    %4762 = vmatpush1.msra.mxu0 0.0
    %4763 = vmatprep.subr.mxu0 0.0
    %4764 = vmatpush1.msra.mxu0 0.0
    %4765 = vmatprep.subr.mxu0 0.0
    %4766 = vmatpush1.msra.mxu0 0.0
    %4767 = vmatprep.subr.mxu0 0.0
    %4768 = vmatpush1.msra.mxu0 0.0
    %4769 = vmatprep.subr.mxu0 0.0
    %4770 = vmatpush1.msra.mxu0 0.0
    %4771 = vmatprep.subr.mxu0 0.0
    %4772 = vmatpush1.msra.mxu0 0.0
    %4773 = vmatprep.subr.mxu0 0.0
    %4774 = vmatpush1.msra.mxu0 0.0
    %4775 = vmatprep.subr.mxu0 0.0
    %4776 = vmatpush1.msra.mxu0 0.0
    %4777 = vmatprep.subr.mxu0 0.0
    %4778 = vmatpush1.msra.mxu0 0.0
    %4779 = vmatprep.subr.mxu0 0.0
    %4780 = vmatpush1.msra.mxu0 0.0
    %4781 = vmatprep.subr.mxu0 0.0
    %4782 = vmatpush1.msra.mxu0 0.0
    %4783 = vmatprep.subr.mxu0 0.0
    %4784 = vmatpush1.msra.mxu0 0.0
    %4785 = vmatprep.subr.mxu0 0.0
    %4786 = vmatpush1.msra.mxu0 0.0
    %4787 = vmatprep.subr.mxu0 0.0
    %4788 = vmatpush1.msra.mxu0 0.0
    %4789 = vmatprep.subr.mxu0 0.0
    %4790 = vmatpush1.msra.mxu0 0.0
    %4791 = vmatprep.mubr.f32.mxu0 0.0
    %4792 = vmatmul.mubr.f32.gmra.mrb[0].mxu0 %v4725
    %v4793 = vpop.f32.mrb[0].mxu0
    %v4794 = vadd.f32 0.0, %v4793
    %v4795 = vpop.f32.mrb[0].mxu0
    %4796 = vdwg.mxu0
    %v4798 = vsel %vm1142, %v4717, 0
    %4800 = vmatprep.subr.mxu0 0.0
    %4801 = vmatpush1.msra.mxu0 %v3949
    %4802 = vmatprep.subr.mxu0 0.0
    %4803 = vmatpush1.msra.mxu0 0.0
    %4804 = vmatprep.subr.mxu0 0.0
    %4805 = vmatpush1.msra.mxu0 0.0
    %4806 = vmatprep.subr.mxu0 0.0
    %4807 = vmatpush1.msra.mxu0 0.0
    %4808 = vmatprep.subr.mxu0 0.0
    %4809 = vmatpush1.msra.mxu0 0.0
    %4810 = vmatprep.subr.mxu0 0.0
    %4811 = vmatpush1.msra.mxu0 0.0
    %4812 = vmatprep.subr.mxu0 0.0
    %4813 = vmatpush1.msra.mxu0 0.0
    %4814 = vmatprep.subr.mxu0 0.0
    %4815 = vmatpush1.msra.mxu0 0.0
    %4816 = vmatprep.subr.mxu0 0.0
    %4817 = vmatpush1.msra.mxu0 0.0
    %4818 = vmatprep.subr.mxu0 0.0
    %4819 = vmatpush1.msra.mxu0 0.0
    %4820 = vmatprep.subr.mxu0 0.0
    %4821 = vmatpush1.msra.mxu0 0.0
    %4822 = vmatprep.subr.mxu0 0.0
    %4823 = vmatpush1.msra.mxu0 0.0
    %4824 = vmatprep.subr.mxu0 0.0
    %4825 = vmatpush1.msra.mxu0 0.0
    %4826 = vmatprep.subr.mxu0 0.0
    %4827 = vmatpush1.msra.mxu0 0.0
    %4828 = vmatprep.subr.mxu0 0.0
    %4829 = vmatpush1.msra.mxu0 0.0
    %4830 = vmatprep.subr.mxu0 0.0
    %4831 = vmatpush1.msra.mxu0 0.0
    %4832 = vmatprep.subr.mxu0 0.0
    %4833 = vmatpush1.msra.mxu0 0.0
    %4834 = vmatprep.subr.mxu0 0.0
    %4835 = vmatpush1.msra.mxu0 0.0
    %4836 = vmatprep.subr.mxu0 0.0
    %4837 = vmatpush1.msra.mxu0 0.0
    %4838 = vmatprep.subr.mxu0 0.0
    %4839 = vmatpush1.msra.mxu0 0.0
    %4840 = vmatprep.subr.mxu0 0.0
    %4841 = vmatpush1.msra.mxu0 0.0
    %4842 = vmatprep.subr.mxu0 0.0
    %4843 = vmatpush1.msra.mxu0 0.0
    %4844 = vmatprep.subr.mxu0 0.0
    %4845 = vmatpush1.msra.mxu0 0.0
    %4846 = vmatprep.subr.mxu0 0.0
    %4847 = vmatpush1.msra.mxu0 0.0
    %4848 = vmatprep.subr.mxu0 0.0
    %4849 = vmatpush1.msra.mxu0 0.0
    %4850 = vmatprep.subr.mxu0 0.0
    %4851 = vmatpush1.msra.mxu0 0.0
    %4852 = vmatprep.subr.mxu0 0.0
    %4853 = vmatpush1.msra.mxu0 0.0
    %4854 = vmatprep.subr.mxu0 0.0
    %4855 = vmatpush1.msra.mxu0 0.0
    %4856 = vmatprep.subr.mxu0 0.0
    %4857 = vmatpush1.msra.mxu0 0.0
    %4858 = vmatprep.subr.mxu0 0.0
    %4859 = vmatpush1.msra.mxu0 0.0
    %4860 = vmatprep.subr.mxu0 0.0
    %4861 = vmatpush1.msra.mxu0 0.0
    %4862 = vmatprep.subr.mxu0 0.0
    %4863 = vmatpush1.msra.mxu0 0.0
    %4864 = vmatprep.mubr.f32.mxu0 0.0
    %4865 = vmatmul.mubr.f32.gmra.mrb[0].mxu0 %v4798
    %v4866 = vpop.f32.mrb[0].mxu0
    %v4867 = vadd.f32 0.0, %v4866
    %v4868 = vpop.f32.mrb[0].mxu0
    %4869 = vdwg.mxu0
    %v4871 = vsel %vm1142, %v4718, 0
    %4873 = vmatprep.subr.mxu0 0.0
    %4874 = vmatpush1.msra.mxu0 %v3950
    %4875 = vmatprep.subr.mxu0 0.0
    %4876 = vmatpush1.msra.mxu0 0.0
    %4877 = vmatprep.subr.mxu0 0.0
    %4878 = vmatpush1.msra.mxu0 0.0
    %4879 = vmatprep.subr.mxu0 0.0
    %4880 = vmatpush1.msra.mxu0 0.0
    %4881 = vmatprep.subr.mxu0 0.0
    %4882 = vmatpush1.msra.mxu0 0.0
    %4883 = vmatprep.subr.mxu0 0.0
    %4884 = vmatpush1.msra.mxu0 0.0
    %4885 = vmatprep.subr.mxu0 0.0
    %4886 = vmatpush1.msra.mxu0 0.0
    %4887 = vmatprep.subr.mxu0 0.0
    %4888 = vmatpush1.msra.mxu0 0.0
    %4889 = vmatprep.subr.mxu0 0.0
    %4890 = vmatpush1.msra.mxu0 0.0
    %4891 = vmatprep.subr.mxu0 0.0
    %4892 = vmatpush1.msra.mxu0 0.0
    %4893 = vmatprep.subr.mxu0 0.0
    %4894 = vmatpush1.msra.mxu0 0.0
    %4895 = vmatprep.subr.mxu0 0.0
    %4896 = vmatpush1.msra.mxu0 0.0
    %4897 = vmatprep.subr.mxu0 0.0
    %4898 = vmatpush1.msra.mxu0 0.0
    %4899 = vmatprep.subr.mxu0 0.0
    %4900 = vmatpush1.msra.mxu0 0.0
    %4901 = vmatprep.subr.mxu0 0.0
    %4902 = vmatpush1.msra.mxu0 0.0
    %4903 = vmatprep.subr.mxu0 0.0
    %4904 = vmatpush1.msra.mxu0 0.0
    %4905 = vmatprep.subr.mxu0 0.0
    %4906 = vmatpush1.msra.mxu0 0.0
    %4907 = vmatprep.subr.mxu0 0.0
    %4908 = vmatpush1.msra.mxu0 0.0
    %4909 = vmatprep.subr.mxu0 0.0
    %4910 = vmatpush1.msra.mxu0 0.0
    %4911 = vmatprep.subr.mxu0 0.0
    %4912 = vmatpush1.msra.mxu0 0.0
    %4913 = vmatprep.subr.mxu0 0.0
    %4914 = vmatpush1.msra.mxu0 0.0
    %4915 = vmatprep.subr.mxu0 0.0
    %4916 = vmatpush1.msra.mxu0 0.0
    %4917 = vmatprep.subr.mxu0 0.0
    %4918 = vmatpush1.msra.mxu0 0.0
    %4919 = vmatprep.subr.mxu0 0.0
    %4920 = vmatpush1.msra.mxu0 0.0
    %4921 = vmatprep.subr.mxu0 0.0
    %4922 = vmatpush1.msra.mxu0 0.0
    %4923 = vmatprep.subr.mxu0 0.0
    %4924 = vmatpush1.msra.mxu0 0.0
    %4925 = vmatprep.subr.mxu0 0.0
    %4926 = vmatpush1.msra.mxu0 0.0
    %4927 = vmatprep.subr.mxu0 0.0
    %4928 = vmatpush1.msra.mxu0 0.0
    %4929 = vmatprep.subr.mxu0 0.0
    %4930 = vmatpush1.msra.mxu0 0.0
    %4931 = vmatprep.subr.mxu0 0.0
    %4932 = vmatpush1.msra.mxu0 0.0
    %4933 = vmatprep.subr.mxu0 0.0
    %4934 = vmatpush1.msra.mxu0 0.0
    %4935 = vmatprep.subr.mxu0 0.0
    %4936 = vmatpush1.msra.mxu0 0.0
    %4937 = vmatprep.mubr.f32.mxu0 0.0
    %4938 = vmatmul.mubr.f32.gmra.mrb[0].mxu0 %v4871
    %v4939 = vpop.f32.mrb[0].mxu0
    %v4940 = vadd.f32 0.0, %v4939
    %v4941 = vpop.f32.mrb[0].mxu0
    %4942 = vdwg.mxu0
    %v4944 = vsel %vm1142, %v4719, 0
    %4946 = vmatprep.subr.mxu0 0.0
    %4947 = vmatpush1.msra.mxu0 %v3951
    %4948 = vmatprep.subr.mxu0 0.0
    %4949 = vmatpush1.msra.mxu0 0.0
    %4950 = vmatprep.subr.mxu0 0.0
    %4951 = vmatpush1.msra.mxu0 0.0
    %4952 = vmatprep.subr.mxu0 0.0
    %4953 = vmatpush1.msra.mxu0 0.0
    %4954 = vmatprep.subr.mxu0 0.0
    %4955 = vmatpush1.msra.mxu0 0.0
    %4956 = vmatprep.subr.mxu0 0.0
    %4957 = vmatpush1.msra.mxu0 0.0
    %4958 = vmatprep.subr.mxu0 0.0
    %4959 = vmatpush1.msra.mxu0 0.0
    %4960 = vmatprep.subr.mxu0 0.0
    %4961 = vmatpush1.msra.mxu0 0.0
    %4962 = vmatprep.subr.mxu0 0.0
    %4963 = vmatpush1.msra.mxu0 0.0
    %4964 = vmatprep.subr.mxu0 0.0
    %4965 = vmatpush1.msra.mxu0 0.0
    %4966 = vmatprep.subr.mxu0 0.0
    %4967 = vmatpush1.msra.mxu0 0.0
    %4968 = vmatprep.subr.mxu0 0.0
    %4969 = vmatpush1.msra.mxu0 0.0
    %4970 = vmatprep.subr.mxu0 0.0
    %4971 = vmatpush1.msra.mxu0 0.0
    %4972 = vmatprep.subr.mxu0 0.0
    %4973 = vmatpush1.msra.mxu0 0.0
    %4974 = vmatprep.subr.mxu0 0.0
    %4975 = vmatpush1.msra.mxu0 0.0
    %4976 = vmatprep.subr.mxu0 0.0
    %4977 = vmatpush1.msra.mxu0 0.0
    %4978 = vmatprep.subr.mxu0 0.0
    %4979 = vmatpush1.msra.mxu0 0.0
    %4980 = vmatprep.subr.mxu0 0.0
    %4981 = vmatpush1.msra.mxu0 0.0
    %4982 = vmatprep.subr.mxu0 0.0
    %4983 = vmatpush1.msra.mxu0 0.0
    %4984 = vmatprep.subr.mxu0 0.0
    %4985 = vmatpush1.msra.mxu0 0.0
    %4986 = vmatprep.subr.mxu0 0.0
    %4987 = vmatpush1.msra.mxu0 0.0
    %4988 = vmatprep.subr.mxu0 0.0
    %4989 = vmatpush1.msra.mxu0 0.0
    %4990 = vmatprep.subr.mxu0 0.0
    %4991 = vmatpush1.msra.mxu0 0.0
    %4992 = vmatprep.subr.mxu0 0.0
    %4993 = vmatpush1.msra.mxu0 0.0
    %4994 = vmatprep.subr.mxu0 0.0
    %4995 = vmatpush1.msra.mxu0 0.0
    %4996 = vmatprep.subr.mxu0 0.0
    %4997 = vmatpush1.msra.mxu0 0.0
    %4998 = vmatprep.subr.mxu0 0.0
    %4999 = vmatpush1.msra.mxu0 0.0
    %5000 = vmatprep.subr.mxu0 0.0
    %5001 = vmatpush1.msra.mxu0 0.0
    %5002 = vmatprep.subr.mxu0 0.0
    %5003 = vmatpush1.msra.mxu0 0.0
    %5004 = vmatprep.subr.mxu0 0.0
    %5005 = vmatpush1.msra.mxu0 0.0
    %5006 = vmatprep.subr.mxu0 0.0
    %5007 = vmatpush1.msra.mxu0 0.0
    %5008 = vmatprep.subr.mxu0 0.0
    %5009 = vmatpush1.msra.mxu0 0.0
    %5010 = vmatprep.mubr.f32.mxu0 0.0
    %5011 = vmatmul.mubr.f32.gmra.mrb[0].mxu0 %v4944
    %v5012 = vpop.f32.mrb[0].mxu0
    %v5013 = vadd.f32 0.0, %v5012
    %v5014 = vpop.f32.mrb[0].mxu0
    %5015 = vdwg.mxu0
    %v5017 = vsel %vm1142, %v4720, 0
    %5019 = vmatprep.subr.mxu0 0.0
    %5020 = vmatpush1.msra.mxu0 %v4016
    %5021 = vmatprep.subr.mxu0 0.0
    %5022 = vmatpush1.msra.mxu0 0.0
    %5023 = vmatprep.subr.mxu0 0.0
    %5024 = vmatpush1.msra.mxu0 0.0
    %5025 = vmatprep.subr.mxu0 0.0
    %5026 = vmatpush1.msra.mxu0 0.0
    %5027 = vmatprep.subr.mxu0 0.0
    %5028 = vmatpush1.msra.mxu0 0.0
    %5029 = vmatprep.subr.mxu0 0.0
    %5030 = vmatpush1.msra.mxu0 0.0
    %5031 = vmatprep.subr.mxu0 0.0
    %5032 = vmatpush1.msra.mxu0 0.0
    %5033 = vmatprep.subr.mxu0 0.0
    %5034 = vmatpush1.msra.mxu0 0.0
    %5035 = vmatprep.subr.mxu0 0.0
    %5036 = vmatpush1.msra.mxu0 0.0
    %5037 = vmatprep.subr.mxu0 0.0
    %5038 = vmatpush1.msra.mxu0 0.0
    %5039 = vmatprep.subr.mxu0 0.0
    %5040 = vmatpush1.msra.mxu0 0.0
    %5041 = vmatprep.subr.mxu0 0.0
    %5042 = vmatpush1.msra.mxu0 0.0
    %5043 = vmatprep.subr.mxu0 0.0
    %5044 = vmatpush1.msra.mxu0 0.0
    %5045 = vmatprep.subr.mxu0 0.0
    %5046 = vmatpush1.msra.mxu0 0.0
    %5047 = vmatprep.subr.mxu0 0.0
    %5048 = vmatpush1.msra.mxu0 0.0
    %5049 = vmatprep.subr.mxu0 0.0
    %5050 = vmatpush1.msra.mxu0 0.0
    %5051 = vmatprep.subr.mxu0 0.0
    %5052 = vmatpush1.msra.mxu0 0.0
    %5053 = vmatprep.subr.mxu0 0.0
    %5054 = vmatpush1.msra.mxu0 0.0
    %5055 = vmatprep.subr.mxu0 0.0
    %5056 = vmatpush1.msra.mxu0 0.0
    %5057 = vmatprep.subr.mxu0 0.0
    %5058 = vmatpush1.msra.mxu0 0.0
    %5059 = vmatprep.subr.mxu0 0.0
    %5060 = vmatpush1.msra.mxu0 0.0
    %5061 = vmatprep.subr.mxu0 0.0
    %5062 = vmatpush1.msra.mxu0 0.0
    %5063 = vmatprep.subr.mxu0 0.0
    %5064 = vmatpush1.msra.mxu0 0.0
    %5065 = vmatprep.subr.mxu0 0.0
    %5066 = vmatpush1.msra.mxu0 0.0
    %5067 = vmatprep.subr.mxu0 0.0
    %5068 = vmatpush1.msra.mxu0 0.0
    %5069 = vmatprep.subr.mxu0 0.0
    %5070 = vmatpush1.msra.mxu0 0.0
    %5071 = vmatprep.subr.mxu0 0.0
    %5072 = vmatpush1.msra.mxu0 0.0
    %5073 = vmatprep.subr.mxu0 0.0
    %5074 = vmatpush1.msra.mxu0 0.0
    %5075 = vmatprep.subr.mxu0 0.0
    %5076 = vmatpush1.msra.mxu0 0.0
    %5077 = vmatprep.subr.mxu0 0.0
    %5078 = vmatpush1.msra.mxu0 0.0
    %5079 = vmatprep.subr.mxu0 0.0
    %5080 = vmatpush1.msra.mxu0 0.0
    %5081 = vmatprep.subr.mxu0 0.0
    %5082 = vmatpush1.msra.mxu0 0.0
    %5083 = vmatprep.mubr.f32.mxu0 0.0
    %5084 = vmatmul.mubr.f32.gmra.mrb[0].mxu0 %v5017
    %v5085 = vpop.f32.mrb[0].mxu0
    %v5086 = vadd.f32 0.0, %v5085
    %v5087 = vpop.f32.mrb[0].mxu0
    %5088 = vdwg.mxu0
    %v5090 = vsel %vm1142, %v4721, 0
    %5092 = vmatprep.subr.mxu0 0.0
    %5093 = vmatpush1.msra.mxu0 %v4017
    %5094 = vmatprep.subr.mxu0 0.0
    %5095 = vmatpush1.msra.mxu0 0.0
    %5096 = vmatprep.subr.mxu0 0.0
    %5097 = vmatpush1.msra.mxu0 0.0
    %5098 = vmatprep.subr.mxu0 0.0
    %5099 = vmatpush1.msra.mxu0 0.0
    %5100 = vmatprep.subr.mxu0 0.0
    %5101 = vmatpush1.msra.mxu0 0.0
    %5102 = vmatprep.subr.mxu0 0.0
    %5103 = vmatpush1.msra.mxu0 0.0
    %5104 = vmatprep.subr.mxu0 0.0
    %5105 = vmatpush1.msra.mxu0 0.0
    %5106 = vmatprep.subr.mxu0 0.0
    %5107 = vmatpush1.msra.mxu0 0.0
    %5108 = vmatprep.subr.mxu0 0.0
    %5109 = vmatpush1.msra.mxu0 0.0
    %5110 = vmatprep.subr.mxu0 0.0
    %5111 = vmatpush1.msra.mxu0 0.0
    %5112 = vmatprep.subr.mxu0 0.0
    %5113 = vmatpush1.msra.mxu0 0.0
    %5114 = vmatprep.subr.mxu0 0.0
    %5115 = vmatpush1.msra.mxu0 0.0
    %5116 = vmatprep.subr.mxu0 0.0
    %5117 = vmatpush1.msra.mxu0 0.0
    %5118 = vmatprep.subr.mxu0 0.0
    %5119 = vmatpush1.msra.mxu0 0.0
    %5120 = vmatprep.subr.mxu0 0.0
    %5121 = vmatpush1.msra.mxu0 0.0
    %5122 = vmatprep.subr.mxu0 0.0
    %5123 = vmatpush1.msra.mxu0 0.0
    %5124 = vmatprep.subr.mxu0 0.0
    %5125 = vmatpush1.msra.mxu0 0.0
    %5126 = vmatprep.subr.mxu0 0.0
    %5127 = vmatpush1.msra.mxu0 0.0
    %5128 = vmatprep.subr.mxu0 0.0
    %5129 = vmatpush1.msra.mxu0 0.0
    %5130 = vmatprep.subr.mxu0 0.0
    %5131 = vmatpush1.msra.mxu0 0.0
    %5132 = vmatprep.subr.mxu0 0.0
    %5133 = vmatpush1.msra.mxu0 0.0
    %5134 = vmatprep.subr.mxu0 0.0
    %5135 = vmatpush1.msra.mxu0 0.0
    %5136 = vmatprep.subr.mxu0 0.0
    %5137 = vmatpush1.msra.mxu0 0.0
    %5138 = vmatprep.subr.mxu0 0.0
    %5139 = vmatpush1.msra.mxu0 0.0
    %5140 = vmatprep.subr.mxu0 0.0
    %5141 = vmatpush1.msra.mxu0 0.0
    %5142 = vmatprep.subr.mxu0 0.0
    %5143 = vmatpush1.msra.mxu0 0.0
    %5144 = vmatprep.subr.mxu0 0.0
    %5145 = vmatpush1.msra.mxu0 0.0
    %5146 = vmatprep.subr.mxu0 0.0
    %5147 = vmatpush1.msra.mxu0 0.0
    %5148 = vmatprep.subr.mxu0 0.0
    %5149 = vmatpush1.msra.mxu0 0.0
    %5150 = vmatprep.subr.mxu0 0.0
    %5151 = vmatpush1.msra.mxu0 0.0
    %5152 = vmatprep.subr.mxu0 0.0
    %5153 = vmatpush1.msra.mxu0 0.0
    %5154 = vmatprep.subr.mxu0 0.0
    %5155 = vmatpush1.msra.mxu0 0.0
    %5156 = vmatprep.mubr.f32.mxu0 0.0
    %5157 = vmatmul.mubr.f32.gmra.mrb[0].mxu0 %v5090
    %v5158 = vpop.f32.mrb[0].mxu0
    %v5159 = vadd.f32 0.0, %v5158
    %v5160 = vpop.f32.mrb[0].mxu0
    %5161 = vdwg.mxu0
    %v5163 = vsel %vm1142, %v4722, 0
    %5165 = vmatprep.subr.mxu0 0.0
    %5166 = vmatpush1.msra.mxu0 %v4018
    %5167 = vmatprep.subr.mxu0 0.0
    %5168 = vmatpush1.msra.mxu0 0.0
    %5169 = vmatprep.subr.mxu0 0.0
    %5170 = vmatpush1.msra.mxu0 0.0
    %5171 = vmatprep.subr.mxu0 0.0
    %5172 = vmatpush1.msra.mxu0 0.0
    %5173 = vmatprep.subr.mxu0 0.0
    %5174 = vmatpush1.msra.mxu0 0.0
    %5175 = vmatprep.subr.mxu0 0.0
    %5176 = vmatpush1.msra.mxu0 0.0
    %5177 = vmatprep.subr.mxu0 0.0
    %5178 = vmatpush1.msra.mxu0 0.0
    %5179 = vmatprep.subr.mxu0 0.0
    %5180 = vmatpush1.msra.mxu0 0.0
    %5181 = vmatprep.subr.mxu0 0.0
    %5182 = vmatpush1.msra.mxu0 0.0
    %5183 = vmatprep.subr.mxu0 0.0
    %5184 = vmatpush1.msra.mxu0 0.0
    %5185 = vmatprep.subr.mxu0 0.0
    %5186 = vmatpush1.msra.mxu0 0.0
    %5187 = vmatprep.subr.mxu0 0.0
    %5188 = vmatpush1.msra.mxu0 0.0
    %5189 = vmatprep.subr.mxu0 0.0
    %5190 = vmatpush1.msra.mxu0 0.0
    %5191 = vmatprep.subr.mxu0 0.0
    %5192 = vmatpush1.msra.mxu0 0.0
    %5193 = vmatprep.subr.mxu0 0.0
    %5194 = vmatpush1.msra.mxu0 0.0
    %5195 = vmatprep.subr.mxu0 0.0
    %5196 = vmatpush1.msra.mxu0 0.0
    %5197 = vmatprep.subr.mxu0 0.0
    %5198 = vmatpush1.msra.mxu0 0.0
    %5199 = vmatprep.subr.mxu0 0.0
    %5200 = vmatpush1.msra.mxu0 0.0
    %5201 = vmatprep.subr.mxu0 0.0
    %5202 = vmatpush1.msra.mxu0 0.0
    %5203 = vmatprep.subr.mxu0 0.0
    %5204 = vmatpush1.msra.mxu0 0.0
    %5205 = vmatprep.subr.mxu0 0.0
    %5206 = vmatpush1.msra.mxu0 0.0
    %5207 = vmatprep.subr.mxu0 0.0
    %5208 = vmatpush1.msra.mxu0 0.0
    %5209 = vmatprep.subr.mxu0 0.0
    %5210 = vmatpush1.msra.mxu0 0.0
    %5211 = vmatprep.subr.mxu0 0.0
    %5212 = vmatpush1.msra.mxu0 0.0
    %5213 = vmatprep.subr.mxu0 0.0
    %5214 = vmatpush1.msra.mxu0 0.0
    %5215 = vmatprep.subr.mxu0 0.0
    %5216 = vmatpush1.msra.mxu0 0.0
    %5217 = vmatprep.subr.mxu0 0.0
    %5218 = vmatpush1.msra.mxu0 0.0
    %5219 = vmatprep.subr.mxu0 0.0
    %5220 = vmatpush1.msra.mxu0 0.0
    %5221 = vmatprep.subr.mxu0 0.0
    %5222 = vmatpush1.msra.mxu0 0.0
    %5223 = vmatprep.subr.mxu0 0.0
    %5224 = vmatpush1.msra.mxu0 0.0
    %5225 = vmatprep.subr.mxu0 0.0
    %5226 = vmatpush1.msra.mxu0 0.0
    %5227 = vmatprep.subr.mxu0 0.0
    %5228 = vmatpush1.msra.mxu0 0.0
    %5229 = vmatprep.mubr.f32.mxu0 0.0
    %5230 = vmatmul.mubr.f32.gmra.mrb[0].mxu0 %v5163
    %v5231 = vpop.f32.mrb[0].mxu0
    %v5232 = vadd.f32 0.0, %v5231
    %v5233 = vpop.f32.mrb[0].mxu0
    %5234 = vdwg.mxu0
    %v5236 = vsel %vm1142, %v4723, 0
    %5238 = vmatprep.subr.mxu0 0.0
    %5239 = vmatpush1.msra.mxu0 %v4019
    %5240 = vmatprep.subr.mxu0 0.0
    %5241 = vmatpush1.msra.mxu0 0.0
    %5242 = vmatprep.subr.mxu0 0.0
    %5243 = vmatpush1.msra.mxu0 0.0
    %5244 = vmatprep.subr.mxu0 0.0
    %5245 = vmatpush1.msra.mxu0 0.0
    %5246 = vmatprep.subr.mxu0 0.0
    %5247 = vmatpush1.msra.mxu0 0.0
    %5248 = vmatprep.subr.mxu0 0.0
    %5249 = vmatpush1.msra.mxu0 0.0
    %5250 = vmatprep.subr.mxu0 0.0
    %5251 = vmatpush1.msra.mxu0 0.0
    %5252 = vmatprep.subr.mxu0 0.0
    %5253 = vmatpush1.msra.mxu0 0.0
    %5254 = vmatprep.subr.mxu0 0.0
    %5255 = vmatpush1.msra.mxu0 0.0
    %5256 = vmatprep.subr.mxu0 0.0
    %5257 = vmatpush1.msra.mxu0 0.0
    %5258 = vmatprep.subr.mxu0 0.0
    %5259 = vmatpush1.msra.mxu0 0.0
    %5260 = vmatprep.subr.mxu0 0.0
    %5261 = vmatpush1.msra.mxu0 0.0
    %5262 = vmatprep.subr.mxu0 0.0
    %5263 = vmatpush1.msra.mxu0 0.0
    %5264 = vmatprep.subr.mxu0 0.0
    %5265 = vmatpush1.msra.mxu0 0.0
    %5266 = vmatprep.subr.mxu0 0.0
    %5267 = vmatpush1.msra.mxu0 0.0
    %5268 = vmatprep.subr.mxu0 0.0
    %5269 = vmatpush1.msra.mxu0 0.0
    %5270 = vmatprep.subr.mxu0 0.0
    %5271 = vmatpush1.msra.mxu0 0.0
    %5272 = vmatprep.subr.mxu0 0.0
    %5273 = vmatpush1.msra.mxu0 0.0
    %5274 = vmatprep.subr.mxu0 0.0
    %5275 = vmatpush1.msra.mxu0 0.0
    %5276 = vmatprep.subr.mxu0 0.0
    %5277 = vmatpush1.msra.mxu0 0.0
    %5278 = vmatprep.subr.mxu0 0.0
    %5279 = vmatpush1.msra.mxu0 0.0
    %5280 = vmatprep.subr.mxu0 0.0
    %5281 = vmatpush1.msra.mxu0 0.0
    %5282 = vmatprep.subr.mxu0 0.0
    %5283 = vmatpush1.msra.mxu0 0.0
    %5284 = vmatprep.subr.mxu0 0.0
    %5285 = vmatpush1.msra.mxu0 0.0
    %5286 = vmatprep.subr.mxu0 0.0
    %5287 = vmatpush1.msra.mxu0 0.0
    %5288 = vmatprep.subr.mxu0 0.0
    %5289 = vmatpush1.msra.mxu0 0.0
    %5290 = vmatprep.subr.mxu0 0.0
    %5291 = vmatpush1.msra.mxu0 0.0
    %5292 = vmatprep.subr.mxu0 0.0
    %5293 = vmatpush1.msra.mxu0 0.0
    %5294 = vmatprep.subr.mxu0 0.0
    %5295 = vmatpush1.msra.mxu0 0.0
    %5296 = vmatprep.subr.mxu0 0.0
    %5297 = vmatpush1.msra.mxu0 0.0
    %5298 = vmatprep.subr.mxu0 0.0
    %5299 = vmatpush1.msra.mxu0 0.0
    %5300 = vmatprep.subr.mxu0 0.0
    %5301 = vmatpush1.msra.mxu0 0.0
    %5302 = vmatprep.mubr.f32.mxu0 0.0
    %5303 = vmatmul.mubr.f32.gmra.mrb[0].mxu0 %v5236
    %v5304 = vpop.f32.mrb[0].mxu0
    %v5305 = vadd.f32 0.0, %v5304
    %v5306 = vpop.f32.mrb[0].mxu0
    %5307 = vdwg.mxu0
    %v5308 = vcombine.low %v4794, %v4940
    %v5309 = vcombine.high %v4794, %v4940
    %v5311 = vunpack.c.l.s4 1983009808
    %v5312 = vunpack.c.0.s8 %v5311
    %v5313 = vlaneseq
    %v5314 = vshrl.u32 %v5313, 7
    %v5315 = vsub.s32 %v5312, %v5314
    %v5316 = vrot.slane %v5308, %v5315
    %v5318 = vunpack.c.l.s4 1983009808
    %v5319 = vunpack.c.0.s8 %v5318
    %v5320 = vlaneseq
    %v5321 = vshrl.u32 %v5320, 7
    %v5322 = vsub.s32 %v5319, %v5321
    %v5323 = vrot.slane %v5309, %v5322
    %v5324 = vcombine.low %v4867, %v5013
    %v5325 = vcombine.high %v4867, %v5013
    %v5327 = vunpack.c.l.s4 1983009808
    %v5328 = vunpack.c.0.s8 %v5327
    %v5329 = vlaneseq
    %v5330 = vshrl.u32 %v5329, 7
    %v5331 = vsub.s32 %v5328, %v5330
    %v5332 = vrot.slane %v5324, %v5331
    %v5334 = vunpack.c.l.s4 1983009808
    %v5335 = vunpack.c.0.s8 %v5334
    %v5336 = vlaneseq
    %v5337 = vshrl.u32 %v5336, 7
    %v5338 = vsub.s32 %v5335, %v5337
    %v5339 = vrot.slane %v5325, %v5338
    %v5340 = vcombine.low %v5316, %v5332
    %v5341 = vcombine.high %v5316, %v5332
    %v5343 = vunpack.c.l.s4 1934713408
    %v5344 = vunpack.c.0.s8 %v5343
    %v5345 = vlaneseq
    %v5346 = vshrl.u32 %v5345, 7
    %v5347 = vsub.s32 %v5344, %v5346
    %v5348 = vrot.slane %v5340, %v5347
    %v5350 = vunpack.c.l.s4 1934713408
    %v5351 = vunpack.c.0.s8 %v5350
    %v5352 = vlaneseq
    %v5353 = vshrl.u32 %v5352, 7
    %v5354 = vsub.s32 %v5351, %v5353
    %v5355 = vrot.slane %v5341, %v5354
    %v5356 = vcombine.low %v5323, %v5339
    %v5357 = vcombine.high %v5323, %v5339
    %v5359 = vunpack.c.l.s4 1934713408
    %v5360 = vunpack.c.0.s8 %v5359
    %v5361 = vlaneseq
    %v5362 = vshrl.u32 %v5361, 7
    %v5363 = vsub.s32 %v5360, %v5362
    %v5364 = vrot.slane %v5356, %v5363
    %v5366 = vunpack.c.l.s4 1934713408
    %v5367 = vunpack.c.0.s8 %v5366
    %v5368 = vlaneseq
    %v5369 = vshrl.u32 %v5368, 7
    %v5370 = vsub.s32 %v5367, %v5369
    %v5371 = vrot.slane %v5357, %v5370
    %v5372 = vcombine.high %v5348, 0.0
    %v5373 = vcombine.high %v5355, 0.0
    %v5374 = vcombine.high %v5364, 0.0
    %v5375 = vcombine.high %v5371, 0.0
    %v5376 = vcombine.low %v5086, %v5232
    %v5377 = vcombine.high %v5086, %v5232
    %v5379 = vunpack.c.l.s4 1983009808
    %v5380 = vunpack.c.0.s8 %v5379
    %v5381 = vlaneseq
    %v5382 = vshrl.u32 %v5381, 7
    %v5383 = vsub.s32 %v5380, %v5382
    %v5384 = vrot.slane %v5376, %v5383
    %v5386 = vunpack.c.l.s4 1983009808
    %v5387 = vunpack.c.0.s8 %v5386
    %v5388 = vlaneseq
    %v5389 = vshrl.u32 %v5388, 7
    %v5390 = vsub.s32 %v5387, %v5389
    %v5391 = vrot.slane %v5377, %v5390
    %v5392 = vcombine.low %v5159, %v5305
    %v5393 = vcombine.high %v5159, %v5305
    %v5395 = vunpack.c.l.s4 1983009808
    %v5396 = vunpack.c.0.s8 %v5395
    %v5397 = vlaneseq
    %v5398 = vshrl.u32 %v5397, 7
    %v5399 = vsub.s32 %v5396, %v5398
    %v5400 = vrot.slane %v5392, %v5399
    %v5402 = vunpack.c.l.s4 1983009808
    %v5403 = vunpack.c.0.s8 %v5402
    %v5404 = vlaneseq
    %v5405 = vshrl.u32 %v5404, 7
    %v5406 = vsub.s32 %v5403, %v5405
    %v5407 = vrot.slane %v5393, %v5406
    %v5408 = vcombine.low %v5384, %v5400
    %v5409 = vcombine.high %v5384, %v5400
    %v5411 = vunpack.c.l.s4 1934713408
    %v5412 = vunpack.c.0.s8 %v5411
    %v5413 = vlaneseq
    %v5414 = vshrl.u32 %v5413, 7
    %v5415 = vsub.s32 %v5412, %v5414
    %v5416 = vrot.slane %v5408, %v5415
    %v5418 = vunpack.c.l.s4 1934713408
    %v5419 = vunpack.c.0.s8 %v5418
    %v5420 = vlaneseq
    %v5421 = vshrl.u32 %v5420, 7
    %v5422 = vsub.s32 %v5419, %v5421
    %v5423 = vrot.slane %v5409, %v5422
    %v5424 = vcombine.low %v5391, %v5407
    %v5425 = vcombine.high %v5391, %v5407
    %v5427 = vunpack.c.l.s4 1934713408
    %v5428 = vunpack.c.0.s8 %v5427
    %v5429 = vlaneseq
    %v5430 = vshrl.u32 %v5429, 7
    %v5431 = vsub.s32 %v5428, %v5430
    %v5432 = vrot.slane %v5424, %v5431
    %v5434 = vunpack.c.l.s4 1934713408
    %v5435 = vunpack.c.0.s8 %v5434
    %v5436 = vlaneseq
    %v5437 = vshrl.u32 %v5436, 7
    %v5438 = vsub.s32 %v5435, %v5437
    %v5439 = vrot.slane %v5425, %v5438
    %v5440 = vcombine.high %v5416, 0.0
    %v5441 = vcombine.high %v5423, 0.0
    %v5442 = vcombine.high %v5432, 0.0
    %v5443 = vcombine.high %v5439, 0.0
    %v5444 = vcombine.low %v5348, %v5355
    %v5446 = vunpack.c.l.s4 1983009808
    %v5447 = vunpack.c.0.s8 %v5446
    %v5448 = vlaneseq
    %v5449 = vshrl.u32 %v5448, 7
    %v5450 = vsub.s32 %v5447, %v5449
    %v5451 = vrot.slane %v5444, %v5450
    %v5452 = vcombine.low %v5372, %v5373
    %v5454 = vunpack.c.l.s4 1983009808
    %v5455 = vunpack.c.0.s8 %v5454
    %v5456 = vlaneseq
    %v5457 = vshrl.u32 %v5456, 7
    %v5458 = vsub.s32 %v5455, %v5457
    %v5459 = vrot.slane %v5452, %v5458
    %v5460 = vcombine.low %v5364, %v5371
    %v5462 = vunpack.c.l.s4 1983009808
    %v5463 = vunpack.c.0.s8 %v5462
    %v5464 = vlaneseq
    %v5465 = vshrl.u32 %v5464, 7
    %v5466 = vsub.s32 %v5463, %v5465
    %v5467 = vrot.slane %v5460, %v5466
    %v5468 = vcombine.low %v5374, %v5375
    %v5470 = vunpack.c.l.s4 1983009808
    %v5471 = vunpack.c.0.s8 %v5470
    %v5472 = vlaneseq
    %v5473 = vshrl.u32 %v5472, 7
    %v5474 = vsub.s32 %v5471, %v5473
    %v5475 = vrot.slane %v5468, %v5474
    %v5476 = vcombine.low %v5451, %v5459
    %v5477 = vcombine.high %v5451, %v5459
    %v5479 = vunpack.c.l.s4 1934713408
    %v5480 = vunpack.c.0.s8 %v5479
    %v5481 = vlaneseq
    %v5482 = vshrl.u32 %v5481, 7
    %v5483 = vsub.s32 %v5480, %v5482
    %v5484 = vrot.slane %v5476, %v5483
    %v5486 = vunpack.c.l.s4 1934713408
    %v5487 = vunpack.c.0.s8 %v5486
    %v5488 = vlaneseq
    %v5489 = vshrl.u32 %v5488, 7
    %v5490 = vsub.s32 %v5487, %v5489
    %v5491 = vrot.slane %v5477, %v5490
    %v5492 = vcombine.low %v5467, %v5475
    %v5493 = vcombine.high %v5467, %v5475
    %v5495 = vunpack.c.l.s4 1934713408
    %v5496 = vunpack.c.0.s8 %v5495
    %v5497 = vlaneseq
    %v5498 = vshrl.u32 %v5497, 7
    %v5499 = vsub.s32 %v5496, %v5498
    %v5500 = vrot.slane %v5492, %v5499
    %v5502 = vunpack.c.l.s4 1934713408
    %v5503 = vunpack.c.0.s8 %v5502
    %v5504 = vlaneseq
    %v5505 = vshrl.u32 %v5504, 7
    %v5506 = vsub.s32 %v5503, %v5505
    %v5507 = vrot.slane %v5493, %v5506
    %v5508 = vcombine.low %v5484, %v5500
    %v5509 = vcombine.high %v5484, %v5500
    %v5510 = vcombine.low %v5491, %v5507
    %v5511 = vcombine.high %v5491, %v5507
    %v5512 = vcombine.low %v5416, %v5423
    %v5514 = vunpack.c.l.s4 1983009808
    %v5515 = vunpack.c.0.s8 %v5514
    %v5516 = vlaneseq
    %v5517 = vshrl.u32 %v5516, 7
    %v5518 = vsub.s32 %v5515, %v5517
    %v5519 = vrot.slane %v5512, %v5518
    %v5520 = vcombine.low %v5440, %v5441
    %v5522 = vunpack.c.l.s4 1983009808
    %v5523 = vunpack.c.0.s8 %v5522
    %v5524 = vlaneseq
    %v5525 = vshrl.u32 %v5524, 7
    %v5526 = vsub.s32 %v5523, %v5525
    %v5527 = vrot.slane %v5520, %v5526
    %v5528 = vcombine.low %v5432, %v5439
    %v5530 = vunpack.c.l.s4 1983009808
    %v5531 = vunpack.c.0.s8 %v5530
    %v5532 = vlaneseq
    %v5533 = vshrl.u32 %v5532, 7
    %v5534 = vsub.s32 %v5531, %v5533
    %v5535 = vrot.slane %v5528, %v5534
    %v5536 = vcombine.low %v5442, %v5443
    %v5538 = vunpack.c.l.s4 1983009808
    %v5539 = vunpack.c.0.s8 %v5538
    %v5540 = vlaneseq
    %v5541 = vshrl.u32 %v5540, 7
    %v5542 = vsub.s32 %v5539, %v5541
    %v5543 = vrot.slane %v5536, %v5542
    %v5544 = vcombine.low %v5519, %v5527
    %v5545 = vcombine.high %v5519, %v5527
    %v5547 = vunpack.c.l.s4 1934713408
    %v5548 = vunpack.c.0.s8 %v5547
    %v5549 = vlaneseq
    %v5550 = vshrl.u32 %v5549, 7
    %v5551 = vsub.s32 %v5548, %v5550
    %v5552 = vrot.slane %v5544, %v5551
    %v5554 = vunpack.c.l.s4 1934713408
    %v5555 = vunpack.c.0.s8 %v5554
    %v5556 = vlaneseq
    %v5557 = vshrl.u32 %v5556, 7
    %v5558 = vsub.s32 %v5555, %v5557
    %v5559 = vrot.slane %v5545, %v5558
    %v5560 = vcombine.low %v5535, %v5543
    %v5561 = vcombine.high %v5535, %v5543
    %v5563 = vunpack.c.l.s4 1934713408
    %v5564 = vunpack.c.0.s8 %v5563
    %v5565 = vlaneseq
    %v5566 = vshrl.u32 %v5565, 7
    %v5567 = vsub.s32 %v5564, %v5566
    %v5568 = vrot.slane %v5560, %v5567
    %v5570 = vunpack.c.l.s4 1934713408
    %v5571 = vunpack.c.0.s8 %v5570
    %v5572 = vlaneseq
    %v5573 = vshrl.u32 %v5572, 7
    %v5574 = vsub.s32 %v5571, %v5573
    %v5575 = vrot.slane %v5561, %v5574
    %v5576 = vcombine.low %v5552, %v5568
    %v5577 = vcombine.high %v5552, %v5568
    %v5578 = vcombine.low %v5559, %v5575
    %v5579 = vcombine.high %v5559, %v5575
    %5582 = vrot.lane.b32.xlu0 %v5509, 8
    %v5583 = vpop.permute.xlu0 %5582
    %5584 = vrot.lane.b32.xlu0 %v5577, 8
    %v5585 = vpop.permute.xlu0 %5584
    %5590 = vrot.lane.b32.xlu0 %v5510, 16
    %v5591 = vpop.permute.xlu0 %5590
    %5592 = vrot.lane.b32.xlu0 %v5578, 16
    %v5593 = vpop.permute.xlu0 %5592
    %5598 = vrot.lane.b32.xlu0 %v5511, 24
    %v5599 = vpop.permute.xlu0 %5598
    %5600 = vrot.lane.b32.xlu0 %v5579, 24
    %v5601 = vpop.permute.xlu0 %5600
    %v5604 = vsel %vm1142, %v5508, %v5583
    %v5605 = vsel %vm1142, %v5576, %v5585
    %v5606 = vsel %vm2729, %v5604, %v5591
    %v5607 = vsel %vm2729, %v5605, %v5593
    %v5608 = vsel %vm2732, %v5606, %v5599
    %v5609 = vsel %vm2732, %v5607, %v5601
    %v5610 = vpack.c.bf16 %v5609, %v5608
    %s5611 = scalar_lea.vmem %s7, 16
    %v5612 = vld [vmem:[%s5611] sm:$0xf]
    %v5613 = vld [vmem:[%s5611 + $0x4] sm:$0xf]
    %v5614 = vld [vmem:[%s5611 + $0x8] sm:$0xf]
    %v5615 = vld [vmem:[%s5611 + $0xc] sm:$0xf]
    %s5616 = scalar_lea.vmem [#allocation5], 1
    %v5617 = vld [vmem:[%s5616] sm:$0x1]
    %v5619 = vlaneseq
    %v5620 = vshrl.u32 %v5619, 7
    %v5621 = vsub.s32 0, %v5620
    %v5622 = vrot.slane %v5617, %v5621
    %v5628 = vunpack.c.l.b16 %v5612
    %v5629 = vunpack.c.l.b16 %v5613
    %v5630 = vunpack.c.l.b16 %v5614
    %v5631 = vunpack.c.l.b16 %v5615
    %v5632 = vpack.c.b16 %v5629, %v5628
    %v5633 = vpack.c.b16 %v5631, %v5630
    %v5637 = vsel %vm146, %v5610, 0
    %5639 = vmatprep.subr.bf16.mxu0 0
    %5640 = vmatpush1.bf16.msra.mxu0 %v5632
    %5641 = vmatprep.subr.bf16.mxu0 0
    %5642 = vmatpush1.bf16.msra.mxu0 %v5633
    %5643 = vmatprep.subr.bf16.mxu0 0
    %5644 = vmatpush1.bf16.msra.mxu0 0
    %5645 = vmatprep.subr.bf16.mxu0 0
    %5646 = vmatpush1.bf16.msra.mxu0 0
    %5647 = vmatprep.subr.bf16.mxu0 0
    %5648 = vmatpush1.bf16.msra.mxu0 0
    %5649 = vmatprep.subr.bf16.mxu0 0
    %5650 = vmatpush1.bf16.msra.mxu0 0
    %5651 = vmatprep.subr.bf16.mxu0 0
    %5652 = vmatpush1.bf16.msra.mxu0 0
    %5653 = vmatprep.subr.bf16.mxu0 0
    %5654 = vmatpush1.bf16.msra.mxu0 0
    %5655 = vmatprep.subr.bf16.mxu0 0
    %5656 = vmatpush1.bf16.msra.mxu0 0
    %5657 = vmatprep.subr.bf16.mxu0 0
    %5658 = vmatpush1.bf16.msra.mxu0 0
    %5659 = vmatprep.subr.bf16.mxu0 0
    %5660 = vmatpush1.bf16.msra.mxu0 0
    %5661 = vmatprep.subr.bf16.mxu0 0
    %5662 = vmatpush1.bf16.msra.mxu0 0
    %5663 = vmatprep.subr.bf16.mxu0 0
    %5664 = vmatpush1.bf16.msra.mxu0 0
    %5665 = vmatprep.subr.bf16.mxu0 0
    %5666 = vmatpush1.bf16.msra.mxu0 0
    %5667 = vmatprep.subr.bf16.mxu0 0
    %5668 = vmatpush1.bf16.msra.mxu0 0
    %5669 = vmatprep.subr.bf16.mxu0 0
    %5670 = vmatpush1.bf16.msra.mxu0 0
    %5671 = vmatprep.mubr.bf16.mxu0 0
    %5672 = vmatmul.mubr.bf16.gmra.mrb[0].mxu0 %v5637
    %v5673 = vpop.f32.mrb[0].mxu0
    %v5674 = vadd.f32 %v5622, %v5673
    %v5675 = vpop.f32.mrb[0].mxu0
    %v5676 = vpop.f32.mrb[0].mxu0
    %v5677 = vadd.f32 %v5622, %v5676
    %v5678 = vpop.f32.mrb[0].mxu0
    %5679 = vdwg.mxu0
    %v5680 = vadd.f32 %v3018, %v5674
    %v5681 = vadd.f32 %v3019, %v5677
    %s5682 = scalar_lea.vmem [#allocation7], 1
    %v5683 = vld [vmem:[%s5682] sm:$0x1]
    %s5684 = scalar_lea.vmem [#allocation8], 1
    %v5685 = vld [vmem:[%s5684] sm:$0x1]
    %v5686 = vsel %vm146, %v5680, 0.0
    %5687 = vadd.xlane.f32.xlu0 %v5686
    %v5688 = vpop.xlane.xlu0 %5687
    %v5689 = vsel %vm146, %v5681, 0.0
    %5690 = vadd.xlane.f32.xlu0 %v5689
    %v5691 = vpop.xlane.xlu0 %5690
    %v5692 = vmul.f32 %v5688, %v153
    %v5693 = vmul.f32 %v5691, %v153
    %v5694 = vsub.f32 %v5680, %v5692
    %v5695 = vsub.f32 %v5681, %v5693
    %v5696 = vmul.f32 %v5694, %v5694
    %v5697 = vmul.f32 %v5695, %v5695
    %v5698 = vsel %vm146, %v5696, 0.0
    %5699 = vadd.xlane.f32.xlu0 %v5698
    %v5700 = vpop.xlane.xlu0 %5699
    %v5701 = vsel %vm146, %v5697, 0.0
    %5702 = vadd.xlane.f32.xlu0 %v5701
    %v5703 = vpop.xlane.xlu0 %5702
    %v5704 = vmul.f32 %v5700, %v153
    %v5705 = vmul.f32 %v5703, %v153
    %v5706 = vadd.f32 %v5704, 1e-05
    %v5707 = vadd.f32 %v5705, 1e-05
    %v5708 = vrsqrt.pop %v5706
    %v5709 = vrsqrt.pop %v5707
    %v5710 = vmul.f32 %v5694, %v5708
    %v5711 = vmul.f32 %v5695, %v5709
    %v5713 = vlaneseq
    %v5714 = vshrl.u32 %v5713, 7
    %v5715 = vsub.s32 0, %v5714
    %v5716 = vrot.slane %v5683, %v5715
    %v5718 = vmul.f32 %v5710, %v5716
    %v5719 = vmul.f32 %v5711, %v5716
    %v5721 = vlaneseq
    %v5722 = vshrl.u32 %v5721, 7
    %v5723 = vsub.s32 0, %v5722
    %v5724 = vrot.slane %v5685, %v5723
    %v5726 = vadd.f32 %v5718, %v5724
    %v5727 = vadd.f32 %v5719, %v5724
    %v5728 = vpack.c.bf16 %v5727, %v5726
    %s5729 = scalar_lea.vmem %s11, 16
    %v5730 = vld [vmem:[%s5729] sm:$0xf]
    %v5731 = vld [vmem:[%s5729 + $0x4] sm:$0xf]
    %v5732 = vld [vmem:[%s5729 + $0x8] sm:$0xf]
    %v5733 = vld [vmem:[%s5729 + $0xc] sm:$0xf]
    %s5734 = scalar_lea.vmem %s12, 1
    %v5735 = vld [vmem:[%s5734] sm:$0x1]
    %v5737 = vlaneseq
    %v5738 = vshrl.u32 %v5737, 7
    %v5739 = vsub.s32 0, %v5738
    %v5740 = vrot.slane %v5735, %v5739
    %v5746 = vunpack.c.l.b16 %v5730
    %v5747 = vunpack.c.l.b16 %v5731
    %v5748 = vunpack.c.l.b16 %v5732
    %v5749 = vunpack.c.l.b16 %v5733
    %v5750 = vpack.c.b16 %v5747, %v5746
    %v5751 = vpack.c.b16 %v5749, %v5748
    %v5755 = vsel %vm146, %v5728, 0
    %5757 = vmatprep.subr.bf16.mxu0 0
    %5758 = vmatpush1.bf16.msra.mxu0 %v5750
    %5759 = vmatprep.subr.bf16.mxu0 0
    %5760 = vmatpush1.bf16.msra.mxu0 %v5751
    %5761 = vmatprep.subr.bf16.mxu0 0
    %5762 = vmatpush1.bf16.msra.mxu0 0
    %5763 = vmatprep.subr.bf16.mxu0 0
    %5764 = vmatpush1.bf16.msra.mxu0 0
    %5765 = vmatprep.subr.bf16.mxu0 0
    %5766 = vmatpush1.bf16.msra.mxu0 0
    %5767 = vmatprep.subr.bf16.mxu0 0
    %5768 = vmatpush1.bf16.msra.mxu0 0
    %5769 = vmatprep.subr.bf16.mxu0 0
    %5770 = vmatpush1.bf16.msra.mxu0 0
    %5771 = vmatprep.subr.bf16.mxu0 0
    %5772 = vmatpush1.bf16.msra.mxu0 0
    %5773 = vmatprep.subr.bf16.mxu0 0
    %5774 = vmatpush1.bf16.msra.mxu0 0
    %5775 = vmatprep.subr.bf16.mxu0 0
    %5776 = vmatpush1.bf16.msra.mxu0 0
    %5777 = vmatprep.subr.bf16.mxu0 0
    %5778 = vmatpush1.bf16.msra.mxu0 0
    %5779 = vmatprep.subr.bf16.mxu0 0
    %5780 = vmatpush1.bf16.msra.mxu0 0
    %5781 = vmatprep.subr.bf16.mxu0 0
    %5782 = vmatpush1.bf16.msra.mxu0 0
    %5783 = vmatprep.subr.bf16.mxu0 0
    %5784 = vmatpush1.bf16.msra.mxu0 0
    %5785 = vmatprep.subr.bf16.mxu0 0
    %5786 = vmatpush1.bf16.msra.mxu0 0
    %5787 = vmatprep.subr.bf16.mxu0 0
    %5788 = vmatpush1.bf16.msra.mxu0 0
    %5789 = vmatprep.mubr.bf16.mxu0 0
    %5790 = vmatmul.mubr.bf16.gmra.mrb[0].mxu0 %v5755
    %v5791 = vpop.f32.mrb[0].mxu0
    %v5792 = vadd.f32 %v5740, %v5791
    %v5793 = vpop.f32.mrb[0].mxu0
    %v5794 = vpop.f32.mrb[0].mxu0
    %v5795 = vadd.f32 %v5740, %v5794
    %v5796 = vpop.f32.mrb[0].mxu0
    %5797 = vdwg.mxu0
    %v5798 = vmul.f32 %v5792, 1.702
    %v5799 = vmul.f32 %v5795, 1.702
    %v5800 = vxor.u32 %v5798, 2147483648
    %v5801 = vxor.u32 %v5799, 2147483648
    %v5802 = vmul.f32 %v5800, 1.442695
    %v5803 = vpow.pop %v5802
    %v5804 = vmul.f32 %v5801, 1.442695
    %v5805 = vpow.pop %v5804
    %v5806 = vadd.f32 %v5803, 1.0
    %v5807 = vadd.f32 %v5805, 1.0
    %v5808 = vrcp.pop %v5806
    %v5809 = vmul.f32 1.0, %v5808
    %v5810 = vrcp.pop %v5807
    %v5811 = vmul.f32 1.0, %v5810
    %v5812 = vmul.f32 %v5792, %v5809
    %v5813 = vmul.f32 %v5795, %v5811
    %v5814 = vpack.c.bf16 %v5813, %v5812
    %s5815 = scalar_lea.vmem %s13, 32
    %v5816 = vld [vmem:[%s5815] sm:$0xf]
    %v5817 = vld [vmem:[%s5815 + $0x4] sm:$0xf]
    %v5818 = vld [vmem:[%s5815 + $0x8] sm:$0xf]
    %v5819 = vld [vmem:[%s5815 + $0xc] sm:$0xf]
    %v5820 = vld [vmem:[%s5815 + $0x10] sm:$0xf]
    %v5821 = vld [vmem:[%s5815 + $0x14] sm:$0xf]
    %v5822 = vld [vmem:[%s5815 + $0x18] sm:$0xf]
    %v5823 = vld [vmem:[%s5815 + $0x1c] sm:$0xf]
    %s5824 = scalar_lea.vmem %s14, 1
    %v5825 = vld [vmem:[%s5824] sm:$0x1]
    %v5827 = vlaneseq
    %v5828 = vshrl.u32 %v5827, 7
    %v5829 = vsub.s32 0, %v5828
    %v5830 = vrot.slane %v5825, %v5829
    %v5840 = vunpack.c.l.b16 %v5816
    %v5841 = vunpack.c.l.b16 %v5817
    %v5842 = vunpack.c.l.b16 %v5818
    %v5843 = vunpack.c.l.b16 %v5819
    %v5844 = vunpack.c.l.b16 %v5820
    %v5845 = vunpack.c.l.b16 %v5821
    %v5846 = vunpack.c.l.b16 %v5822
    %v5847 = vunpack.c.l.b16 %v5823
    %v5848 = vpack.c.b16 %v5841, %v5840
    %v5849 = vpack.c.b16 %v5843, %v5842
    %v5850 = vpack.c.b16 %v5845, %v5844
    %v5851 = vpack.c.b16 %v5847, %v5846
    %v5857 = vsel %vm2973, %v5814, 0
    %5859 = vmatprep.subr.bf16.mxu0 0
    %5860 = vmatpush1.bf16.msra.mxu0 %v5848
    %5861 = vmatprep.subr.bf16.mxu0 0
    %5862 = vmatpush1.bf16.msra.mxu0 %v5849
    %5863 = vmatprep.subr.bf16.mxu0 0
    %5864 = vmatpush1.bf16.msra.mxu0 %v5850
    %5865 = vmatprep.subr.bf16.mxu0 0
    %5866 = vmatpush1.bf16.msra.mxu0 %v5851
    %5867 = vmatprep.subr.bf16.mxu0 0
    %5868 = vmatpush1.bf16.msra.mxu0 0
    %5869 = vmatprep.subr.bf16.mxu0 0
    %5870 = vmatpush1.bf16.msra.mxu0 0
    %5871 = vmatprep.subr.bf16.mxu0 0
    %5872 = vmatpush1.bf16.msra.mxu0 0
    %5873 = vmatprep.subr.bf16.mxu0 0
    %5874 = vmatpush1.bf16.msra.mxu0 0
    %5875 = vmatprep.subr.bf16.mxu0 0
    %5876 = vmatpush1.bf16.msra.mxu0 0
    %5877 = vmatprep.subr.bf16.mxu0 0
    %5878 = vmatpush1.bf16.msra.mxu0 0
    %5879 = vmatprep.subr.bf16.mxu0 0
    %5880 = vmatpush1.bf16.msra.mxu0 0
    %5881 = vmatprep.subr.bf16.mxu0 0
    %5882 = vmatpush1.bf16.msra.mxu0 0
    %5883 = vmatprep.subr.bf16.mxu0 0
    %5884 = vmatpush1.bf16.msra.mxu0 0
    %5885 = vmatprep.subr.bf16.mxu0 0
    %5886 = vmatpush1.bf16.msra.mxu0 0
    %5887 = vmatprep.subr.bf16.mxu0 0
    %5888 = vmatpush1.bf16.msra.mxu0 0
    %5889 = vmatprep.subr.bf16.mxu0 0
    %5890 = vmatpush1.bf16.msra.mxu0 0
    %5891 = vmatprep.mubr.bf16.mxu0 0
    %5892 = vmatmul.mubr.bf16.gmra.mrb[0].mxu0 %v5857
    %v5893 = vpop.f32.mrb[0].mxu0
    %v5894 = vadd.f32 %v5830, %v5893
    %v5895 = vpop.f32.mrb[0].mxu0
    %v5896 = vpop.f32.mrb[0].mxu0
    %v5897 = vadd.f32 %v5830, %v5896
    %v5898 = vpop.f32.mrb[0].mxu0
    %5899 = vdwg.mxu0
    %v5900 = vadd.f32 %v5680, %v5894
    %v5901 = vadd.f32 %v5681, %v5897
    %v5902 = vld [vmem:[%s1] sm:$0x1]
    %v5903 = vld [vmem:[%s1 + $0x1] sm:$0x1]
    %v5905 = vsel %vm1142, %v5902, 0
    %5907 = vmatprep.subr.mxu0 0.0
    %5908 = vmatpush1.msra.mxu0 %v5900
    %5909 = vmatprep.subr.mxu0 0.0
    %5910 = vmatpush1.msra.mxu0 0.0
    %5911 = vmatprep.subr.mxu0 0.0
    %5912 = vmatpush1.msra.mxu0 0.0
    %5913 = vmatprep.subr.mxu0 0.0
    %5914 = vmatpush1.msra.mxu0 0.0
    %5915 = vmatprep.subr.mxu0 0.0
    %5916 = vmatpush1.msra.mxu0 0.0
    %5917 = vmatprep.subr.mxu0 0.0
    %5918 = vmatpush1.msra.mxu0 0.0
    %5919 = vmatprep.subr.mxu0 0.0
    %5920 = vmatpush1.msra.mxu0 0.0
    %5921 = vmatprep.subr.mxu0 0.0
    %5922 = vmatpush1.msra.mxu0 0.0
    %5923 = vmatprep.subr.mxu0 0.0
    %5924 = vmatpush1.msra.mxu0 0.0
    %5925 = vmatprep.subr.mxu0 0.0
    %5926 = vmatpush1.msra.mxu0 0.0
    %5927 = vmatprep.subr.mxu0 0.0
    %5928 = vmatpush1.msra.mxu0 0.0
    %5929 = vmatprep.subr.mxu0 0.0
    %5930 = vmatpush1.msra.mxu0 0.0
    %5931 = vmatprep.subr.mxu0 0.0
    %5932 = vmatpush1.msra.mxu0 0.0
    %5933 = vmatprep.subr.mxu0 0.0
    %5934 = vmatpush1.msra.mxu0 0.0
    %5935 = vmatprep.subr.mxu0 0.0
    %5936 = vmatpush1.msra.mxu0 0.0
    %5937 = vmatprep.subr.mxu0 0.0
    %5938 = vmatpush1.msra.mxu0 0.0
    %5939 = vmatprep.subr.mxu0 0.0
    %5940 = vmatpush1.msra.mxu0 0.0
    %5941 = vmatprep.subr.mxu0 0.0
    %5942 = vmatpush1.msra.mxu0 0.0
    %5943 = vmatprep.subr.mxu0 0.0
    %5944 = vmatpush1.msra.mxu0 0.0
    %5945 = vmatprep.subr.mxu0 0.0
    %5946 = vmatpush1.msra.mxu0 0.0
    %5947 = vmatprep.subr.mxu0 0.0
    %5948 = vmatpush1.msra.mxu0 0.0
    %5949 = vmatprep.subr.mxu0 0.0
    %5950 = vmatpush1.msra.mxu0 0.0
    %5951 = vmatprep.subr.mxu0 0.0
    %5952 = vmatpush1.msra.mxu0 0.0
    %5953 = vmatprep.subr.mxu0 0.0
    %5954 = vmatpush1.msra.mxu0 0.0
    %5955 = vmatprep.subr.mxu0 0.0
    %5956 = vmatpush1.msra.mxu0 0.0
    %5957 = vmatprep.subr.mxu0 0.0
    %5958 = vmatpush1.msra.mxu0 0.0
    %5959 = vmatprep.subr.mxu0 0.0
    %5960 = vmatpush1.msra.mxu0 0.0
    %5961 = vmatprep.subr.mxu0 0.0
    %5962 = vmatpush1.msra.mxu0 0.0
    %5963 = vmatprep.subr.mxu0 0.0
    %5964 = vmatpush1.msra.mxu0 0.0
    %5965 = vmatprep.subr.mxu0 0.0
    %5966 = vmatpush1.msra.mxu0 0.0
    %5967 = vmatprep.subr.mxu0 0.0
    %5968 = vmatpush1.msra.mxu0 0.0
    %5969 = vmatprep.subr.mxu0 0.0
    %5970 = vmatpush1.msra.mxu0 0.0
    %5971 = vmatprep.mubr.f32.mxu0 0.0
    %5972 = vmatmul.mubr.f32.gmra.mrb[0].mxu0 %v5905
    %v5973 = vpop.f32.mrb[0].mxu0
    %v5974 = vadd.f32 0.0, %v5973
    %v5975 = vpop.f32.mrb[0].mxu0
    %5976 = vdwg.mxu0
    %v5978 = vsel %vm1142, %v5903, 0
    %5980 = vmatprep.subr.mxu0 0.0
    %5981 = vmatpush1.msra.mxu0 %v5901
    %5982 = vmatprep.subr.mxu0 0.0
    %5983 = vmatpush1.msra.mxu0 0.0
    %5984 = vmatprep.subr.mxu0 0.0
    %5985 = vmatpush1.msra.mxu0 0.0
    %5986 = vmatprep.subr.mxu0 0.0
    %5987 = vmatpush1.msra.mxu0 0.0
    %5988 = vmatprep.subr.mxu0 0.0
    %5989 = vmatpush1.msra.mxu0 0.0
    %5990 = vmatprep.subr.mxu0 0.0
    %5991 = vmatpush1.msra.mxu0 0.0
    %5992 = vmatprep.subr.mxu0 0.0
    %5993 = vmatpush1.msra.mxu0 0.0
    %5994 = vmatprep.subr.mxu0 0.0
    %5995 = vmatpush1.msra.mxu0 0.0
    %5996 = vmatprep.subr.mxu0 0.0
    %5997 = vmatpush1.msra.mxu0 0.0
    %5998 = vmatprep.subr.mxu0 0.0
    %5999 = vmatpush1.msra.mxu0 0.0
    %6000 = vmatprep.subr.mxu0 0.0
    %6001 = vmatpush1.msra.mxu0 0.0
    %6002 = vmatprep.subr.mxu0 0.0
    %6003 = vmatpush1.msra.mxu0 0.0
    %6004 = vmatprep.subr.mxu0 0.0
    %6005 = vmatpush1.msra.mxu0 0.0
    %6006 = vmatprep.subr.mxu0 0.0
    %6007 = vmatpush1.msra.mxu0 0.0
    %6008 = vmatprep.subr.mxu0 0.0
    %6009 = vmatpush1.msra.mxu0 0.0
    %6010 = vmatprep.subr.mxu0 0.0
    %6011 = vmatpush1.msra.mxu0 0.0
    %6012 = vmatprep.subr.mxu0 0.0
    %6013 = vmatpush1.msra.mxu0 0.0
    %6014 = vmatprep.subr.mxu0 0.0
    %6015 = vmatpush1.msra.mxu0 0.0
    %6016 = vmatprep.subr.mxu0 0.0
    %6017 = vmatpush1.msra.mxu0 0.0
    %6018 = vmatprep.subr.mxu0 0.0
    %6019 = vmatpush1.msra.mxu0 0.0
    %6020 = vmatprep.subr.mxu0 0.0
    %6021 = vmatpush1.msra.mxu0 0.0
    %6022 = vmatprep.subr.mxu0 0.0
    %6023 = vmatpush1.msra.mxu0 0.0
    %6024 = vmatprep.subr.mxu0 0.0
    %6025 = vmatpush1.msra.mxu0 0.0
    %6026 = vmatprep.subr.mxu0 0.0
    %6027 = vmatpush1.msra.mxu0 0.0
    %6028 = vmatprep.subr.mxu0 0.0
    %6029 = vmatpush1.msra.mxu0 0.0
    %6030 = vmatprep.subr.mxu0 0.0
    %6031 = vmatpush1.msra.mxu0 0.0
    %6032 = vmatprep.subr.mxu0 0.0
    %6033 = vmatpush1.msra.mxu0 0.0
    %6034 = vmatprep.subr.mxu0 0.0
    %6035 = vmatpush1.msra.mxu0 0.0
    %6036 = vmatprep.subr.mxu0 0.0
    %6037 = vmatpush1.msra.mxu0 0.0
    %6038 = vmatprep.subr.mxu0 0.0
    %6039 = vmatpush1.msra.mxu0 0.0
    %6040 = vmatprep.subr.mxu0 0.0
    %6041 = vmatpush1.msra.mxu0 0.0
    %6042 = vmatprep.subr.mxu0 0.0
    %6043 = vmatpush1.msra.mxu0 0.0
    %6044 = vmatprep.mubr.f32.mxu0 0.0
    %6045 = vmatmul.mubr.f32.gmra.mrb[0].mxu0 %v5978
    %v6046 = vpop.f32.mrb[0].mxu0
    %v6047 = vadd.f32 0.0, %v6046
    %v6048 = vpop.f32.mrb[0].mxu0
    %6049 = vdwg.mxu0
    %v6050 = vld [vmem:[%s15] sm:$0x1]
    %v6051 = vld [vmem:[%s16] sm:$0x1]
    %v6054 = vrot.slane %v6047, 7
    %vm6055 = vcmask 1041409
    %v6056 = vsel %vm6055, %v6054, %v5974
    %vm6058 = vcmask 254976
    %v6059 = vsel %vm6058, %v6056, 0.0
    %6060 = vadd.xlane.f32.xlu0 %v6059
    %v6061 = vpop.xlane.xlu0 %6060
    %v6062 = vmul.f32 %v6061, %v153
    %v6064 = vrot.slane %v6062, 1
    %v6067 = vsub.f32 %v5974, %v6062
    %v6068 = vsub.f32 %v6047, %v6064
    %v6069 = vmul.f32 %v6067, %v6067
    %v6070 = vmul.f32 %v6068, %v6068
    %v6073 = vrot.slane %v6070, 7
    %v6074 = vsel %vm6055, %v6073, %v6069
    %v6076 = vsel %vm6058, %v6074, 0.0
    %6077 = vadd.xlane.f32.xlu0 %v6076
    %v6078 = vpop.xlane.xlu0 %6077
    %v6079 = vmul.f32 %v6078, %v153
    %v6080 = vadd.f32 %v6079, 1e-05
    %v6081 = vrsqrt.pop %v6080
    %v6083 = vrot.slane %v6081, 1
    %v6086 = vmul.f32 %v6067, %v6081
    %v6087 = vmul.f32 %v6068, %v6083
    %v6089 = vlaneseq
    %v6090 = vshrl.u32 %v6089, 7
    %v6091 = vsub.s32 0, %v6090
    %v6092 = vrot.slane %v6050, %v6091
    %v6094 = vmul.f32 %v6086, %v6092
    %v6095 = vmul.f32 %v6087, %v6092
    %v6097 = vlaneseq
    %v6098 = vshrl.u32 %v6097, 7
    %v6099 = vsub.s32 0, %v6098
    %v6100 = vrot.slane %v6051, %v6099
    %v6102 = vadd.f32 %v6094, %v6100
    %v6103 = vadd.f32 %v6095, %v6100
    %v6104 = vpack.c.bf16 %v6102, %v6102
    %v6105 = vpack.c.bf16 %v6103, %v6103
    %v6106 = vld [vmem:[%s17] sm:$0xf]
    %v6107 = vld [vmem:[%s17 + $0x4] sm:$0xf]
    %v6108 = vld [vmem:[%s17 + $0x8] sm:$0xf]
    %v6109 = vld [vmem:[%s17 + $0xc] sm:$0xf]
    %v6112 = vunpack.c.l.b16 %v6104
    %v6113 = vunpack.c.l.b16 %v6105
    %v6114 = vrot.slane %v6113, 7
    %v6115 = vsel %vm6055, %v6114, %v6112
    %v6116 = vpack.c.b16 %v6115, %v6115
    %v6121 = vunpack.c.l.b16 %v6106
    %v6122 = vunpack.c.l.b16 %v6107
    %v6123 = vunpack.c.l.b16 %v6108
    %v6124 = vunpack.c.l.b16 %v6109
    %v6125 = vpack.c.b16 %v6122, %v6121
    %v6126 = vpack.c.b16 %v6124, %v6123
    %v6130 = vsel %vm146, %v6116, 0
    %6132 = vmatprep.subr.bf16.mxu0 0
    %6133 = vmatpush1.bf16.msra.mxu0 %v6125
    %6134 = vmatprep.subr.bf16.mxu0 0
    %6135 = vmatpush1.bf16.msra.mxu0 %v6126
    %6136 = vmatprep.subr.bf16.mxu0 0
    %6137 = vmatpush1.bf16.msra.mxu0 0
    %6138 = vmatprep.subr.bf16.mxu0 0
    %6139 = vmatpush1.bf16.msra.mxu0 0
    %6140 = vmatprep.subr.bf16.mxu0 0
    %6141 = vmatpush1.bf16.msra.mxu0 0
    %6142 = vmatprep.subr.bf16.mxu0 0
    %6143 = vmatpush1.bf16.msra.mxu0 0
    %6144 = vmatprep.subr.bf16.mxu0 0
    %6145 = vmatpush1.bf16.msra.mxu0 0
    %6146 = vmatprep.subr.bf16.mxu0 0
    %6147 = vmatpush1.bf16.msra.mxu0 0
    %6148 = vmatprep.subr.bf16.mxu0 0
    %6149 = vmatpush1.bf16.msra.mxu0 0
    %6150 = vmatprep.subr.bf16.mxu0 0
    %6151 = vmatpush1.bf16.msra.mxu0 0
    %6152 = vmatprep.subr.bf16.mxu0 0
    %6153 = vmatpush1.bf16.msra.mxu0 0
    %6154 = vmatprep.subr.bf16.mxu0 0
    %6155 = vmatpush1.bf16.msra.mxu0 0
    %6156 = vmatprep.subr.bf16.mxu0 0
    %6157 = vmatpush1.bf16.msra.mxu0 0
    %6158 = vmatprep.subr.bf16.mxu0 0
    %6159 = vmatpush1.bf16.msra.mxu0 0
    %6160 = vmatprep.subr.bf16.mxu0 0
    %6161 = vmatpush1.bf16.msra.mxu0 0
    %6162 = vmatprep.subr.bf16.mxu0 0
    %6163 = vmatpush1.bf16.msra.mxu0 0
    %6164 = vmatprep.mubr.bf16.mxu0 0
    %6165 = vmatmul.mubr.bf16.gmra.mrb[0].mxu0 %v6130
    %v6166 = vpop.f32.mrb[0].mxu0
    %v6167 = vadd.f32 0.0, %v6166
    %v6168 = vpop.f32.mrb[0].mxu0
    %v6169 = vpop.f32.mrb[0].mxu0
    %v6170 = vpop.f32.mrb[0].mxu0
    %6171 = vdwg.mxu0
    %vm6172 = vcmask 123904
    %6173 = vst.msk [vmem:[#allocation10] sm:$0x3] %vm6172, %v6167
    // Predicated region
    $region90: #{tpu_custom_call.1} parent=1 // pred_check
      _
    $region91: #{tpu_custom_call.1} parent=1 // pred_check_branch
      %6175 = sbr.rel (0) target = $region93
    $region92: #{tpu_custom_call.1} parent=1 // pred_region
      %s6177 = ssub.s32 32, 32
      %6178 = vsyncadd [#allocation4], %s6177
      %s6180 = sshll.u32 [#allocation10], 4
      %s6181 = int_to_ptr.vmem [resolvable:$true] %s6180
      %6183 = dma.vmem_to_hbm [thread:$0]  %s6181, 32, %s18, [#allocation4]
    $region93: #{tpu_custom_call.1} parent=1 // pred_fallthru
      _
    // Predicated region
    $region94: #{tpu_custom_call.1} parent=1 // pred_check
      _
    $region95: #{tpu_custom_call.1} parent=1 // pred_check_branch
      %6185 = sbr.rel (0) target = $region97
    $region96: #{tpu_custom_call.1} parent=1 // pred_region
      %6186 = dma.done [#allocation4], 32
    $region97: #{tpu_custom_call.1} parent=1 // pred_fallthru
      _
    %6187 = vsyncpa [#allocation3], 1
    %6188 = vsyncpa [#allocation6], 1
    %6189 = vsyncpa [#allocation9], 1
    %6190 = vsyncpa [#allocation4], 1

</llo_original>
